<compile_context>
chip_gen: v7x
topology: tpu7x:2x2x1
jax: 0.10.0
libtpu: 0.0.40
codegen_flags: <defaults>
</compile_context>

<pallas_src>
import numpy as np

import jax
import jax.numpy as jnp
from jax.experimental import pallas as pl
from jax.experimental.pallas import tpu as pltpu


def _images_per_grid_block(batch: int) -> int:
    """v7x (2 TensorCores/chip): 1 image per grid step, grid stays parallel.
    v5e/v6e (1 TC): fold the whole batch into the lane axis (grid=(1,))."""
    try:
        kind = jax.devices()[0].device_kind.lower()
    except Exception:  # pragma: no cover - CPU fallback / odd backends
        kind = ""
    if ("v7" in kind or "7x" in kind) and batch > 1:
        return 1
    return batch


@jax.jit
def zhong_forward(x_nchw, params):
    """x_nchw: (N, 3, H, W) float32 -> (N, 1, H, W) float32."""
    w1, b1, w2, b2, w3, b3 = params
    N, Cin, H, W = x_nchw.shape
    C1 = w1.shape[3]              # 256
    C2 = w2.shape[1]              # 128
    HW = H * W
    K1 = 5 * 5 * Cin              # 75 im2col rows for conv1 ([kh, kw, cin] order)
    K1P = ((K1 + 7) // 8) * 8     # padded to 80 (row 75 = bias ride-along row)
    T3 = 16                       # 9 conv3 taps padded to 16 sublanes

    B = _images_per_grid_block(N)   # images folded into the lane axis per grid step
    G = N // B                      # grid size
    L = B * HW                      # lane width seen by the kernel

    # --------------------- wrapper-side plumbing (cheap) ----------------------
    # Flat channels-on-sublanes / pixels-on-lanes layout; images are concatenated
    # along the lane axis inside a grid block.
    x_blk = (x_nchw.reshape(N, Cin, HW)
                    .reshape(G, B, Cin, HW)
                    .transpose(0, 2, 1, 3)
                    .reshape(G, Cin, L))

    # Boundary masks, computed with numpy at trace time (compile-time constants).
    p = np.arange(HW)
    hh = np.tile(p // W, B)
    ww = np.tile(p % W, B)

    m1_np = np.zeros((K1P, L), np.float32)
    for kh in range(5):
        for kw in range(5):
            dy, dx = kh - 2, kw - 2
            valid = ((hh + dy >= 0) & (hh + dy < H) &
                     (ww + dx >= 0) & (ww + dx < W)).astype(np.float32)
            r = 3 * (kh * 5 + kw)
            m1_np[r:r + Cin, :] = valid[None, :]
    m1_np[K1, :] = 1.0                                   # bias ride-along row

    m3_np = np.zeros((T3, L), np.float32)
    for kh in range(3):
        for kw in range(3):
            dy, dx = kh - 1, kw - 1
            m3_np[kh * 3 + kw, :] = ((hh + dy >= 0) & (hh + dy < H) &
                                     (ww + dx >= 0) & (ww + dx < W)).astype(np.float32)
    m1_c = jnp.asarray(m1_np)
    m3_c = jnp.asarray(m3_np)

    # Weight slabs (channels on sublanes).
    w1_t = jnp.concatenate(
        [w1.reshape(K1, C1).T, b1.reshape(C1, 1),
         jnp.zeros((C1, K1P - K1 - 1), jnp.float32)], axis=1)      # (C1, 80), col 75 = b1
    w2_t = w2.T                                                    # (C2, C1)
    b2_c = b2.reshape(C2, 1)
    w3_m = jnp.pad(w3.reshape(9, C2), ((0, T3 - 9), (0, 0)))       # (16, C2)
    b3_s = b3.reshape(1, 1)                                        # SMEM scalar

    # ------------------------------- fused kernel --------------------------------
    def kernel(x_ref, m1_ref, m3_ref, w1_ref, w2_ref, b2_ref, w3_ref, b3_ref,
               o_ref, pat_scr, tap_scr):
        x = x_ref[...]                                             # (Cin, L) f32

        # conv1 (5x5, pad=2): assemble the masked im2col slab in VMEM with lane
        # rolls (XLU), then one (C1, 80) @ (80, L) MXU matmul.  Bias is column 75.
        for kh in range(5):
            for kw in range(5):
                s = (kh - 2) * W + (kw - 2)                        # flat source offset
                r = 3 * (kh * 5 + kw)
                shifted = pltpu.roll(x, (-s) % L, axis=1)          # shifted[f] = x[f+s]
                pat_scr[r:r + 3, :] = shifted * m1_ref[r:r + 3, :]
        pat_scr[K1:K1 + 1, :] = jnp.ones((1, L), jnp.float32)      # bias row
        pat_scr[K1 + 1:K1P, :] = jnp.zeros((K1P - K1 - 1, L), jnp.float32)

        # f32 MXU matmuls (bf16 inputs would be ~3x throughput but fail the 1e-3 gate).
        a1 = jnp.dot(w1_ref[...], pat_scr[...],
                     preferred_element_type=jnp.float32)           # (C1, L)
        a1 = jnp.maximum(a1, 0.0)

        # conv2 (1x1) on the MXU, then ReLU.
        a2 = jnp.dot(w2_ref[...], a1,
                     preferred_element_type=jnp.float32) + b2_ref[...]
        a2 = jnp.maximum(a2, 0.0)                                  # (C2, L)

        # conv3 (3x3, pad=1): channel reduction on the MXU -> one row per tap.
        p_taps = jnp.dot(w3_ref[...], a2,
                         preferred_element_type=jnp.float32)       # (16, L)

        # Spatial combine: roll each tap row (XLU), pack densely into (16, L),
        # one dense mask multiply + one cross-sublane reduce.
        for kh in range(3):
            for kw in range(3):
                t = kh * 3 + kw
                s = (kh - 1) * W + (kw - 1)
                tap_scr[t:t + 1, :] = pltpu.roll(p_taps[t:t + 1, :], (-s) % L, axis=1)
        tap_scr[9:T3, :] = jnp.zeros((T3 - 9, L), jnp.float32)
        out = jnp.sum(tap_scr[...] * m3_ref[...], axis=0, keepdims=True)   # (1, L)

        o_ref[...] = out + b3_ref[0, 0]                            # lane-dense store

    out_blk = pl.pallas_call(
        kernel,
        out_shape=jax.ShapeDtypeStruct((G, 1, L), jnp.float32),
        grid_spec=pltpu.PrefetchScalarGridSpec(
            num_scalar_prefetch=0,
            grid=(G,),
            in_specs=[
                pl.BlockSpec((None, Cin, L), lambda g: (g, 0, 0)),   # flat image slab
                pl.BlockSpec((K1P, L), lambda g: (0, 0)),            # conv1 boundary mask
                pl.BlockSpec((T3, L), lambda g: (0, 0)),             # conv3 boundary mask
                pl.BlockSpec((C1, K1P), lambda g: (0, 0)),           # conv1 weights (+b1)
                pl.BlockSpec((C2, C1), lambda g: (0, 0)),            # conv2 weights
                pl.BlockSpec((C2, 1), lambda g: (0, 0)),             # b2 column
                pl.BlockSpec((T3, C2), lambda g: (0, 0)),            # conv3 tap weights
                pl.BlockSpec(memory_space=pltpu.MemorySpace.SMEM),   # b3 scalar
            ],
            out_specs=pl.BlockSpec((None, 1, L), lambda g: (g, 0, 0)),
            scratch_shapes=[pltpu.VMEM((K1P, L), jnp.float32),       # im2col slab
                            pltpu.VMEM((T3, L), jnp.float32)],       # rolled conv3 taps
        ),
        compiler_params=pltpu.CompilerParams(
            dimension_semantics=("parallel",),
            vmem_limit_bytes=32 * 1024 * 1024),
    )(x_blk, m1_c, m3_c, w1_t, w2_t, b2_c, w3_m, b3_s)

    return out_blk.reshape(N, 1, H, W)


@jax.jit
def ref_forward(x_nchw, params):
    """Pure-JAX reference using lax.conv (NCHW, PyTorch semantics)."""
    w1, b1, w2, b2, w3, b3 = params
    C1, C2 = w2.shape

    def conv(x, w_hwio, b, pad):
        w_oihw = jnp.transpose(w_hwio, (3, 2, 0, 1))
        y = jax.lax.conv_general_dilated(
            x, w_oihw, window_strides=(1, 1),
            padding=((pad, pad), (pad, pad)),
            dimension_numbers=("NCHW", "OIHW", "NCHW"),
            precision=jax.lax.Precision.HIGHEST)
        return y + b.reshape(1, -1, 1, 1)

    y = jax.nn.relu(conv(x_nchw, w1, b1, 2))
    y = jax.nn.relu(conv(y, w2.reshape(1, 1, C1, C2), b2, 0))  # 1x1 conv: lift 2-D w2 to HWIO
    return conv(y, w3, b3, 1)


if __name__ == "__main__":
    key = jax.random.PRNGKey(0)
    ks = jax.random.split(key, 7)

    N, Cin, H, W = 2, 3, 16, 16
    C1, C2 = 256, 128

    # Deterministic synthetic parameters (shapes from zhongModel.__init__), HWIO layout.
    x = jax.random.normal(ks[0], (N, Cin, H, W), jnp.float32)
    w1 = jax.random.normal(ks[1], (5, 5, Cin, C1), jnp.float32) * 0.05
    b1 = jax.random.normal(ks[2], (C1,), jnp.float32) * 0.05
    w2 = jax.random.normal(ks[3], (C1, C2), jnp.float32) * 0.05
    b2 = jax.random.normal(ks[4], (C2,), jnp.float32) * 0.05
    w3 = jax.random.normal(ks[5], (3, 3, C2, 1), jnp.float32) * 0.05
    b3 = jax.random.normal(ks[6], (1,), jnp.float32) * 0.05
    params = (w1, b1, w2, b2, w3, b3)

    out = jax.block_until_ready(zhong_forward(x, params))
    ref = jax.block_until_ready(ref_forward(x, params))

    assert out.shape == (N, 1, H, W), out.shape
    max_err = float(jnp.max(jnp.abs(out - ref)))
    if max_err < 1e-3:
        print("KERNEL_OK")
    else:
        print(f"MISMATCH max_err={max_err}")
</pallas_src>

<mosaic_0001>
module attributes {stable_mosaic.version = 11 : i64} {
  func.func @kernel(%arg0: i32, %arg1: memref<1x3x512xf32, #tpu.memory_space<vmem>>, %arg2: memref<80x512xf32, #tpu.memory_space<vmem>>, %arg3: memref<16x512xf32, #tpu.memory_space<vmem>>, %arg4: memref<256x80xf32, #tpu.memory_space<vmem>>, %arg5: memref<128x256xf32, #tpu.memory_space<vmem>>, %arg6: memref<128x1xf32, #tpu.memory_space<vmem>>, %arg7: memref<16x128xf32, #tpu.memory_space<vmem>>, %arg8: memref<1x1xf32, #tpu.memory_space<smem>>, %arg9: memref<1x1x512xf32, #tpu.memory_space<vmem>>, %arg10: memref<80x512xf32, #tpu.memory_space<vmem>>, %arg11: memref<16x512xf32, #tpu.memory_space<vmem>>) attributes {dimension_semantics = [#tpu.dimension_semantics<parallel>], iteration_bounds = array<i64: 1>, scalar_prefetch = 0 : i64, scratch_operands = 2 : i64, tpu.core_type = #tpu.core_type<tc>, window_params = [{transform_indices = @transform_0, window_bounds = array<i64: 1, 3, 512>}, {pipeline_mode = #tpu.pipeline_mode<synchronous>, transform_indices = @transform_1, window_bounds = array<i64: 80, 512>}, {pipeline_mode = #tpu.pipeline_mode<synchronous>, transform_indices = @transform_2, window_bounds = array<i64: 16, 512>}, {pipeline_mode = #tpu.pipeline_mode<synchronous>, transform_indices = @transform_3, window_bounds = array<i64: 256, 80>}, {pipeline_mode = #tpu.pipeline_mode<synchronous>, transform_indices = @transform_4, window_bounds = array<i64: 128, 256>}, {pipeline_mode = #tpu.pipeline_mode<synchronous>, transform_indices = @transform_5, window_bounds = array<i64: 128, 1>}, {pipeline_mode = #tpu.pipeline_mode<synchronous>, transform_indices = @transform_6, window_bounds = array<i64: 16, 128>}, {transform_indices = @transform_7, window_bounds = array<i64: 1, 1>}, {transform_indices = @transform_8, window_bounds = array<i64: 1, 1, 512>}]} {
    %c0 = arith.constant 0 : index
    %c0_0 = arith.constant 0 : index
    %c0_1 = arith.constant 0 : index
    %0 = vector.load %arg1[%c0, %c0_0, %c0_1] : memref<1x3x512xf32, #tpu.memory_space<vmem>>, vector<1x3x512xf32>
    %1 = vector.shape_cast %0 : vector<1x3x512xf32> to vector<3x512xf32>
    %c34_i32 = arith.constant 34 : i32
    %2 = tpu.dynamic_rotate %1 by %c34_i32 dim 1 : vector<3x512xf32>, i32 -> vector<3x512xf32>
    %c0_2 = arith.constant 0 : index
    %c0_3 = arith.constant 0 : index
    %3 = vector.load %arg2[%c0_2, %c0_3] : memref<80x512xf32, #tpu.memory_space<vmem>>, vector<3x512xf32>
    %4 = arith.mulf %2, %3 : vector<3x512xf32>
    %c0_4 = arith.constant 0 : index
    %c0_5 = arith.constant 0 : index
    %5 = vector.load %arg10[%c0_4, %c0_5] : memref<80x512xf32, #tpu.memory_space<vmem>>, vector<3x512xf32>
    tpu.vector_store %arg10[%c0_4, %c0_5], %4 {strides = array<i32>} : memref<80x512xf32, #tpu.memory_space<vmem>>, vector<3x512xf32>,
    %c33_i32 = arith.constant 33 : i32
    %6 = tpu.dynamic_rotate %1 by %c33_i32 dim 1 : vector<3x512xf32>, i32 -> vector<3x512xf32>
    %c3 = arith.constant 3 : index
    %c0_6 = arith.constant 0 : index
    %7 = vector.load %arg2[%c3, %c0_6] : memref<80x512xf32, #tpu.memory_space<vmem>>, vector<3x512xf32>
    %8 = arith.mulf %6, %7 : vector<3x512xf32>
    %c3_7 = arith.constant 3 : index
    %c0_8 = arith.constant 0 : index
    %9 = vector.load %arg10[%c3_7, %c0_8] : memref<80x512xf32, #tpu.memory_space<vmem>>, vector<3x512xf32>
    tpu.vector_store %arg10[%c3_7, %c0_8], %8 {strides = array<i32>} : memref<80x512xf32, #tpu.memory_space<vmem>>, vector<3x512xf32>,
    %c32_i32 = arith.constant 32 : i32
    %10 = tpu.dynamic_rotate %1 by %c32_i32 dim 1 : vector<3x512xf32>, i32 -> vector<3x512xf32>
    %c6 = arith.constant 6 : index
    %c0_9 = arith.constant 0 : index
    %11 = vector.load %arg2[%c6, %c0_9] : memref<80x512xf32, #tpu.memory_space<vmem>>, vector<3x512xf32>
    %12 = arith.mulf %10, %11 : vector<3x512xf32>
    %c6_10 = arith.constant 6 : index
    %c0_11 = arith.constant 0 : index
    %13 = vector.load %arg10[%c6_10, %c0_11] : memref<80x512xf32, #tpu.memory_space<vmem>>, vector<3x512xf32>
    tpu.vector_store %arg10[%c6_10, %c0_11], %12 {strides = array<i32>} : memref<80x512xf32, #tpu.memory_space<vmem>>, vector<3x512xf32>,
    %c31_i32 = arith.constant 31 : i32
    %14 = tpu.dynamic_rotate %1 by %c31_i32 dim 1 : vector<3x512xf32>, i32 -> vector<3x512xf32>
    %c9 = arith.constant 9 : index
    %c0_12 = arith.constant 0 : index
    %15 = vector.load %arg2[%c9, %c0_12] : memref<80x512xf32, #tpu.memory_space<vmem>>, vector<3x512xf32>
    %16 = arith.mulf %14, %15 : vector<3x512xf32>
    %c9_13 = arith.constant 9 : index
    %c0_14 = arith.constant 0 : index
    %17 = vector.load %arg10[%c9_13, %c0_14] : memref<80x512xf32, #tpu.memory_space<vmem>>, vector<3x512xf32>
    tpu.vector_store %arg10[%c9_13, %c0_14], %16 {strides = array<i32>} : memref<80x512xf32, #tpu.memory_space<vmem>>, vector<3x512xf32>,
    %c30_i32 = arith.constant 30 : i32
    %18 = tpu.dynamic_rotate %1 by %c30_i32 dim 1 : vector<3x512xf32>, i32 -> vector<3x512xf32>
    %c12 = arith.constant 12 : index
    %c0_15 = arith.constant 0 : index
    %19 = vector.load %arg2[%c12, %c0_15] : memref<80x512xf32, #tpu.memory_space<vmem>>, vector<3x512xf32>
    %20 = arith.mulf %18, %19 : vector<3x512xf32>
    %c12_16 = arith.constant 12 : index
    %c0_17 = arith.constant 0 : index
    %21 = vector.load %arg10[%c12_16, %c0_17] : memref<80x512xf32, #tpu.memory_space<vmem>>, vector<3x512xf32>
    tpu.vector_store %arg10[%c12_16, %c0_17], %20 {strides = array<i32>} : memref<80x512xf32, #tpu.memory_space<vmem>>, vector<3x512xf32>,
    %c18_i32 = arith.constant 18 : i32
    %22 = tpu.dynamic_rotate %1 by %c18_i32 dim 1 : vector<3x512xf32>, i32 -> vector<3x512xf32>
    %c15 = arith.constant 15 : index
    %c0_18 = arith.constant 0 : index
    %23 = vector.load %arg2[%c15, %c0_18] : memref<80x512xf32, #tpu.memory_space<vmem>>, vector<3x512xf32>
    %24 = arith.mulf %22, %23 : vector<3x512xf32>
    %c15_19 = arith.constant 15 : index
    %c0_20 = arith.constant 0 : index
    %25 = vector.load %arg10[%c15_19, %c0_20] : memref<80x512xf32, #tpu.memory_space<vmem>>, vector<3x512xf32>
    tpu.vector_store %arg10[%c15_19, %c0_20], %24 {strides = array<i32>} : memref<80x512xf32, #tpu.memory_space<vmem>>, vector<3x512xf32>,
    %c17_i32 = arith.constant 17 : i32
    %26 = tpu.dynamic_rotate %1 by %c17_i32 dim 1 : vector<3x512xf32>, i32 -> vector<3x512xf32>
    %c18 = arith.constant 18 : index
    %c0_21 = arith.constant 0 : index
    %27 = vector.load %arg2[%c18, %c0_21] : memref<80x512xf32, #tpu.memory_space<vmem>>, vector<3x512xf32>
    %28 = arith.mulf %26, %27 : vector<3x512xf32>
    %c18_22 = arith.constant 18 : index
    %c0_23 = arith.constant 0 : index
    %29 = vector.load %arg10[%c18_22, %c0_23] : memref<80x512xf32, #tpu.memory_space<vmem>>, vector<3x512xf32>
    tpu.vector_store %arg10[%c18_22, %c0_23], %28 {strides = array<i32>} : memref<80x512xf32, #tpu.memory_space<vmem>>, vector<3x512xf32>,
    %c16_i32 = arith.constant 16 : i32
    %30 = tpu.dynamic_rotate %1 by %c16_i32 dim 1 : vector<3x512xf32>, i32 -> vector<3x512xf32>
    %c21 = arith.constant 21 : index
    %c0_24 = arith.constant 0 : index
    %31 = vector.load %arg2[%c21, %c0_24] : memref<80x512xf32, #tpu.memory_space<vmem>>, vector<3x512xf32>
    %32 = arith.mulf %30, %31 : vector<3x512xf32>
    %c21_25 = arith.constant 21 : index
    %c0_26 = arith.constant 0 : index
    %33 = vector.load %arg10[%c21_25, %c0_26] : memref<80x512xf32, #tpu.memory_space<vmem>>, vector<3x512xf32>
    tpu.vector_store %arg10[%c21_25, %c0_26], %32 {strides = array<i32>} : memref<80x512xf32, #tpu.memory_space<vmem>>, vector<3x512xf32>,
    %c15_i32 = arith.constant 15 : i32
    %34 = tpu.dynamic_rotate %1 by %c15_i32 dim 1 : vector<3x512xf32>, i32 -> vector<3x512xf32>
    %c24 = arith.constant 24 : index
    %c0_27 = arith.constant 0 : index
    %35 = vector.load %arg2[%c24, %c0_27] : memref<80x512xf32, #tpu.memory_space<vmem>>, vector<3x512xf32>
    %36 = arith.mulf %34, %35 : vector<3x512xf32>
    %c24_28 = arith.constant 24 : index
    %c0_29 = arith.constant 0 : index
    %37 = vector.load %arg10[%c24_28, %c0_29] : memref<80x512xf32, #tpu.memory_space<vmem>>, vector<3x512xf32>
    tpu.vector_store %arg10[%c24_28, %c0_29], %36 {strides = array<i32>} : memref<80x512xf32, #tpu.memory_space<vmem>>, vector<3x512xf32>,
    %c14_i32 = arith.constant 14 : i32
    %38 = tpu.dynamic_rotate %1 by %c14_i32 dim 1 : vector<3x512xf32>, i32 -> vector<3x512xf32>
    %c27 = arith.constant 27 : index
    %c0_30 = arith.constant 0 : index
    %39 = vector.load %arg2[%c27, %c0_30] : memref<80x512xf32, #tpu.memory_space<vmem>>, vector<3x512xf32>
    %40 = arith.mulf %38, %39 : vector<3x512xf32>
    %c27_31 = arith.constant 27 : index
    %c0_32 = arith.constant 0 : index
    %41 = vector.load %arg10[%c27_31, %c0_32] : memref<80x512xf32, #tpu.memory_space<vmem>>, vector<3x512xf32>
    tpu.vector_store %arg10[%c27_31, %c0_32], %40 {strides = array<i32>} : memref<80x512xf32, #tpu.memory_space<vmem>>, vector<3x512xf32>,
    %c2_i32 = arith.constant 2 : i32
    %42 = tpu.dynamic_rotate %1 by %c2_i32 dim 1 : vector<3x512xf32>, i32 -> vector<3x512xf32>
    %c30 = arith.constant 30 : index
    %c0_33 = arith.constant 0 : index
    %43 = vector.load %arg2[%c30, %c0_33] : memref<80x512xf32, #tpu.memory_space<vmem>>, vector<3x512xf32>
    %44 = arith.mulf %42, %43 : vector<3x512xf32>
    %c30_34 = arith.constant 30 : index
    %c0_35 = arith.constant 0 : index
    %45 = vector.load %arg10[%c30_34, %c0_35] : memref<80x512xf32, #tpu.memory_space<vmem>>, vector<3x512xf32>
    tpu.vector_store %arg10[%c30_34, %c0_35], %44 {strides = array<i32>} : memref<80x512xf32, #tpu.memory_space<vmem>>, vector<3x512xf32>,
    %c1_i32 = arith.constant 1 : i32
    %46 = tpu.dynamic_rotate %1 by %c1_i32 dim 1 : vector<3x512xf32>, i32 -> vector<3x512xf32>
    %c33 = arith.constant 33 : index
    %c0_36 = arith.constant 0 : index
    %47 = vector.load %arg2[%c33, %c0_36] : memref<80x512xf32, #tpu.memory_space<vmem>>, vector<3x512xf32>
    %48 = arith.mulf %46, %47 : vector<3x512xf32>
    %c33_37 = arith.constant 33 : index
    %c0_38 = arith.constant 0 : index
    %49 = vector.load %arg10[%c33_37, %c0_38] : memref<80x512xf32, #tpu.memory_space<vmem>>, vector<3x512xf32>
    tpu.vector_store %arg10[%c33_37, %c0_38], %48 {strides = array<i32>} : memref<80x512xf32, #tpu.memory_space<vmem>>, vector<3x512xf32>,
    %c0_i32 = arith.constant 0 : i32
    %50 = tpu.dynamic_rotate %1 by %c0_i32 dim 1 : vector<3x512xf32>, i32 -> vector<3x512xf32>
    %c36 = arith.constant 36 : index
    %c0_39 = arith.constant 0 : index
    %51 = vector.load %arg2[%c36, %c0_39] : memref<80x512xf32, #tpu.memory_space<vmem>>, vector<3x512xf32>
    %52 = arith.mulf %50, %51 : vector<3x512xf32>
    %c36_40 = arith.constant 36 : index
    %c0_41 = arith.constant 0 : index
    %53 = vector.load %arg10[%c36_40, %c0_41] : memref<80x512xf32, #tpu.memory_space<vmem>>, vector<3x512xf32>
    tpu.vector_store %arg10[%c36_40, %c0_41], %52 {strides = array<i32>} : memref<80x512xf32, #tpu.memory_space<vmem>>, vector<3x512xf32>,
    %c511_i32 = arith.constant 511 : i32
    %54 = tpu.dynamic_rotate %1 by %c511_i32 dim 1 : vector<3x512xf32>, i32 -> vector<3x512xf32>
    %c39 = arith.constant 39 : index
    %c0_42 = arith.constant 0 : index
    %55 = vector.load %arg2[%c39, %c0_42] : memref<80x512xf32, #tpu.memory_space<vmem>>, vector<3x512xf32>
    %56 = arith.mulf %54, %55 : vector<3x512xf32>
    %c39_43 = arith.constant 39 : index
    %c0_44 = arith.constant 0 : index
    %57 = vector.load %arg10[%c39_43, %c0_44] : memref<80x512xf32, #tpu.memory_space<vmem>>, vector<3x512xf32>
    tpu.vector_store %arg10[%c39_43, %c0_44], %56 {strides = array<i32>} : memref<80x512xf32, #tpu.memory_space<vmem>>, vector<3x512xf32>,
    %c510_i32 = arith.constant 510 : i32
    %58 = tpu.dynamic_rotate %1 by %c510_i32 dim 1 : vector<3x512xf32>, i32 -> vector<3x512xf32>
    %c42 = arith.constant 42 : index
    %c0_45 = arith.constant 0 : index
    %59 = vector.load %arg2[%c42, %c0_45] : memref<80x512xf32, #tpu.memory_space<vmem>>, vector<3x512xf32>
    %60 = arith.mulf %58, %59 : vector<3x512xf32>
    %c42_46 = arith.constant 42 : index
    %c0_47 = arith.constant 0 : index
    %61 = vector.load %arg10[%c42_46, %c0_47] : memref<80x512xf32, #tpu.memory_space<vmem>>, vector<3x512xf32>
    tpu.vector_store %arg10[%c42_46, %c0_47], %60 {strides = array<i32>} : memref<80x512xf32, #tpu.memory_space<vmem>>, vector<3x512xf32>,
    %c498_i32 = arith.constant 498 : i32
    %62 = tpu.dynamic_rotate %1 by %c498_i32 dim 1 : vector<3x512xf32>, i32 -> vector<3x512xf32>
    %c45 = arith.constant 45 : index
    %c0_48 = arith.constant 0 : index
    %63 = vector.load %arg2[%c45, %c0_48] : memref<80x512xf32, #tpu.memory_space<vmem>>, vector<3x512xf32>
    %64 = arith.mulf %62, %63 : vector<3x512xf32>
    %c45_49 = arith.constant 45 : index
    %c0_50 = arith.constant 0 : index
    %65 = vector.load %arg10[%c45_49, %c0_50] : memref<80x512xf32, #tpu.memory_space<vmem>>, vector<3x512xf32>
    tpu.vector_store %arg10[%c45_49, %c0_50], %64 {strides = array<i32>} : memref<80x512xf32, #tpu.memory_space<vmem>>, vector<3x512xf32>,
    %c497_i32 = arith.constant 497 : i32
    %66 = tpu.dynamic_rotate %1 by %c497_i32 dim 1 : vector<3x512xf32>, i32 -> vector<3x512xf32>
    %c48 = arith.constant 48 : index
    %c0_51 = arith.constant 0 : index
    %67 = vector.load %arg2[%c48, %c0_51] : memref<80x512xf32, #tpu.memory_space<vmem>>, vector<3x512xf32>
    %68 = arith.mulf %66, %67 : vector<3x512xf32>
    %c48_52 = arith.constant 48 : index
    %c0_53 = arith.constant 0 : index
    %69 = vector.load %arg10[%c48_52, %c0_53] : memref<80x512xf32, #tpu.memory_space<vmem>>, vector<3x512xf32>
    tpu.vector_store %arg10[%c48_52, %c0_53], %68 {strides = array<i32>} : memref<80x512xf32, #tpu.memory_space<vmem>>, vector<3x512xf32>,
    %c496_i32 = arith.constant 496 : i32
    %70 = tpu.dynamic_rotate %1 by %c496_i32 dim 1 : vector<3x512xf32>, i32 -> vector<3x512xf32>
    %c51 = arith.constant 51 : index
    %c0_54 = arith.constant 0 : index
    %71 = vector.load %arg2[%c51, %c0_54] : memref<80x512xf32, #tpu.memory_space<vmem>>, vector<3x512xf32>
    %72 = arith.mulf %70, %71 : vector<3x512xf32>
    %c51_55 = arith.constant 51 : index
    %c0_56 = arith.constant 0 : index
    %73 = vector.load %arg10[%c51_55, %c0_56] : memref<80x512xf32, #tpu.memory_space<vmem>>, vector<3x512xf32>
    tpu.vector_store %arg10[%c51_55, %c0_56], %72 {strides = array<i32>} : memref<80x512xf32, #tpu.memory_space<vmem>>, vector<3x512xf32>,
    %c495_i32 = arith.constant 495 : i32
    %74 = tpu.dynamic_rotate %1 by %c495_i32 dim 1 : vector<3x512xf32>, i32 -> vector<3x512xf32>
    %c54 = arith.constant 54 : index
    %c0_57 = arith.constant 0 : index
    %75 = vector.load %arg2[%c54, %c0_57] : memref<80x512xf32, #tpu.memory_space<vmem>>, vector<3x512xf32>
    %76 = arith.mulf %74, %75 : vector<3x512xf32>
    %c54_58 = arith.constant 54 : index
    %c0_59 = arith.constant 0 : index
    %77 = vector.load %arg10[%c54_58, %c0_59] : memref<80x512xf32, #tpu.memory_space<vmem>>, vector<3x512xf32>
    tpu.vector_store %arg10[%c54_58, %c0_59], %76 {strides = array<i32>} : memref<80x512xf32, #tpu.memory_space<vmem>>, vector<3x512xf32>,
    %c494_i32 = arith.constant 494 : i32
    %78 = tpu.dynamic_rotate %1 by %c494_i32 dim 1 : vector<3x512xf32>, i32 -> vector<3x512xf32>
    %c57 = arith.constant 57 : index
    %c0_60 = arith.constant 0 : index
    %79 = vector.load %arg2[%c57, %c0_60] : memref<80x512xf32, #tpu.memory_space<vmem>>, vector<3x512xf32>
    %80 = arith.mulf %78, %79 : vector<3x512xf32>
    %c57_61 = arith.constant 57 : index
    %c0_62 = arith.constant 0 : index
    %81 = vector.load %arg10[%c57_61, %c0_62] : memref<80x512xf32, #tpu.memory_space<vmem>>, vector<3x512xf32>
    tpu.vector_store %arg10[%c57_61, %c0_62], %80 {strides = array<i32>} : memref<80x512xf32, #tpu.memory_space<vmem>>, vector<3x512xf32>,
    %c482_i32 = arith.constant 482 : i32
    %82 = tpu.dynamic_rotate %1 by %c482_i32 dim 1 : vector<3x512xf32>, i32 -> vector<3x512xf32>
    %c60 = arith.constant 60 : index
    %c0_63 = arith.constant 0 : index
    %83 = vector.load %arg2[%c60, %c0_63] : memref<80x512xf32, #tpu.memory_space<vmem>>, vector<3x512xf32>
    %84 = arith.mulf %82, %83 : vector<3x512xf32>
    %c60_64 = arith.constant 60 : index
    %c0_65 = arith.constant 0 : index
    %85 = vector.load %arg10[%c60_64, %c0_65] : memref<80x512xf32, #tpu.memory_space<vmem>>, vector<3x512xf32>
    tpu.vector_store %arg10[%c60_64, %c0_65], %84 {strides = array<i32>} : memref<80x512xf32, #tpu.memory_space<vmem>>, vector<3x512xf32>,
    %c481_i32 = arith.constant 481 : i32
    %86 = tpu.dynamic_rotate %1 by %c481_i32 dim 1 : vector<3x512xf32>, i32 -> vector<3x512xf32>
    %c63 = arith.constant 63 : index
    %c0_66 = arith.constant 0 : index
    %87 = vector.load %arg2[%c63, %c0_66] : memref<80x512xf32, #tpu.memory_space<vmem>>, vector<3x512xf32>
    %88 = arith.mulf %86, %87 : vector<3x512xf32>
    %c63_67 = arith.constant 63 : index
    %c0_68 = arith.constant 0 : index
    %89 = vector.load %arg10[%c63_67, %c0_68] : memref<80x512xf32, #tpu.memory_space<vmem>>, vector<3x512xf32>
    tpu.vector_store %arg10[%c63_67, %c0_68], %88 {strides = array<i32>} : memref<80x512xf32, #tpu.memory_space<vmem>>, vector<3x512xf32>,
    %c480_i32 = arith.constant 480 : i32
    %90 = tpu.dynamic_rotate %1 by %c480_i32 dim 1 : vector<3x512xf32>, i32 -> vector<3x512xf32>
    %c66 = arith.constant 66 : index
    %c0_69 = arith.constant 0 : index
    %91 = vector.load %arg2[%c66, %c0_69] : memref<80x512xf32, #tpu.memory_space<vmem>>, vector<3x512xf32>
    %92 = arith.mulf %90, %91 : vector<3x512xf32>
    %c66_70 = arith.constant 66 : index
    %c0_71 = arith.constant 0 : index
    %93 = vector.load %arg10[%c66_70, %c0_71] : memref<80x512xf32, #tpu.memory_space<vmem>>, vector<3x512xf32>
    tpu.vector_store %arg10[%c66_70, %c0_71], %92 {strides = array<i32>} : memref<80x512xf32, #tpu.memory_space<vmem>>, vector<3x512xf32>,
    %c479_i32 = arith.constant 479 : i32
    %94 = tpu.dynamic_rotate %1 by %c479_i32 dim 1 : vector<3x512xf32>, i32 -> vector<3x512xf32>
    %c69 = arith.constant 69 : index
    %c0_72 = arith.constant 0 : index
    %95 = vector.load %arg2[%c69, %c0_72] : memref<80x512xf32, #tpu.memory_space<vmem>>, vector<3x512xf32>
    %96 = arith.mulf %94, %95 : vector<3x512xf32>
    %c69_73 = arith.constant 69 : index
    %c0_74 = arith.constant 0 : index
    %97 = vector.load %arg10[%c69_73, %c0_74] : memref<80x512xf32, #tpu.memory_space<vmem>>, vector<3x512xf32>
    tpu.vector_store %arg10[%c69_73, %c0_74], %96 {strides = array<i32>} : memref<80x512xf32, #tpu.memory_space<vmem>>, vector<3x512xf32>,
    %c478_i32 = arith.constant 478 : i32
    %98 = tpu.dynamic_rotate %1 by %c478_i32 dim 1 : vector<3x512xf32>, i32 -> vector<3x512xf32>
    %c72 = arith.constant 72 : index
    %c0_75 = arith.constant 0 : index
    %99 = vector.load %arg2[%c72, %c0_75] : memref<80x512xf32, #tpu.memory_space<vmem>>, vector<3x512xf32>
    %100 = arith.mulf %98, %99 : vector<3x512xf32>
    %c72_76 = arith.constant 72 : index
    %c0_77 = arith.constant 0 : index
    %101 = vector.load %arg10[%c72_76, %c0_77] : memref<80x512xf32, #tpu.memory_space<vmem>>, vector<3x512xf32>
    tpu.vector_store %arg10[%c72_76, %c0_77], %100 {strides = array<i32>} : memref<80x512xf32, #tpu.memory_space<vmem>>, vector<3x512xf32>,
    %cst = arith.constant 1.000000e+00 : f32
    %102 = vector.broadcast %cst : f32 to vector<1x512xf32>
    %c75 = arith.constant 75 : index
    %c0_78 = arith.constant 0 : index
    %103 = vector.load %arg10[%c75, %c0_78] : memref<80x512xf32, #tpu.memory_space<vmem>>, vector<1x512xf32>
    tpu.vector_store %arg10[%c75, %c0_78], %102 {strides = array<i32>} : memref<80x512xf32, #tpu.memory_space<vmem>>, vector<1x512xf32>,
    %cst_79 = arith.constant 0.000000e+00 : f32
    %104 = vector.broadcast %cst_79 : f32 to vector<4x512xf32>
    %c76 = arith.constant 76 : index
    %c0_80 = arith.constant 0 : index
    %105 = vector.load %arg10[%c76, %c0_80] : memref<80x512xf32, #tpu.memory_space<vmem>>, vector<4x512xf32>
    tpu.vector_store %arg10[%c76, %c0_80], %104 {strides = array<i32>} : memref<80x512xf32, #tpu.memory_space<vmem>>, vector<4x512xf32>,
    %c0_81 = arith.constant 0 : index
    %c0_82 = arith.constant 0 : index
    %106 = vector.load %arg4[%c0_81, %c0_82] : memref<256x80xf32, #tpu.memory_space<vmem>>, vector<256x80xf32>
    %c0_83 = arith.constant 0 : index
    %c0_84 = arith.constant 0 : index
    %107 = vector.load %arg10[%c0_83, %c0_84] : memref<80x512xf32, #tpu.memory_space<vmem>>, vector<80x512xf32>
    %cst_85 = arith.constant dense<0.000000e+00> : vector<256x512xf32>
    %108 = tpu.matmul %106, %107, %cst_85 {dimension_numbers = #tpu.dot_dimension_numbers<[1], [0], [0], [1], [0, 0, 1, 1], [], []>} : vector<256x80xf32>, vector<80x512xf32>, vector<256x512xf32> -> vector<256x512xf32>
    %cst_86 = arith.constant 0.000000e+00 : f32
    %109 = vector.broadcast %cst_86 : f32 to vector<256x512xf32>
    %110 = arith.maximumf %108, %109 : vector<256x512xf32>
    %c0_87 = arith.constant 0 : index
    %c0_88 = arith.constant 0 : index
    %111 = vector.load %arg5[%c0_87, %c0_88] : memref<128x256xf32, #tpu.memory_space<vmem>>, vector<128x256xf32>
    %cst_89 = arith.constant dense<0.000000e+00> : vector<128x512xf32>
    %112 = tpu.matmul %111, %110, %cst_89 {dimension_numbers = #tpu.dot_dimension_numbers<[1], [0], [0], [1], [0, 0, 1, 1], [], []>} : vector<128x256xf32>, vector<256x512xf32>, vector<128x512xf32> -> vector<128x512xf32>
    %c0_90 = arith.constant 0 : index
    %c0_91 = arith.constant 0 : index
    %113 = vector.load %arg6[%c0_90, %c0_91] : memref<128x1xf32, #tpu.memory_space<vmem>>, vector<128x1xf32>
    %114 = vector.broadcast %113 : vector<128x1xf32> to vector<128x512xf32>
    %115 = arith.addf %112, %114 : vector<128x512xf32>
    %cst_92 = arith.constant 0.000000e+00 : f32
    %116 = vector.broadcast %cst_92 : f32 to vector<128x512xf32>
    %117 = arith.maximumf %115, %116 : vector<128x512xf32>
    %c0_93 = arith.constant 0 : index
    %c0_94 = arith.constant 0 : index
    %118 = vector.load %arg7[%c0_93, %c0_94] : memref<16x128xf32, #tpu.memory_space<vmem>>, vector<16x128xf32>
    %cst_95 = arith.constant dense<0.000000e+00> : vector<16x512xf32>
    %119 = tpu.matmul %118, %117, %cst_95 {dimension_numbers = #tpu.dot_dimension_numbers<[1], [0], [0], [1], [0, 0, 1, 1], [], []>} : vector<16x128xf32>, vector<128x512xf32>, vector<16x512xf32> -> vector<16x512xf32>
    %120 = vector.extract_strided_slice %119 {offsets = [0, 0], sizes = [1, 512], strides = [1, 1]} : vector<16x512xf32> to vector<1x512xf32>
    %c17_i32_96 = arith.constant 17 : i32
    %121 = tpu.dynamic_rotate %120 by %c17_i32_96 dim 1 : vector<1x512xf32>, i32 -> vector<1x512xf32>
    %c0_97 = arith.constant 0 : index
    %c0_98 = arith.constant 0 : index
    %122 = vector.load %arg11[%c0_97, %c0_98] : memref<16x512xf32, #tpu.memory_space<vmem>>, vector<1x512xf32>
    tpu.vector_store %arg11[%c0_97, %c0_98], %121 {strides = array<i32>} : memref<16x512xf32, #tpu.memory_space<vmem>>, vector<1x512xf32>,
    %123 = vector.extract_strided_slice %119 {offsets = [1, 0], sizes = [1, 512], strides = [1, 1]} : vector<16x512xf32> to vector<1x512xf32>
    %c16_i32_99 = arith.constant 16 : i32
    %124 = tpu.dynamic_rotate %123 by %c16_i32_99 dim 1 : vector<1x512xf32>, i32 -> vector<1x512xf32>
    %c1 = arith.constant 1 : index
    %c0_100 = arith.constant 0 : index
    %125 = vector.load %arg11[%c1, %c0_100] : memref<16x512xf32, #tpu.memory_space<vmem>>, vector<1x512xf32>
    tpu.vector_store %arg11[%c1, %c0_100], %124 {strides = array<i32>} : memref<16x512xf32, #tpu.memory_space<vmem>>, vector<1x512xf32>,
    %126 = vector.extract_strided_slice %119 {offsets = [2, 0], sizes = [1, 512], strides = [1, 1]} : vector<16x512xf32> to vector<1x512xf32>
    %c15_i32_101 = arith.constant 15 : i32
    %127 = tpu.dynamic_rotate %126 by %c15_i32_101 dim 1 : vector<1x512xf32>, i32 -> vector<1x512xf32>
    %c2 = arith.constant 2 : index
    %c0_102 = arith.constant 0 : index
    %128 = vector.load %arg11[%c2, %c0_102] : memref<16x512xf32, #tpu.memory_space<vmem>>, vector<1x512xf32>
    tpu.vector_store %arg11[%c2, %c0_102], %127 {strides = array<i32>} : memref<16x512xf32, #tpu.memory_space<vmem>>, vector<1x512xf32>,
    %129 = vector.extract_strided_slice %119 {offsets = [3, 0], sizes = [1, 512], strides = [1, 1]} : vector<16x512xf32> to vector<1x512xf32>
    %c1_i32_103 = arith.constant 1 : i32
    %130 = tpu.dynamic_rotate %129 by %c1_i32_103 dim 1 : vector<1x512xf32>, i32 -> vector<1x512xf32>
    %c3_104 = arith.constant 3 : index
    %c0_105 = arith.constant 0 : index
    %131 = vector.load %arg11[%c3_104, %c0_105] : memref<16x512xf32, #tpu.memory_space<vmem>>, vector<1x512xf32>
    tpu.vector_store %arg11[%c3_104, %c0_105], %130 {strides = array<i32>} : memref<16x512xf32, #tpu.memory_space<vmem>>, vector<1x512xf32>,
    %132 = vector.extract_strided_slice %119 {offsets = [4, 0], sizes = [1, 512], strides = [1, 1]} : vector<16x512xf32> to vector<1x512xf32>
    %c0_i32_106 = arith.constant 0 : i32
    %133 = tpu.dynamic_rotate %132 by %c0_i32_106 dim 1 : vector<1x512xf32>, i32 -> vector<1x512xf32>
    %c4 = arith.constant 4 : index
    %c0_107 = arith.constant 0 : index
    %134 = vector.load %arg11[%c4, %c0_107] : memref<16x512xf32, #tpu.memory_space<vmem>>, vector<1x512xf32>
    tpu.vector_store %arg11[%c4, %c0_107], %133 {strides = array<i32>} : memref<16x512xf32, #tpu.memory_space<vmem>>, vector<1x512xf32>,
    %135 = vector.extract_strided_slice %119 {offsets = [5, 0], sizes = [1, 512], strides = [1, 1]} : vector<16x512xf32> to vector<1x512xf32>
    %c511_i32_108 = arith.constant 511 : i32
    %136 = tpu.dynamic_rotate %135 by %c511_i32_108 dim 1 : vector<1x512xf32>, i32 -> vector<1x512xf32>
    %c5 = arith.constant 5 : index
    %c0_109 = arith.constant 0 : index
    %137 = vector.load %arg11[%c5, %c0_109] : memref<16x512xf32, #tpu.memory_space<vmem>>, vector<1x512xf32>
    tpu.vector_store %arg11[%c5, %c0_109], %136 {strides = array<i32>} : memref<16x512xf32, #tpu.memory_space<vmem>>, vector<1x512xf32>,
    %138 = vector.extract_strided_slice %119 {offsets = [6, 0], sizes = [1, 512], strides = [1, 1]} : vector<16x512xf32> to vector<1x512xf32>
    %c497_i32_110 = arith.constant 497 : i32
    %139 = tpu.dynamic_rotate %138 by %c497_i32_110 dim 1 : vector<1x512xf32>, i32 -> vector<1x512xf32>
    %c6_111 = arith.constant 6 : index
    %c0_112 = arith.constant 0 : index
    %140 = vector.load %arg11[%c6_111, %c0_112] : memref<16x512xf32, #tpu.memory_space<vmem>>, vector<1x512xf32>
    tpu.vector_store %arg11[%c6_111, %c0_112], %139 {strides = array<i32>} : memref<16x512xf32, #tpu.memory_space<vmem>>, vector<1x512xf32>,
    %141 = vector.extract_strided_slice %119 {offsets = [7, 0], sizes = [1, 512], strides = [1, 1]} : vector<16x512xf32> to vector<1x512xf32>
    %c496_i32_113 = arith.constant 496 : i32
    %142 = tpu.dynamic_rotate %141 by %c496_i32_113 dim 1 : vector<1x512xf32>, i32 -> vector<1x512xf32>
    %c7 = arith.constant 7 : index
    %c0_114 = arith.constant 0 : index
    %143 = vector.load %arg11[%c7, %c0_114] : memref<16x512xf32, #tpu.memory_space<vmem>>, vector<1x512xf32>
    tpu.vector_store %arg11[%c7, %c0_114], %142 {strides = array<i32>} : memref<16x512xf32, #tpu.memory_space<vmem>>, vector<1x512xf32>,
    %144 = vector.extract_strided_slice %119 {offsets = [8, 0], sizes = [1, 512], strides = [1, 1]} : vector<16x512xf32> to vector<1x512xf32>
    %c495_i32_115 = arith.constant 495 : i32
    %145 = tpu.dynamic_rotate %144 by %c495_i32_115 dim 1 : vector<1x512xf32>, i32 -> vector<1x512xf32>
    %c8 = arith.constant 8 : index
    %c0_116 = arith.constant 0 : index
    %146 = vector.load %arg11[%c8, %c0_116] : memref<16x512xf32, #tpu.memory_space<vmem>>, vector<1x512xf32>
    tpu.vector_store %arg11[%c8, %c0_116], %145 {strides = array<i32>} : memref<16x512xf32, #tpu.memory_space<vmem>>, vector<1x512xf32>,
    %cst_117 = arith.constant 0.000000e+00 : f32
    %147 = vector.broadcast %cst_117 : f32 to vector<7x512xf32>
    %c9_118 = arith.constant 9 : index
    %c0_119 = arith.constant 0 : index
    %148 = vector.load %arg11[%c9_118, %c0_119] : memref<16x512xf32, #tpu.memory_space<vmem>>, vector<7x512xf32>
    tpu.vector_store %arg11[%c9_118, %c0_119], %147 {strides = array<i32>} : memref<16x512xf32, #tpu.memory_space<vmem>>, vector<7x512xf32>,
    %c0_120 = arith.constant 0 : index
    %c0_121 = arith.constant 0 : index
    %149 = vector.load %arg11[%c0_120, %c0_121] : memref<16x512xf32, #tpu.memory_space<vmem>>, vector<16x512xf32>
    %c0_122 = arith.constant 0 : index
    %c0_123 = arith.constant 0 : index
    %150 = vector.load %arg3[%c0_122, %c0_123] : memref<16x512xf32, #tpu.memory_space<vmem>>, vector<16x512xf32>
    %151 = arith.mulf %149, %150 : vector<16x512xf32>
    %cst_124 = arith.constant dense<0.000000e+00> : vector<512xf32>
    %152 = vector.multi_reduction <add>, %151, %cst_124 [0] : vector<16x512xf32> to vector<512xf32>
    %153 = vector.shape_cast %152 : vector<512xf32> to vector<1x512xf32>
    %c0_125 = arith.constant 0 : index
    %c0_126 = arith.constant 0 : index
    %154 = memref.load %arg8[%c0_125, %c0_126] : memref<1x1xf32, #tpu.memory_space<smem>>
    %155 = vector.broadcast %154 : f32 to vector<1x512xf32>
    %156 = arith.addf %153, %155 : vector<1x512xf32>
    %c0_127 = arith.constant 0 : index
    %c0_128 = arith.constant 0 : index
    %c0_129 = arith.constant 0 : index
    %157 = vector.load %arg9[%c0_127, %c0_128, %c0_129] : memref<1x1x512xf32, #tpu.memory_space<vmem>>, vector<1x1x512xf32>
    %158 = vector.shape_cast %157 : vector<1x1x512xf32> to vector<1x512xf32>
    %159 = vector.shape_cast %156 : vector<1x512xf32> to vector<1x1x512xf32>
    tpu.vector_store %arg9[%c0_127, %c0_128, %c0_129], %159 {strides = array<i32>} : memref<1x1x512xf32, #tpu.memory_space<vmem>>, vector<1x1x512xf32>,
    return
  }
  func.func @transform_0(%arg0: i32) -> (i32, i32, i32) {
    %c0_i32 = arith.constant 0 : i32
    %c0_i32_0 = arith.constant 0 : i32
    %c0_i32_1 = arith.constant 0 : i32
    return %arg0, %c0_i32, %c0_i32_0 : i32, i32, i32
  }
  func.func @transform_1(%arg0: i32) -> (i32, i32) {
    %c0_i32 = arith.constant 0 : i32
    %c0_i32_0 = arith.constant 0 : i32
    %c0_i32_1 = arith.constant 0 : i32
    return %c0_i32, %c0_i32_0 : i32, i32
  }
  func.func @transform_2(%arg0: i32) -> (i32, i32) {
    %c0_i32 = arith.constant 0 : i32
    %c0_i32_0 = arith.constant 0 : i32
    %c0_i32_1 = arith.constant 0 : i32
    return %c0_i32, %c0_i32_0 : i32, i32
  }
  func.func @transform_3(%arg0: i32) -> (i32, i32) {
    %c0_i32 = arith.constant 0 : i32
    %c0_i32_0 = arith.constant 0 : i32
    %c0_i32_1 = arith.constant 0 : i32
    return %c0_i32, %c0_i32_0 : i32, i32
  }
  func.func @transform_4(%arg0: i32) -> (i32, i32) {
    %c0_i32 = arith.constant 0 : i32
    %c0_i32_0 = arith.constant 0 : i32
    %c0_i32_1 = arith.constant 0 : i32
    return %c0_i32, %c0_i32_0 : i32, i32
  }
  func.func @transform_5(%arg0: i32) -> (i32, i32) {
    %c0_i32 = arith.constant 0 : i32
    %c0_i32_0 = arith.constant 0 : i32
    %c0_i32_1 = arith.constant 0 : i32
    return %c0_i32, %c0_i32_0 : i32, i32
  }
  func.func @transform_6(%arg0: i32) -> (i32, i32) {
    %c0_i32 = arith.constant 0 : i32
    %c0_i32_0 = arith.constant 0 : i32
    %c0_i32_1 = arith.constant 0 : i32
    return %c0_i32, %c0_i32_0 : i32, i32
  }
  func.func @transform_7(%arg0: i32) -> (i32, i32) {
    %c0_i32 = arith.constant 0 : i32
    %c0_i32_0 = arith.constant 0 : i32
    %c0_i32_1 = arith.constant 0 : i32
    return %c0_i32, %c0_i32_0 : i32, i32
  }
  func.func @transform_8(%arg0: i32) -> (i32, i32, i32) {
    %c0_i32 = arith.constant 0 : i32
    %c0_i32_0 = arith.constant 0 : i32
    %c0_i32_1 = arith.constant 0 : i32
    return %arg0, %c0_i32, %c0_i32_0 : i32, i32, i32
  }
}

</mosaic_0001>

<llo_original>
// kernel: zhong_forward.1
$region0: #{zhong_forward.1}
  #allocation0 [shape = 'u32[]', space=smem, size = 0x4, offset = 0x4, fixed_abs, tag = 'smem constant byte address 0x4 - core index']
  #allocation1 [shape = 'u32[144,128]{1,0:T(1,128)}', space=vmem, size = 0x12000, scoped, tag = 'internal scratch']
  #allocation2 [shape = 'f32[80,512]{1,0:T(8,128)}', space=vmem, size = 0x28000, scoped, tag = 'scratch operand']
  #allocation3 [shape = 'f32[16,512]{1,0:T(8,128)}', space=vmem, size = 0x8000, scoped, tag = 'scratch operand']
  #allocation4 [shape = 'f32[1,1]{1,0:T(1,128)S(6)}', space=smem, size = 0x200, scoped, tag = 'scoped memory for zhong_forward.1']
  %s0 = inlined_call_operand.vmem [shape: f32[1,3,512], index: 0, kind: input, shape index: {}]
  %s1 = inlined_call_operand.vmem [shape: f32[80,512], index: 1, kind: input, shape index: {}]
  %s2 = inlined_call_operand.vmem [shape: f32[16,512], index: 2, kind: input, shape index: {}]
  %s3 = inlined_call_operand.vmem [shape: f32[256,80], index: 3, kind: input, shape index: {}]
  %s4 = inlined_call_operand.vmem [shape: f32[128,256], index: 4, kind: input, shape index: {}]
  %s5 = inlined_call_operand.vmem [shape: f32[128,1], index: 5, kind: input, shape index: {}]
  %s6 = inlined_call_operand.vmem [shape: f32[16,128], index: 6, kind: input, shape index: {}]
  %s7 = inlined_call_operand.<no memory space> [shape: f32[1,1], index: 7, kind: input, shape index: {}]
  %s8 = inlined_call_operand.vmem [shape: f32[1,1,512], index: 8, kind: output, shape index: {}]
  %s9 = sld [smem:[#allocation0]]
  $region42: #{zhong_forward.1} parent=0
    _
  %s11 = ssub.s32 1, %s9
  %s12 = scalar_select 0, %s11, %s9
  %13 = sst [smem:[#allocation4]] %s7
  // Predicated region
  $region2: #{zhong_forward.1} parent=0 // pred_check
    _
  $region3: #{zhong_forward.1} parent=0 // pred_check_branch
    %15 = sbr.rel (0) target = $region5
  $region4: #{zhong_forward.1} parent=0 // pred_region
    _
  $region5: #{zhong_forward.1} parent=0 // pred_fallthru
    _
  // Predicated region
  $region6: #{zhong_forward.1} parent=0 // pred_check
    _
  $region7: #{zhong_forward.1} parent=0 // pred_check_branch
    %17 = sbr.rel (0) target = $region9
  $region8: #{zhong_forward.1} parent=0 // pred_region
    _
  $region9: #{zhong_forward.1} parent=0 // pred_fallthru
    _
  // Predicated region
  $region10: #{zhong_forward.1} parent=0 // pred_check
    _
  $region11: #{zhong_forward.1} parent=0 // pred_check_branch
    %19 = sbr.rel (0) target = $region13
  $region12: #{zhong_forward.1} parent=0 // pred_region
    _
  $region13: #{zhong_forward.1} parent=0 // pred_fallthru
    _
  // Predicated region
  $region14: #{zhong_forward.1} parent=0 // pred_check
    _
  $region15: #{zhong_forward.1} parent=0 // pred_check_branch
    %21 = sbr.rel (0) target = $region17
  $region16: #{zhong_forward.1} parent=0 // pred_region
    _
  $region17: #{zhong_forward.1} parent=0 // pred_fallthru
    _
  // Predicated region
  $region18: #{zhong_forward.1} parent=0 // pred_check
    _
  $region19: #{zhong_forward.1} parent=0 // pred_check_branch
    %23 = sbr.rel (0) target = $region21
  $region20: #{zhong_forward.1} parent=0 // pred_region
    _
  $region21: #{zhong_forward.1} parent=0 // pred_fallthru
    _
  // Predicated region
  $region22: #{zhong_forward.1} parent=0 // pred_check
    _
  $region23: #{zhong_forward.1} parent=0 // pred_check_branch
    %25 = sbr.rel (0) target = $region25
  $region24: #{zhong_forward.1} parent=0 // pred_region
    _
  $region25: #{zhong_forward.1} parent=0 // pred_fallthru
    _
  // Predicated region
  $region26: #{zhong_forward.1} parent=0 // pred_check
    _
  $region27: #{zhong_forward.1} parent=0 // pred_check_branch
    %27 = sbr.rel (0) target = $region29
  $region28: #{zhong_forward.1} parent=0 // pred_region
    _
  $region29: #{zhong_forward.1} parent=0 // pred_fallthru
    _
  // Predicated region
  $region30: #{zhong_forward.1} parent=0 // pred_check
    _
  $region31: #{zhong_forward.1} parent=0 // pred_check_branch
    %29 = sbr.rel (0) target = $region33
  $region32: #{zhong_forward.1} parent=0 // pred_region
    _
  $region33: #{zhong_forward.1} parent=0 // pred_fallthru
    _
  %v30 = vld [vmem:[%s0] sm:$0x77]
  %v31 = vld [vmem:[%s0 + $0x8] sm:$0x77]
  %v34 = vcombine.high %v30, %v30
  %v35 = vcombine.high %v31, %v31
  %38 = vrot.lane.b32.xlu0 %v30, 34
  %v39 = vpop.permute.xlu0 %38
  %40 = vrot.lane.b32.xlu0 %v34, 34
  %v41 = vpop.permute.xlu0 %40
  %42 = vrot.lane.b32.xlu0 %v31, 34
  %v43 = vpop.permute.xlu0 %42
  %44 = vrot.lane.b32.xlu0 %v35, 34
  %v45 = vpop.permute.xlu0 %44
  %v46 = vlaneseq
  %v47 = vand.u32 %v46, 127
  %vm48 = vcmp.lt.s32.totalorder %v47, 34
  %v49 = vsel %vm48, %v43, %v45
  %v50 = vsel %vm48, %v41, %v43
  %v51 = vsel %vm48, %v39, %v41
  %v52 = vsel %vm48, %v45, %v39
  %v53 = vld [vmem:[%s1] sm:$0x7]
  %v54 = vld [vmem:[%s1 + $0x8] sm:$0x7]
  %v55 = vld [vmem:[%s1 + $0x10] sm:$0x7]
  %v56 = vld [vmem:[%s1 + $0x18] sm:$0x7]
  %v57 = vmul.f32 %v52, %v53
  %v58 = vmul.f32 %v51, %v54
  %v59 = vmul.f32 %v50, %v55
  %v60 = vmul.f32 %v49, %v56
  %61 = vst [vmem:[#allocation2] sm:$0x7] %v57
  %62 = vst [vmem:[#allocation2 + $0x8] sm:$0x7] %v58
  %63 = vst [vmem:[#allocation2 + $0x10] sm:$0x7] %v59
  %64 = vst [vmem:[#allocation2 + $0x18] sm:$0x7] %v60
  %65 = vrot.lane.b32.xlu0 %v30, 33
  %v66 = vpop.permute.xlu0 %65
  %67 = vrot.lane.b32.xlu0 %v34, 33
  %v68 = vpop.permute.xlu0 %67
  %69 = vrot.lane.b32.xlu0 %v31, 33
  %v70 = vpop.permute.xlu0 %69
  %71 = vrot.lane.b32.xlu0 %v35, 33
  %v72 = vpop.permute.xlu0 %71
  %vm73 = vcmp.lt.s32.totalorder %v47, 33
  %v74 = vsel %vm73, %v70, %v72
  %v75 = vsel %vm73, %v68, %v70
  %v76 = vsel %vm73, %v66, %v68
  %v77 = vsel %vm73, %v72, %v66
  %v78 = vld [vmem:[%s1] sm:$0x38]
  %v79 = vld [vmem:[%s1 + $0x8] sm:$0x38]
  %v80 = vld [vmem:[%s1 + $0x10] sm:$0x38]
  %v81 = vld [vmem:[%s1 + $0x18] sm:$0x38]
  %v86 = vrot.slane %v78, 3
  %v87 = vrot.slane %v79, 3
  %v88 = vrot.slane %v80, 3
  %v89 = vrot.slane %v81, 3
  %v94 = vmul.f32 %v77, %v86
  %v95 = vmul.f32 %v76, %v87
  %v96 = vmul.f32 %v75, %v88
  %v97 = vmul.f32 %v74, %v89
  %v102 = vrot.slane %v94, 5
  %v103 = vrot.slane %v95, 5
  %v104 = vrot.slane %v96, 5
  %v105 = vrot.slane %v97, 5
  %110 = vst [vmem:[#allocation2] sm:$0x38] %v102
  %111 = vst [vmem:[#allocation2 + $0x8] sm:$0x38] %v103
  %112 = vst [vmem:[#allocation2 + $0x10] sm:$0x38] %v104
  %113 = vst [vmem:[#allocation2 + $0x18] sm:$0x38] %v105
  %114 = vrot.lane.b32.xlu0 %v30, 32
  %v115 = vpop.permute.xlu0 %114
  %116 = vrot.lane.b32.xlu0 %v34, 32
  %v117 = vpop.permute.xlu0 %116
  %118 = vrot.lane.b32.xlu0 %v31, 32
  %v119 = vpop.permute.xlu0 %118
  %120 = vrot.lane.b32.xlu0 %v35, 32
  %v121 = vpop.permute.xlu0 %120
  %vm122 = vcmp.lt.s32.totalorder %v47, 32
  %v123 = vsel %vm122, %v119, %v121
  %v124 = vsel %vm122, %v117, %v119
  %v125 = vsel %vm122, %v115, %v117
  %v126 = vsel %vm122, %v121, %v115
  %v127 = vld [vmem:[%s1] sm:$0xc0]
  %v128 = vld [vmem:[%s1 + $0x8] sm:$0xc0]
  %v129 = vld [vmem:[%s1 + $0x10] sm:$0xc0]
  %v130 = vld [vmem:[%s1 + $0x18] sm:$0xc0]
  %v131 = vld [vmem:[%s1 + $0x20] sm:$0x1]
  %v132 = vld [vmem:[%s1 + $0x28] sm:$0x1]
  %v133 = vld [vmem:[%s1 + $0x30] sm:$0x1]
  %v134 = vld [vmem:[%s1 + $0x38] sm:$0x1]
  %vm143 = vcmask 1041408
  %v144 = vrot.slane %v127, 6
  %v145 = vrot.slane %v131, 6
  %v146 = vsel %vm143, %v144, %v145
  %v147 = vrot.slane %v128, 6
  %v148 = vrot.slane %v132, 6
  %v149 = vsel %vm143, %v147, %v148
  %v150 = vrot.slane %v129, 6
  %v151 = vrot.slane %v133, 6
  %v152 = vsel %vm143, %v150, %v151
  %v153 = vrot.slane %v130, 6
  %v154 = vrot.slane %v134, 6
  %v155 = vsel %vm143, %v153, %v154
  %v160 = vmul.f32 %v126, %v146
  %v161 = vmul.f32 %v125, %v149
  %v162 = vmul.f32 %v124, %v152
  %v163 = vmul.f32 %v123, %v155
  %v168 = vrot.slane %v160, 2
  %v169 = vrot.slane %v161, 2
  %v170 = vrot.slane %v162, 2
  %v171 = vrot.slane %v163, 2
  %176 = vst [vmem:[#allocation2] sm:$0xc0] %v168
  %177 = vst [vmem:[#allocation2 + $0x8] sm:$0xc0] %v169
  %178 = vst [vmem:[#allocation2 + $0x10] sm:$0xc0] %v170
  %179 = vst [vmem:[#allocation2 + $0x18] sm:$0xc0] %v171
  %180 = vst [vmem:[#allocation2 + $0x20] sm:$0x1] %v168
  %181 = vst [vmem:[#allocation2 + $0x28] sm:$0x1] %v169
  %182 = vst [vmem:[#allocation2 + $0x30] sm:$0x1] %v170
  %183 = vst [vmem:[#allocation2 + $0x38] sm:$0x1] %v171
  %184 = vrot.lane.b32.xlu0 %v30, 31
  %v185 = vpop.permute.xlu0 %184
  %186 = vrot.lane.b32.xlu0 %v34, 31
  %v187 = vpop.permute.xlu0 %186
  %188 = vrot.lane.b32.xlu0 %v31, 31
  %v189 = vpop.permute.xlu0 %188
  %190 = vrot.lane.b32.xlu0 %v35, 31
  %v191 = vpop.permute.xlu0 %190
  %vm192 = vcmp.lt.s32.totalorder %v47, 31
  %v193 = vsel %vm192, %v189, %v191
  %v194 = vsel %vm192, %v187, %v189
  %v195 = vsel %vm192, %v185, %v187
  %v196 = vsel %vm192, %v191, %v185
  %v197 = vld [vmem:[%s1 + $0x20] sm:$0xe]
  %v198 = vld [vmem:[%s1 + $0x28] sm:$0xe]
  %v199 = vld [vmem:[%s1 + $0x30] sm:$0xe]
  %v200 = vld [vmem:[%s1 + $0x38] sm:$0xe]
  %v205 = vrot.slane %v197, 1
  %v206 = vrot.slane %v198, 1
  %v207 = vrot.slane %v199, 1
  %v208 = vrot.slane %v200, 1
  %v213 = vmul.f32 %v196, %v205
  %v214 = vmul.f32 %v195, %v206
  %v215 = vmul.f32 %v194, %v207
  %v216 = vmul.f32 %v193, %v208
  %v221 = vrot.slane %v213, 7
  %v222 = vrot.slane %v214, 7
  %v223 = vrot.slane %v215, 7
  %v224 = vrot.slane %v216, 7
  %229 = vst [vmem:[#allocation2 + $0x20] sm:$0xe] %v221
  %230 = vst [vmem:[#allocation2 + $0x28] sm:$0xe] %v222
  %231 = vst [vmem:[#allocation2 + $0x30] sm:$0xe] %v223
  %232 = vst [vmem:[#allocation2 + $0x38] sm:$0xe] %v224
  %233 = vrot.lane.b32.xlu0 %v30, 30
  %v234 = vpop.permute.xlu0 %233
  %235 = vrot.lane.b32.xlu0 %v34, 30
  %v236 = vpop.permute.xlu0 %235
  %237 = vrot.lane.b32.xlu0 %v31, 30
  %v238 = vpop.permute.xlu0 %237
  %239 = vrot.lane.b32.xlu0 %v35, 30
  %v240 = vpop.permute.xlu0 %239
  %vm241 = vcmp.lt.s32.totalorder %v47, 30
  %v242 = vsel %vm241, %v238, %v240
  %v243 = vsel %vm241, %v236, %v238
  %v244 = vsel %vm241, %v234, %v236
  %v245 = vsel %vm241, %v240, %v234
  %v246 = vld [vmem:[%s1 + $0x20] sm:$0x70]
  %v247 = vld [vmem:[%s1 + $0x28] sm:$0x70]
  %v248 = vld [vmem:[%s1 + $0x30] sm:$0x70]
  %v249 = vld [vmem:[%s1 + $0x38] sm:$0x70]
  %v254 = vrot.slane %v246, 4
  %v255 = vrot.slane %v247, 4
  %v256 = vrot.slane %v248, 4
  %v257 = vrot.slane %v249, 4
  %v262 = vmul.f32 %v245, %v254
  %v263 = vmul.f32 %v244, %v255
  %v264 = vmul.f32 %v243, %v256
  %v265 = vmul.f32 %v242, %v257
  %v270 = vrot.slane %v262, 4
  %v271 = vrot.slane %v263, 4
  %v272 = vrot.slane %v264, 4
  %v273 = vrot.slane %v265, 4
  %278 = vst [vmem:[#allocation2 + $0x20] sm:$0x70] %v270
  %279 = vst [vmem:[#allocation2 + $0x28] sm:$0x70] %v271
  %280 = vst [vmem:[#allocation2 + $0x30] sm:$0x70] %v272
  %281 = vst [vmem:[#allocation2 + $0x38] sm:$0x70] %v273
  %282 = vrot.lane.b32.xlu0 %v30, 18
  %v283 = vpop.permute.xlu0 %282
  %284 = vrot.lane.b32.xlu0 %v34, 18
  %v285 = vpop.permute.xlu0 %284
  %286 = vrot.lane.b32.xlu0 %v31, 18
  %v287 = vpop.permute.xlu0 %286
  %288 = vrot.lane.b32.xlu0 %v35, 18
  %v289 = vpop.permute.xlu0 %288
  %vm290 = vcmp.lt.s32.totalorder %v47, 18
  %v291 = vsel %vm290, %v287, %v289
  %v292 = vsel %vm290, %v285, %v287
  %v293 = vsel %vm290, %v283, %v285
  %v294 = vsel %vm290, %v289, %v283
  %v295 = vld [vmem:[%s1 + $0x20] sm:$0x80]
  %v296 = vld [vmem:[%s1 + $0x28] sm:$0x80]
  %v297 = vld [vmem:[%s1 + $0x30] sm:$0x80]
  %v298 = vld [vmem:[%s1 + $0x38] sm:$0x80]
  %v299 = vld [vmem:[%s1 + $0x40] sm:$0x3]
  %v300 = vld [vmem:[%s1 + $0x48] sm:$0x3]
  %v301 = vld [vmem:[%s1 + $0x50] sm:$0x3]
  %v302 = vld [vmem:[%s1 + $0x58] sm:$0x3]
  %vm311 = vcmask 1040384
  %v312 = vrot.slane %v295, 7
  %v313 = vrot.slane %v299, 7
  %v314 = vsel %vm311, %v312, %v313
  %v315 = vrot.slane %v296, 7
  %v316 = vrot.slane %v300, 7
  %v317 = vsel %vm311, %v315, %v316
  %v318 = vrot.slane %v297, 7
  %v319 = vrot.slane %v301, 7
  %v320 = vsel %vm311, %v318, %v319
  %v321 = vrot.slane %v298, 7
  %v322 = vrot.slane %v302, 7
  %v323 = vsel %vm311, %v321, %v322
  %v328 = vmul.f32 %v294, %v314
  %v329 = vmul.f32 %v293, %v317
  %v330 = vmul.f32 %v292, %v320
  %v331 = vmul.f32 %v291, %v323
  %v336 = vrot.slane %v328, 1
  %v337 = vrot.slane %v329, 1
  %v338 = vrot.slane %v330, 1
  %v339 = vrot.slane %v331, 1
  %344 = vst [vmem:[#allocation2 + $0x20] sm:$0x80] %v336
  %345 = vst [vmem:[#allocation2 + $0x28] sm:$0x80] %v337
  %346 = vst [vmem:[#allocation2 + $0x30] sm:$0x80] %v338
  %347 = vst [vmem:[#allocation2 + $0x38] sm:$0x80] %v339
  %348 = vst [vmem:[#allocation2 + $0x40] sm:$0x3] %v336
  %349 = vst [vmem:[#allocation2 + $0x48] sm:$0x3] %v337
  %350 = vst [vmem:[#allocation2 + $0x50] sm:$0x3] %v338
  %351 = vst [vmem:[#allocation2 + $0x58] sm:$0x3] %v339
  %352 = vrot.lane.b32.xlu0 %v30, 17
  %v353 = vpop.permute.xlu0 %352
  %354 = vrot.lane.b32.xlu0 %v34, 17
  %v355 = vpop.permute.xlu0 %354
  %356 = vrot.lane.b32.xlu0 %v31, 17
  %v357 = vpop.permute.xlu0 %356
  %358 = vrot.lane.b32.xlu0 %v35, 17
  %v359 = vpop.permute.xlu0 %358
  %vm360 = vcmp.lt.s32.totalorder %v47, 17
  %v361 = vsel %vm360, %v357, %v359
  %v362 = vsel %vm360, %v355, %v357
  %v363 = vsel %vm360, %v353, %v355
  %v364 = vsel %vm360, %v359, %v353
  %v365 = vld [vmem:[%s1 + $0x40] sm:$0x1c]
  %v366 = vld [vmem:[%s1 + $0x48] sm:$0x1c]
  %v367 = vld [vmem:[%s1 + $0x50] sm:$0x1c]
  %v368 = vld [vmem:[%s1 + $0x58] sm:$0x1c]
  %v373 = vrot.slane %v365, 2
  %v374 = vrot.slane %v366, 2
  %v375 = vrot.slane %v367, 2
  %v376 = vrot.slane %v368, 2
  %v381 = vmul.f32 %v364, %v373
  %v382 = vmul.f32 %v363, %v374
  %v383 = vmul.f32 %v362, %v375
  %v384 = vmul.f32 %v361, %v376
  %v389 = vrot.slane %v381, 6
  %v390 = vrot.slane %v382, 6
  %v391 = vrot.slane %v383, 6
  %v392 = vrot.slane %v384, 6
  %397 = vst [vmem:[#allocation2 + $0x40] sm:$0x1c] %v389
  %398 = vst [vmem:[#allocation2 + $0x48] sm:$0x1c] %v390
  %399 = vst [vmem:[#allocation2 + $0x50] sm:$0x1c] %v391
  %400 = vst [vmem:[#allocation2 + $0x58] sm:$0x1c] %v392
  %401 = vrot.lane.b32.xlu0 %v30, 16
  %v402 = vpop.permute.xlu0 %401
  %403 = vrot.lane.b32.xlu0 %v34, 16
  %v404 = vpop.permute.xlu0 %403
  %405 = vrot.lane.b32.xlu0 %v31, 16
  %v406 = vpop.permute.xlu0 %405
  %407 = vrot.lane.b32.xlu0 %v35, 16
  %v408 = vpop.permute.xlu0 %407
  %vm409 = vcmp.lt.s32.totalorder %v47, 16
  %v410 = vsel %vm409, %v406, %v408
  %v411 = vsel %vm409, %v404, %v406
  %v412 = vsel %vm409, %v402, %v404
  %v413 = vsel %vm409, %v408, %v402
  %v414 = vld [vmem:[%s1 + $0x40] sm:$0xe0]
  %v415 = vld [vmem:[%s1 + $0x48] sm:$0xe0]
  %v416 = vld [vmem:[%s1 + $0x50] sm:$0xe0]
  %v417 = vld [vmem:[%s1 + $0x58] sm:$0xe0]
  %v422 = vrot.slane %v414, 5
  %v423 = vrot.slane %v415, 5
  %v424 = vrot.slane %v416, 5
  %v425 = vrot.slane %v417, 5
  %v430 = vmul.f32 %v413, %v422
  %v431 = vmul.f32 %v412, %v423
  %v432 = vmul.f32 %v411, %v424
  %v433 = vmul.f32 %v410, %v425
  %v438 = vrot.slane %v430, 3
  %v439 = vrot.slane %v431, 3
  %v440 = vrot.slane %v432, 3
  %v441 = vrot.slane %v433, 3
  %446 = vst [vmem:[#allocation2 + $0x40] sm:$0xe0] %v438
  %447 = vst [vmem:[#allocation2 + $0x48] sm:$0xe0] %v439
  %448 = vst [vmem:[#allocation2 + $0x50] sm:$0xe0] %v440
  %449 = vst [vmem:[#allocation2 + $0x58] sm:$0xe0] %v441
  %450 = vrot.lane.b32.xlu0 %v30, 15
  %v451 = vpop.permute.xlu0 %450
  %452 = vrot.lane.b32.xlu0 %v34, 15
  %v453 = vpop.permute.xlu0 %452
  %454 = vrot.lane.b32.xlu0 %v31, 15
  %v455 = vpop.permute.xlu0 %454
  %456 = vrot.lane.b32.xlu0 %v35, 15
  %v457 = vpop.permute.xlu0 %456
  %vm458 = vcmp.lt.s32.totalorder %v47, 15
  %v459 = vsel %vm458, %v455, %v457
  %v460 = vsel %vm458, %v453, %v455
  %v461 = vsel %vm458, %v451, %v453
  %v462 = vsel %vm458, %v457, %v451
  %v463 = vld [vmem:[%s1 + $0x60] sm:$0x7]
  %v464 = vld [vmem:[%s1 + $0x68] sm:$0x7]
  %v465 = vld [vmem:[%s1 + $0x70] sm:$0x7]
  %v466 = vld [vmem:[%s1 + $0x78] sm:$0x7]
  %v467 = vmul.f32 %v462, %v463
  %v468 = vmul.f32 %v461, %v464
  %v469 = vmul.f32 %v460, %v465
  %v470 = vmul.f32 %v459, %v466
  %471 = vst [vmem:[#allocation2 + $0x60] sm:$0x7] %v467
  %472 = vst [vmem:[#allocation2 + $0x68] sm:$0x7] %v468
  %473 = vst [vmem:[#allocation2 + $0x70] sm:$0x7] %v469
  %474 = vst [vmem:[#allocation2 + $0x78] sm:$0x7] %v470
  %475 = vrot.lane.b32.xlu0 %v30, 14
  %v476 = vpop.permute.xlu0 %475
  %477 = vrot.lane.b32.xlu0 %v34, 14
  %v478 = vpop.permute.xlu0 %477
  %479 = vrot.lane.b32.xlu0 %v31, 14
  %v480 = vpop.permute.xlu0 %479
  %481 = vrot.lane.b32.xlu0 %v35, 14
  %v482 = vpop.permute.xlu0 %481
  %vm483 = vcmp.lt.s32.totalorder %v47, 14
  %v484 = vsel %vm483, %v480, %v482
  %v485 = vsel %vm483, %v478, %v480
  %v486 = vsel %vm483, %v476, %v478
  %v487 = vsel %vm483, %v482, %v476
  %v488 = vld [vmem:[%s1 + $0x60] sm:$0x38]
  %v489 = vld [vmem:[%s1 + $0x68] sm:$0x38]
  %v490 = vld [vmem:[%s1 + $0x70] sm:$0x38]
  %v491 = vld [vmem:[%s1 + $0x78] sm:$0x38]
  %v496 = vrot.slane %v488, 3
  %v497 = vrot.slane %v489, 3
  %v498 = vrot.slane %v490, 3
  %v499 = vrot.slane %v491, 3
  %v504 = vmul.f32 %v487, %v496
  %v505 = vmul.f32 %v486, %v497
  %v506 = vmul.f32 %v485, %v498
  %v507 = vmul.f32 %v484, %v499
  %v512 = vrot.slane %v504, 5
  %v513 = vrot.slane %v505, 5
  %v514 = vrot.slane %v506, 5
  %v515 = vrot.slane %v507, 5
  %520 = vst [vmem:[#allocation2 + $0x60] sm:$0x38] %v512
  %521 = vst [vmem:[#allocation2 + $0x68] sm:$0x38] %v513
  %522 = vst [vmem:[#allocation2 + $0x70] sm:$0x38] %v514
  %523 = vst [vmem:[#allocation2 + $0x78] sm:$0x38] %v515
  %524 = vrot.lane.b32.xlu0 %v30, 2
  %v525 = vpop.permute.xlu0 %524
  %526 = vrot.lane.b32.xlu0 %v34, 2
  %v527 = vpop.permute.xlu0 %526
  %528 = vrot.lane.b32.xlu0 %v31, 2
  %v529 = vpop.permute.xlu0 %528
  %530 = vrot.lane.b32.xlu0 %v35, 2
  %v531 = vpop.permute.xlu0 %530
  %vm532 = vcmp.lt.s32.totalorder %v47, 2
  %v533 = vsel %vm532, %v529, %v531
  %v534 = vsel %vm532, %v527, %v529
  %v535 = vsel %vm532, %v525, %v527
  %v536 = vsel %vm532, %v531, %v525
  %v537 = vld [vmem:[%s1 + $0x60] sm:$0xc0]
  %v538 = vld [vmem:[%s1 + $0x68] sm:$0xc0]
  %v539 = vld [vmem:[%s1 + $0x70] sm:$0xc0]
  %v540 = vld [vmem:[%s1 + $0x78] sm:$0xc0]
  %v541 = vld [vmem:[%s1 + $0x80] sm:$0x1]
  %v542 = vld [vmem:[%s1 + $0x88] sm:$0x1]
  %v543 = vld [vmem:[%s1 + $0x90] sm:$0x1]
  %v544 = vld [vmem:[%s1 + $0x98] sm:$0x1]
  %v553 = vrot.slane %v537, 6
  %v554 = vrot.slane %v541, 6
  %v555 = vsel %vm143, %v553, %v554
  %v556 = vrot.slane %v538, 6
  %v557 = vrot.slane %v542, 6
  %v558 = vsel %vm143, %v556, %v557
  %v559 = vrot.slane %v539, 6
  %v560 = vrot.slane %v543, 6
  %v561 = vsel %vm143, %v559, %v560
  %v562 = vrot.slane %v540, 6
  %v563 = vrot.slane %v544, 6
  %v564 = vsel %vm143, %v562, %v563
  %v569 = vmul.f32 %v536, %v555
  %v570 = vmul.f32 %v535, %v558
  %v571 = vmul.f32 %v534, %v561
  %v572 = vmul.f32 %v533, %v564
  %v577 = vrot.slane %v569, 2
  %v578 = vrot.slane %v570, 2
  %v579 = vrot.slane %v571, 2
  %v580 = vrot.slane %v572, 2
  %585 = vst [vmem:[#allocation2 + $0x60] sm:$0xc0] %v577
  %586 = vst [vmem:[#allocation2 + $0x68] sm:$0xc0] %v578
  %587 = vst [vmem:[#allocation2 + $0x70] sm:$0xc0] %v579
  %588 = vst [vmem:[#allocation2 + $0x78] sm:$0xc0] %v580
  %589 = vst [vmem:[#allocation2 + $0x80] sm:$0x1] %v577
  %590 = vst [vmem:[#allocation2 + $0x88] sm:$0x1] %v578
  %591 = vst [vmem:[#allocation2 + $0x90] sm:$0x1] %v579
  %592 = vst [vmem:[#allocation2 + $0x98] sm:$0x1] %v580
  %593 = vrot.lane.b32.xlu0 %v30, 1
  %v594 = vpop.permute.xlu0 %593
  %595 = vrot.lane.b32.xlu0 %v34, 1
  %v596 = vpop.permute.xlu0 %595
  %597 = vrot.lane.b32.xlu0 %v31, 1
  %v598 = vpop.permute.xlu0 %597
  %599 = vrot.lane.b32.xlu0 %v35, 1
  %v600 = vpop.permute.xlu0 %599
  %vm601 = vcmp.lt.s32.totalorder %v47, 1
  %v602 = vsel %vm601, %v598, %v600
  %v603 = vsel %vm601, %v596, %v598
  %v604 = vsel %vm601, %v594, %v596
  %v605 = vsel %vm601, %v600, %v594
  %v606 = vld [vmem:[%s1 + $0x80] sm:$0xe]
  %v607 = vld [vmem:[%s1 + $0x88] sm:$0xe]
  %v608 = vld [vmem:[%s1 + $0x90] sm:$0xe]
  %v609 = vld [vmem:[%s1 + $0x98] sm:$0xe]
  %v614 = vrot.slane %v606, 1
  %v615 = vrot.slane %v607, 1
  %v616 = vrot.slane %v608, 1
  %v617 = vrot.slane %v609, 1
  %v622 = vmul.f32 %v605, %v614
  %v623 = vmul.f32 %v604, %v615
  %v624 = vmul.f32 %v603, %v616
  %v625 = vmul.f32 %v602, %v617
  %v630 = vrot.slane %v622, 7
  %v631 = vrot.slane %v623, 7
  %v632 = vrot.slane %v624, 7
  %v633 = vrot.slane %v625, 7
  %638 = vst [vmem:[#allocation2 + $0x80] sm:$0xe] %v630
  %639 = vst [vmem:[#allocation2 + $0x88] sm:$0xe] %v631
  %640 = vst [vmem:[#allocation2 + $0x90] sm:$0xe] %v632
  %641 = vst [vmem:[#allocation2 + $0x98] sm:$0xe] %v633
  %v642 = vld [vmem:[%s1 + $0x80] sm:$0x70]
  %v643 = vld [vmem:[%s1 + $0x88] sm:$0x70]
  %v644 = vld [vmem:[%s1 + $0x90] sm:$0x70]
  %v645 = vld [vmem:[%s1 + $0x98] sm:$0x70]
  %v650 = vrot.slane %v642, 4
  %v651 = vrot.slane %v643, 4
  %v652 = vrot.slane %v644, 4
  %v653 = vrot.slane %v645, 4
  %v658 = vmul.f32 %v30, %v650
  %v659 = vmul.f32 %v34, %v651
  %v660 = vmul.f32 %v31, %v652
  %v661 = vmul.f32 %v35, %v653
  %v666 = vrot.slane %v658, 4
  %v667 = vrot.slane %v659, 4
  %v668 = vrot.slane %v660, 4
  %v669 = vrot.slane %v661, 4
  %674 = vst [vmem:[#allocation2 + $0x80] sm:$0x70] %v666
  %675 = vst [vmem:[#allocation2 + $0x88] sm:$0x70] %v667
  %676 = vst [vmem:[#allocation2 + $0x90] sm:$0x70] %v668
  %677 = vst [vmem:[#allocation2 + $0x98] sm:$0x70] %v669
  %678 = vrot.lane.b32.xlu0 %v30, 127
  %v679 = vpop.permute.xlu0 %678
  %680 = vrot.lane.b32.xlu0 %v34, 127
  %v681 = vpop.permute.xlu0 %680
  %682 = vrot.lane.b32.xlu0 %v31, 127
  %v683 = vpop.permute.xlu0 %682
  %684 = vrot.lane.b32.xlu0 %v35, 127
  %v685 = vpop.permute.xlu0 %684
  %vm686 = vcmp.lt.s32.totalorder %v47, 127
  %v687 = vsel %vm686, %v683, %v685
  %v688 = vsel %vm686, %v681, %v683
  %v689 = vsel %vm686, %v679, %v681
  %v690 = vsel %vm686, %v685, %v679
  %v691 = vld [vmem:[%s1 + $0x80] sm:$0x80]
  %v692 = vld [vmem:[%s1 + $0x88] sm:$0x80]
  %v693 = vld [vmem:[%s1 + $0x90] sm:$0x80]
  %v694 = vld [vmem:[%s1 + $0x98] sm:$0x80]
  %v695 = vld [vmem:[%s1 + $0xa0] sm:$0x3]
  %v696 = vld [vmem:[%s1 + $0xa8] sm:$0x3]
  %v697 = vld [vmem:[%s1 + $0xb0] sm:$0x3]
  %v698 = vld [vmem:[%s1 + $0xb8] sm:$0x3]
  %v707 = vrot.slane %v691, 7
  %v708 = vrot.slane %v695, 7
  %v709 = vsel %vm311, %v707, %v708
  %v710 = vrot.slane %v692, 7
  %v711 = vrot.slane %v696, 7
  %v712 = vsel %vm311, %v710, %v711
  %v713 = vrot.slane %v693, 7
  %v714 = vrot.slane %v697, 7
  %v715 = vsel %vm311, %v713, %v714
  %v716 = vrot.slane %v694, 7
  %v717 = vrot.slane %v698, 7
  %v718 = vsel %vm311, %v716, %v717
  %v723 = vmul.f32 %v689, %v709
  %v724 = vmul.f32 %v688, %v712
  %v725 = vmul.f32 %v687, %v715
  %v726 = vmul.f32 %v690, %v718
  %v731 = vrot.slane %v723, 1
  %v732 = vrot.slane %v724, 1
  %v733 = vrot.slane %v725, 1
  %v734 = vrot.slane %v726, 1
  %739 = vst [vmem:[#allocation2 + $0x80] sm:$0x80] %v731
  %740 = vst [vmem:[#allocation2 + $0x88] sm:$0x80] %v732
  %741 = vst [vmem:[#allocation2 + $0x90] sm:$0x80] %v733
  %742 = vst [vmem:[#allocation2 + $0x98] sm:$0x80] %v734
  %743 = vst [vmem:[#allocation2 + $0xa0] sm:$0x3] %v731
  %744 = vst [vmem:[#allocation2 + $0xa8] sm:$0x3] %v732
  %745 = vst [vmem:[#allocation2 + $0xb0] sm:$0x3] %v733
  %746 = vst [vmem:[#allocation2 + $0xb8] sm:$0x3] %v734
  %747 = vrot.lane.b32.xlu0 %v30, 126
  %v748 = vpop.permute.xlu0 %747
  %749 = vrot.lane.b32.xlu0 %v34, 126
  %v750 = vpop.permute.xlu0 %749
  %751 = vrot.lane.b32.xlu0 %v31, 126
  %v752 = vpop.permute.xlu0 %751
  %753 = vrot.lane.b32.xlu0 %v35, 126
  %v754 = vpop.permute.xlu0 %753
  %vm755 = vcmp.lt.s32.totalorder %v47, 126
  %v756 = vsel %vm755, %v752, %v754
  %v757 = vsel %vm755, %v750, %v752
  %v758 = vsel %vm755, %v748, %v750
  %v759 = vsel %vm755, %v754, %v748
  %v760 = vld [vmem:[%s1 + $0xa0] sm:$0x1c]
  %v761 = vld [vmem:[%s1 + $0xa8] sm:$0x1c]
  %v762 = vld [vmem:[%s1 + $0xb0] sm:$0x1c]
  %v763 = vld [vmem:[%s1 + $0xb8] sm:$0x1c]
  %v768 = vrot.slane %v760, 2
  %v769 = vrot.slane %v761, 2
  %v770 = vrot.slane %v762, 2
  %v771 = vrot.slane %v763, 2
  %v776 = vmul.f32 %v758, %v768
  %v777 = vmul.f32 %v757, %v769
  %v778 = vmul.f32 %v756, %v770
  %v779 = vmul.f32 %v759, %v771
  %v784 = vrot.slane %v776, 6
  %v785 = vrot.slane %v777, 6
  %v786 = vrot.slane %v778, 6
  %v787 = vrot.slane %v779, 6
  %792 = vst [vmem:[#allocation2 + $0xa0] sm:$0x1c] %v784
  %793 = vst [vmem:[#allocation2 + $0xa8] sm:$0x1c] %v785
  %794 = vst [vmem:[#allocation2 + $0xb0] sm:$0x1c] %v786
  %795 = vst [vmem:[#allocation2 + $0xb8] sm:$0x1c] %v787
  %796 = vrot.lane.b32.xlu0 %v30, 114
  %v797 = vpop.permute.xlu0 %796
  %798 = vrot.lane.b32.xlu0 %v34, 114
  %v799 = vpop.permute.xlu0 %798
  %800 = vrot.lane.b32.xlu0 %v31, 114
  %v801 = vpop.permute.xlu0 %800
  %802 = vrot.lane.b32.xlu0 %v35, 114
  %v803 = vpop.permute.xlu0 %802
  %vm804 = vcmp.lt.s32.totalorder %v47, 114
  %v805 = vsel %vm804, %v801, %v803
  %v806 = vsel %vm804, %v799, %v801
  %v807 = vsel %vm804, %v797, %v799
  %v808 = vsel %vm804, %v803, %v797
  %v809 = vld [vmem:[%s1 + $0xa0] sm:$0xe0]
  %v810 = vld [vmem:[%s1 + $0xa8] sm:$0xe0]
  %v811 = vld [vmem:[%s1 + $0xb0] sm:$0xe0]
  %v812 = vld [vmem:[%s1 + $0xb8] sm:$0xe0]
  %v817 = vrot.slane %v809, 5
  %v818 = vrot.slane %v810, 5
  %v819 = vrot.slane %v811, 5
  %v820 = vrot.slane %v812, 5
  %v825 = vmul.f32 %v807, %v817
  %v826 = vmul.f32 %v806, %v818
  %v827 = vmul.f32 %v805, %v819
  %v828 = vmul.f32 %v808, %v820
  %v833 = vrot.slane %v825, 3
  %v834 = vrot.slane %v826, 3
  %v835 = vrot.slane %v827, 3
  %v836 = vrot.slane %v828, 3
  %841 = vst [vmem:[#allocation2 + $0xa0] sm:$0xe0] %v833
  %842 = vst [vmem:[#allocation2 + $0xa8] sm:$0xe0] %v834
  %843 = vst [vmem:[#allocation2 + $0xb0] sm:$0xe0] %v835
  %844 = vst [vmem:[#allocation2 + $0xb8] sm:$0xe0] %v836
  %845 = vrot.lane.b32.xlu0 %v30, 113
  %v846 = vpop.permute.xlu0 %845
  %847 = vrot.lane.b32.xlu0 %v34, 113
  %v848 = vpop.permute.xlu0 %847
  %849 = vrot.lane.b32.xlu0 %v31, 113
  %v850 = vpop.permute.xlu0 %849
  %851 = vrot.lane.b32.xlu0 %v35, 113
  %v852 = vpop.permute.xlu0 %851
  %vm853 = vcmp.lt.s32.totalorder %v47, 113
  %v854 = vsel %vm853, %v850, %v852
  %v855 = vsel %vm853, %v848, %v850
  %v856 = vsel %vm853, %v846, %v848
  %v857 = vsel %vm853, %v852, %v846
  %v858 = vld [vmem:[%s1 + $0xc0] sm:$0x7]
  %v859 = vld [vmem:[%s1 + $0xc8] sm:$0x7]
  %v860 = vld [vmem:[%s1 + $0xd0] sm:$0x7]
  %v861 = vld [vmem:[%s1 + $0xd8] sm:$0x7]
  %v862 = vmul.f32 %v856, %v858
  %v863 = vmul.f32 %v855, %v859
  %v864 = vmul.f32 %v854, %v860
  %v865 = vmul.f32 %v857, %v861
  %866 = vst [vmem:[#allocation2 + $0xc0] sm:$0x7] %v862
  %867 = vst [vmem:[#allocation2 + $0xc8] sm:$0x7] %v863
  %868 = vst [vmem:[#allocation2 + $0xd0] sm:$0x7] %v864
  %869 = vst [vmem:[#allocation2 + $0xd8] sm:$0x7] %v865
  %870 = vrot.lane.b32.xlu0 %v30, 112
  %v871 = vpop.permute.xlu0 %870
  %872 = vrot.lane.b32.xlu0 %v34, 112
  %v873 = vpop.permute.xlu0 %872
  %874 = vrot.lane.b32.xlu0 %v31, 112
  %v875 = vpop.permute.xlu0 %874
  %876 = vrot.lane.b32.xlu0 %v35, 112
  %v877 = vpop.permute.xlu0 %876
  %vm878 = vcmp.lt.s32.totalorder %v47, 112
  %v879 = vsel %vm878, %v875, %v877
  %v880 = vsel %vm878, %v873, %v875
  %v881 = vsel %vm878, %v871, %v873
  %v882 = vsel %vm878, %v877, %v871
  %v883 = vld [vmem:[%s1 + $0xc0] sm:$0x38]
  %v884 = vld [vmem:[%s1 + $0xc8] sm:$0x38]
  %v885 = vld [vmem:[%s1 + $0xd0] sm:$0x38]
  %v886 = vld [vmem:[%s1 + $0xd8] sm:$0x38]
  %v891 = vrot.slane %v883, 3
  %v892 = vrot.slane %v884, 3
  %v893 = vrot.slane %v885, 3
  %v894 = vrot.slane %v886, 3
  %v899 = vmul.f32 %v881, %v891
  %v900 = vmul.f32 %v880, %v892
  %v901 = vmul.f32 %v879, %v893
  %v902 = vmul.f32 %v882, %v894
  %v907 = vrot.slane %v899, 5
  %v908 = vrot.slane %v900, 5
  %v909 = vrot.slane %v901, 5
  %v910 = vrot.slane %v902, 5
  %915 = vst [vmem:[#allocation2 + $0xc0] sm:$0x38] %v907
  %916 = vst [vmem:[#allocation2 + $0xc8] sm:$0x38] %v908
  %917 = vst [vmem:[#allocation2 + $0xd0] sm:$0x38] %v909
  %918 = vst [vmem:[#allocation2 + $0xd8] sm:$0x38] %v910
  %919 = vrot.lane.b32.xlu0 %v30, 111
  %v920 = vpop.permute.xlu0 %919
  %921 = vrot.lane.b32.xlu0 %v34, 111
  %v922 = vpop.permute.xlu0 %921
  %923 = vrot.lane.b32.xlu0 %v31, 111
  %v924 = vpop.permute.xlu0 %923
  %925 = vrot.lane.b32.xlu0 %v35, 111
  %v926 = vpop.permute.xlu0 %925
  %vm927 = vcmp.lt.s32.totalorder %v47, 111
  %v928 = vsel %vm927, %v924, %v926
  %v929 = vsel %vm927, %v922, %v924
  %v930 = vsel %vm927, %v920, %v922
  %v931 = vsel %vm927, %v926, %v920
  %v932 = vld [vmem:[%s1 + $0xc0] sm:$0xc0]
  %v933 = vld [vmem:[%s1 + $0xc8] sm:$0xc0]
  %v934 = vld [vmem:[%s1 + $0xd0] sm:$0xc0]
  %v935 = vld [vmem:[%s1 + $0xd8] sm:$0xc0]
  %v936 = vld [vmem:[%s1 + $0xe0] sm:$0x1]
  %v937 = vld [vmem:[%s1 + $0xe8] sm:$0x1]
  %v938 = vld [vmem:[%s1 + $0xf0] sm:$0x1]
  %v939 = vld [vmem:[%s1 + $0xf8] sm:$0x1]
  %v948 = vrot.slane %v932, 6
  %v949 = vrot.slane %v936, 6
  %v950 = vsel %vm143, %v948, %v949
  %v951 = vrot.slane %v933, 6
  %v952 = vrot.slane %v937, 6
  %v953 = vsel %vm143, %v951, %v952
  %v954 = vrot.slane %v934, 6
  %v955 = vrot.slane %v938, 6
  %v956 = vsel %vm143, %v954, %v955
  %v957 = vrot.slane %v935, 6
  %v958 = vrot.slane %v939, 6
  %v959 = vsel %vm143, %v957, %v958
  %v964 = vmul.f32 %v930, %v950
  %v965 = vmul.f32 %v929, %v953
  %v966 = vmul.f32 %v928, %v956
  %v967 = vmul.f32 %v931, %v959
  %v972 = vrot.slane %v964, 2
  %v973 = vrot.slane %v965, 2
  %v974 = vrot.slane %v966, 2
  %v975 = vrot.slane %v967, 2
  %980 = vst [vmem:[#allocation2 + $0xc0] sm:$0xc0] %v972
  %981 = vst [vmem:[#allocation2 + $0xc8] sm:$0xc0] %v973
  %982 = vst [vmem:[#allocation2 + $0xd0] sm:$0xc0] %v974
  %983 = vst [vmem:[#allocation2 + $0xd8] sm:$0xc0] %v975
  %984 = vst [vmem:[#allocation2 + $0xe0] sm:$0x1] %v972
  %985 = vst [vmem:[#allocation2 + $0xe8] sm:$0x1] %v973
  %986 = vst [vmem:[#allocation2 + $0xf0] sm:$0x1] %v974
  %987 = vst [vmem:[#allocation2 + $0xf8] sm:$0x1] %v975
  %988 = vrot.lane.b32.xlu0 %v30, 110
  %v989 = vpop.permute.xlu0 %988
  %990 = vrot.lane.b32.xlu0 %v34, 110
  %v991 = vpop.permute.xlu0 %990
  %992 = vrot.lane.b32.xlu0 %v31, 110
  %v993 = vpop.permute.xlu0 %992
  %994 = vrot.lane.b32.xlu0 %v35, 110
  %v995 = vpop.permute.xlu0 %994
  %vm996 = vcmp.lt.s32.totalorder %v47, 110
  %v997 = vsel %vm996, %v993, %v995
  %v998 = vsel %vm996, %v991, %v993
  %v999 = vsel %vm996, %v989, %v991
  %v1000 = vsel %vm996, %v995, %v989
  %v1001 = vld [vmem:[%s1 + $0xe0] sm:$0xe]
  %v1002 = vld [vmem:[%s1 + $0xe8] sm:$0xe]
  %v1003 = vld [vmem:[%s1 + $0xf0] sm:$0xe]
  %v1004 = vld [vmem:[%s1 + $0xf8] sm:$0xe]
  %v1009 = vrot.slane %v1001, 1
  %v1010 = vrot.slane %v1002, 1
  %v1011 = vrot.slane %v1003, 1
  %v1012 = vrot.slane %v1004, 1
  %v1017 = vmul.f32 %v999, %v1009
  %v1018 = vmul.f32 %v998, %v1010
  %v1019 = vmul.f32 %v997, %v1011
  %v1020 = vmul.f32 %v1000, %v1012
  %v1025 = vrot.slane %v1017, 7
  %v1026 = vrot.slane %v1018, 7
  %v1027 = vrot.slane %v1019, 7
  %v1028 = vrot.slane %v1020, 7
  %1033 = vst [vmem:[#allocation2 + $0xe0] sm:$0xe] %v1025
  %1034 = vst [vmem:[#allocation2 + $0xe8] sm:$0xe] %v1026
  %1035 = vst [vmem:[#allocation2 + $0xf0] sm:$0xe] %v1027
  %1036 = vst [vmem:[#allocation2 + $0xf8] sm:$0xe] %v1028
  %1037 = vrot.lane.b32.xlu0 %v30, 98
  %v1038 = vpop.permute.xlu0 %1037
  %1039 = vrot.lane.b32.xlu0 %v34, 98
  %v1040 = vpop.permute.xlu0 %1039
  %1041 = vrot.lane.b32.xlu0 %v31, 98
  %v1042 = vpop.permute.xlu0 %1041
  %1043 = vrot.lane.b32.xlu0 %v35, 98
  %v1044 = vpop.permute.xlu0 %1043
  %vm1045 = vcmp.lt.s32.totalorder %v47, 98
  %v1046 = vsel %vm1045, %v1042, %v1044
  %v1047 = vsel %vm1045, %v1040, %v1042
  %v1048 = vsel %vm1045, %v1038, %v1040
  %v1049 = vsel %vm1045, %v1044, %v1038
  %v1050 = vld [vmem:[%s1 + $0xe0] sm:$0x70]
  %v1051 = vld [vmem:[%s1 + $0xe8] sm:$0x70]
  %v1052 = vld [vmem:[%s1 + $0xf0] sm:$0x70]
  %v1053 = vld [vmem:[%s1 + $0xf8] sm:$0x70]
  %v1058 = vrot.slane %v1050, 4
  %v1059 = vrot.slane %v1051, 4
  %v1060 = vrot.slane %v1052, 4
  %v1061 = vrot.slane %v1053, 4
  %v1066 = vmul.f32 %v1048, %v1058
  %v1067 = vmul.f32 %v1047, %v1059
  %v1068 = vmul.f32 %v1046, %v1060
  %v1069 = vmul.f32 %v1049, %v1061
  %v1074 = vrot.slane %v1066, 4
  %v1075 = vrot.slane %v1067, 4
  %v1076 = vrot.slane %v1068, 4
  %v1077 = vrot.slane %v1069, 4
  %1082 = vst [vmem:[#allocation2 + $0xe0] sm:$0x70] %v1074
  %1083 = vst [vmem:[#allocation2 + $0xe8] sm:$0x70] %v1075
  %1084 = vst [vmem:[#allocation2 + $0xf0] sm:$0x70] %v1076
  %1085 = vst [vmem:[#allocation2 + $0xf8] sm:$0x70] %v1077
  %1086 = vrot.lane.b32.xlu0 %v30, 97
  %v1087 = vpop.permute.xlu0 %1086
  %1088 = vrot.lane.b32.xlu0 %v34, 97
  %v1089 = vpop.permute.xlu0 %1088
  %1090 = vrot.lane.b32.xlu0 %v31, 97
  %v1091 = vpop.permute.xlu0 %1090
  %1092 = vrot.lane.b32.xlu0 %v35, 97
  %v1093 = vpop.permute.xlu0 %1092
  %vm1094 = vcmp.lt.s32.totalorder %v47, 97
  %v1095 = vsel %vm1094, %v1091, %v1093
  %v1096 = vsel %vm1094, %v1089, %v1091
  %v1097 = vsel %vm1094, %v1087, %v1089
  %v1098 = vsel %vm1094, %v1093, %v1087
  %v1099 = vld [vmem:[%s1 + $0xe0] sm:$0x80]
  %v1100 = vld [vmem:[%s1 + $0xe8] sm:$0x80]
  %v1101 = vld [vmem:[%s1 + $0xf0] sm:$0x80]
  %v1102 = vld [vmem:[%s1 + $0xf8] sm:$0x80]
  %v1103 = vld [vmem:[%s1 + $0x100] sm:$0x3]
  %v1104 = vld [vmem:[%s1 + $0x108] sm:$0x3]
  %v1105 = vld [vmem:[%s1 + $0x110] sm:$0x3]
  %v1106 = vld [vmem:[%s1 + $0x118] sm:$0x3]
  %v1115 = vrot.slane %v1099, 7
  %v1116 = vrot.slane %v1103, 7
  %v1117 = vsel %vm311, %v1115, %v1116
  %v1118 = vrot.slane %v1100, 7
  %v1119 = vrot.slane %v1104, 7
  %v1120 = vsel %vm311, %v1118, %v1119
  %v1121 = vrot.slane %v1101, 7
  %v1122 = vrot.slane %v1105, 7
  %v1123 = vsel %vm311, %v1121, %v1122
  %v1124 = vrot.slane %v1102, 7
  %v1125 = vrot.slane %v1106, 7
  %v1126 = vsel %vm311, %v1124, %v1125
  %v1131 = vmul.f32 %v1097, %v1117
  %v1132 = vmul.f32 %v1096, %v1120
  %v1133 = vmul.f32 %v1095, %v1123
  %v1134 = vmul.f32 %v1098, %v1126
  %v1139 = vrot.slane %v1131, 1
  %v1140 = vrot.slane %v1132, 1
  %v1141 = vrot.slane %v1133, 1
  %v1142 = vrot.slane %v1134, 1
  %1147 = vst [vmem:[#allocation2 + $0xe0] sm:$0x80] %v1139
  %1148 = vst [vmem:[#allocation2 + $0xe8] sm:$0x80] %v1140
  %1149 = vst [vmem:[#allocation2 + $0xf0] sm:$0x80] %v1141
  %1150 = vst [vmem:[#allocation2 + $0xf8] sm:$0x80] %v1142
  %1151 = vst [vmem:[#allocation2 + $0x100] sm:$0x3] %v1139
  %1152 = vst [vmem:[#allocation2 + $0x108] sm:$0x3] %v1140
  %1153 = vst [vmem:[#allocation2 + $0x110] sm:$0x3] %v1141
  %1154 = vst [vmem:[#allocation2 + $0x118] sm:$0x3] %v1142
  %1155 = vrot.lane.b32.xlu0 %v30, 96
  %v1156 = vpop.permute.xlu0 %1155
  %1157 = vrot.lane.b32.xlu0 %v34, 96
  %v1158 = vpop.permute.xlu0 %1157
  %1159 = vrot.lane.b32.xlu0 %v31, 96
  %v1160 = vpop.permute.xlu0 %1159
  %1161 = vrot.lane.b32.xlu0 %v35, 96
  %v1162 = vpop.permute.xlu0 %1161
  %vm1163 = vcmp.lt.s32.totalorder %v47, 96
  %v1164 = vsel %vm1163, %v1160, %v1162
  %v1165 = vsel %vm1163, %v1158, %v1160
  %v1166 = vsel %vm1163, %v1156, %v1158
  %v1167 = vsel %vm1163, %v1162, %v1156
  %v1168 = vld [vmem:[%s1 + $0x100] sm:$0x1c]
  %v1169 = vld [vmem:[%s1 + $0x108] sm:$0x1c]
  %v1170 = vld [vmem:[%s1 + $0x110] sm:$0x1c]
  %v1171 = vld [vmem:[%s1 + $0x118] sm:$0x1c]
  %v1176 = vrot.slane %v1168, 2
  %v1177 = vrot.slane %v1169, 2
  %v1178 = vrot.slane %v1170, 2
  %v1179 = vrot.slane %v1171, 2
  %v1184 = vmul.f32 %v1166, %v1176
  %v1185 = vmul.f32 %v1165, %v1177
  %v1186 = vmul.f32 %v1164, %v1178
  %v1187 = vmul.f32 %v1167, %v1179
  %v1192 = vrot.slane %v1184, 6
  %v1193 = vrot.slane %v1185, 6
  %v1194 = vrot.slane %v1186, 6
  %v1195 = vrot.slane %v1187, 6
  %1200 = vst [vmem:[#allocation2 + $0x100] sm:$0x1c] %v1192
  %1201 = vst [vmem:[#allocation2 + $0x108] sm:$0x1c] %v1193
  %1202 = vst [vmem:[#allocation2 + $0x110] sm:$0x1c] %v1194
  %1203 = vst [vmem:[#allocation2 + $0x118] sm:$0x1c] %v1195
  %1204 = vrot.lane.b32.xlu0 %v30, 95
  %v1205 = vpop.permute.xlu0 %1204
  %1206 = vrot.lane.b32.xlu0 %v34, 95
  %v1207 = vpop.permute.xlu0 %1206
  %1208 = vrot.lane.b32.xlu0 %v31, 95
  %v1209 = vpop.permute.xlu0 %1208
  %1210 = vrot.lane.b32.xlu0 %v35, 95
  %v1211 = vpop.permute.xlu0 %1210
  %vm1212 = vcmp.lt.s32.totalorder %v47, 95
  %v1213 = vsel %vm1212, %v1209, %v1211
  %v1214 = vsel %vm1212, %v1207, %v1209
  %v1215 = vsel %vm1212, %v1205, %v1207
  %v1216 = vsel %vm1212, %v1211, %v1205
  %v1217 = vld [vmem:[%s1 + $0x100] sm:$0xe0]
  %v1218 = vld [vmem:[%s1 + $0x108] sm:$0xe0]
  %v1219 = vld [vmem:[%s1 + $0x110] sm:$0xe0]
  %v1220 = vld [vmem:[%s1 + $0x118] sm:$0xe0]
  %v1225 = vrot.slane %v1217, 5
  %v1226 = vrot.slane %v1218, 5
  %v1227 = vrot.slane %v1219, 5
  %v1228 = vrot.slane %v1220, 5
  %v1233 = vmul.f32 %v1215, %v1225
  %v1234 = vmul.f32 %v1214, %v1226
  %v1235 = vmul.f32 %v1213, %v1227
  %v1236 = vmul.f32 %v1216, %v1228
  %v1241 = vrot.slane %v1233, 3
  %v1242 = vrot.slane %v1234, 3
  %v1243 = vrot.slane %v1235, 3
  %v1244 = vrot.slane %v1236, 3
  %1249 = vst [vmem:[#allocation2 + $0x100] sm:$0xe0] %v1241
  %1250 = vst [vmem:[#allocation2 + $0x108] sm:$0xe0] %v1242
  %1251 = vst [vmem:[#allocation2 + $0x110] sm:$0xe0] %v1243
  %1252 = vst [vmem:[#allocation2 + $0x118] sm:$0xe0] %v1244
  %1253 = vrot.lane.b32.xlu0 %v30, 94
  %v1254 = vpop.permute.xlu0 %1253
  %1255 = vrot.lane.b32.xlu0 %v34, 94
  %v1256 = vpop.permute.xlu0 %1255
  %1257 = vrot.lane.b32.xlu0 %v31, 94
  %v1258 = vpop.permute.xlu0 %1257
  %1259 = vrot.lane.b32.xlu0 %v35, 94
  %v1260 = vpop.permute.xlu0 %1259
  %vm1261 = vcmp.lt.s32.totalorder %v47, 94
  %v1262 = vsel %vm1261, %v1258, %v1260
  %v1263 = vsel %vm1261, %v1256, %v1258
  %v1264 = vsel %vm1261, %v1254, %v1256
  %v1265 = vsel %vm1261, %v1260, %v1254
  %v1266 = vld [vmem:[%s1 + $0x120] sm:$0x7]
  %v1267 = vld [vmem:[%s1 + $0x128] sm:$0x7]
  %v1268 = vld [vmem:[%s1 + $0x130] sm:$0x7]
  %v1269 = vld [vmem:[%s1 + $0x138] sm:$0x7]
  %v1270 = vmul.f32 %v1264, %v1266
  %v1271 = vmul.f32 %v1263, %v1267
  %v1272 = vmul.f32 %v1262, %v1268
  %v1273 = vmul.f32 %v1265, %v1269
  %1274 = vst [vmem:[#allocation2 + $0x120] sm:$0x7] %v1270
  %1275 = vst [vmem:[#allocation2 + $0x128] sm:$0x7] %v1271
  %1276 = vst [vmem:[#allocation2 + $0x130] sm:$0x7] %v1272
  %1277 = vst [vmem:[#allocation2 + $0x138] sm:$0x7] %v1273
  %v1278 = vlaneseq
  %vm1279 = vcmp.ge.s32.totalorder %v1278, 0
  %vm1280 = vcmp.lt.s32.totalorder %v1278, 512
  %vm1281 = vmand %vm1279, %vm1280
  %s1282 = scalar_lea.vmem [#allocation2], 291
  %1283 = vst.msk [vmem:[%s1282] ss:$8 sm:$0xf] %vm1281, 1.0
  %1284 = vst.msk [vmem:[%s1282] ss:$8 sm:$0x0] %vm1281, 1.0
  %1285 = vst [vmem:[#allocation2 + $0x120] sm:$0xf0] 0.0
  %1286 = vst [vmem:[#allocation2 + $0x128] sm:$0xf0] 0.0
  %1287 = vst [vmem:[#allocation2 + $0x130] sm:$0xf0] 0.0
  %1288 = vst [vmem:[#allocation2 + $0x138] sm:$0xf0] 0.0
  %v1289 = vld [vmem:[%s3] sm:$0xff]
  %v1290 = vld [vmem:[%s3 + $0x8] sm:$0xff]
  %v1291 = vld [vmem:[%s3 + $0x10] sm:$0xff]
  %v1292 = vld [vmem:[%s3 + $0x18] sm:$0xff]
  %v1293 = vld [vmem:[%s3 + $0x20] sm:$0xff]
  %v1294 = vld [vmem:[%s3 + $0x28] sm:$0xff]
  %v1295 = vld [vmem:[%s3 + $0x30] sm:$0xff]
  %v1296 = vld [vmem:[%s3 + $0x38] sm:$0xff]
  %v1297 = vld [vmem:[%s3 + $0x40] sm:$0xff]
  %v1298 = vld [vmem:[%s3 + $0x48] sm:$0xff]
  %v1299 = vld [vmem:[%s3 + $0x50] sm:$0xff]
  %v1300 = vld [vmem:[%s3 + $0x58] sm:$0xff]
  %v1301 = vld [vmem:[%s3 + $0x60] sm:$0xff]
  %v1302 = vld [vmem:[%s3 + $0x68] sm:$0xff]
  %v1303 = vld [vmem:[%s3 + $0x70] sm:$0xff]
  %v1304 = vld [vmem:[%s3 + $0x78] sm:$0xff]
  %v1305 = vld [vmem:[%s3 + $0x80] sm:$0xff]
  %v1306 = vld [vmem:[%s3 + $0x88] sm:$0xff]
  %v1307 = vld [vmem:[%s3 + $0x90] sm:$0xff]
  %v1308 = vld [vmem:[%s3 + $0x98] sm:$0xff]
  %v1309 = vld [vmem:[%s3 + $0xa0] sm:$0xff]
  %v1310 = vld [vmem:[%s3 + $0xa8] sm:$0xff]
  %v1311 = vld [vmem:[%s3 + $0xb0] sm:$0xff]
  %v1312 = vld [vmem:[%s3 + $0xb8] sm:$0xff]
  %v1313 = vld [vmem:[%s3 + $0xc0] sm:$0xff]
  %v1314 = vld [vmem:[%s3 + $0xc8] sm:$0xff]
  %v1315 = vld [vmem:[%s3 + $0xd0] sm:$0xff]
  %v1316 = vld [vmem:[%s3 + $0xd8] sm:$0xff]
  %v1317 = vld [vmem:[%s3 + $0xe0] sm:$0xff]
  %v1318 = vld [vmem:[%s3 + $0xe8] sm:$0xff]
  %v1319 = vld [vmem:[%s3 + $0xf0] sm:$0xff]
  %v1320 = vld [vmem:[%s3 + $0xf8] sm:$0xff]
  %v1321 = vld [vmem:[#allocation2] sm:$0xff]
  %v1322 = vld [vmem:[#allocation2 + $0x8] sm:$0xff]
  %v1323 = vld [vmem:[#allocation2 + $0x10] sm:$0xff]
  %v1324 = vld [vmem:[#allocation2 + $0x18] sm:$0xff]
  %v1325 = vld [vmem:[#allocation2 + $0x20] sm:$0xff]
  %v1326 = vld [vmem:[#allocation2 + $0x28] sm:$0xff]
  %v1327 = vld [vmem:[#allocation2 + $0x30] sm:$0xff]
  %v1328 = vld [vmem:[#allocation2 + $0x38] sm:$0xff]
  %v1329 = vld [vmem:[#allocation2 + $0x40] sm:$0xff]
  %v1330 = vld [vmem:[#allocation2 + $0x48] sm:$0xff]
  %v1331 = vld [vmem:[#allocation2 + $0x50] sm:$0xff]
  %v1332 = vld [vmem:[#allocation2 + $0x58] sm:$0xff]
  %v1333 = vld [vmem:[#allocation2 + $0x60] sm:$0xff]
  %v1334 = vld [vmem:[#allocation2 + $0x68] sm:$0xff]
  %v1335 = vld [vmem:[#allocation2 + $0x70] sm:$0xff]
  %v1336 = vld [vmem:[#allocation2 + $0x78] sm:$0xff]
  %v1337 = vld [vmem:[#allocation2 + $0x80] sm:$0xff]
  %v1338 = vld [vmem:[#allocation2 + $0x88] sm:$0xff]
  %v1339 = vld [vmem:[#allocation2 + $0x90] sm:$0xff]
  %v1340 = vld [vmem:[#allocation2 + $0x98] sm:$0xff]
  %v1341 = vld [vmem:[#allocation2 + $0xa0] sm:$0xff]
  %v1342 = vld [vmem:[#allocation2 + $0xa8] sm:$0xff]
  %v1343 = vld [vmem:[#allocation2 + $0xb0] sm:$0xff]
  %v1344 = vld [vmem:[#allocation2 + $0xb8] sm:$0xff]
  %v1345 = vld [vmem:[#allocation2 + $0xc0] sm:$0xff]
  %v1346 = vld [vmem:[#allocation2 + $0xc8] sm:$0xff]
  %v1347 = vld [vmem:[#allocation2 + $0xd0] sm:$0xff]
  %v1348 = vld [vmem:[#allocation2 + $0xd8] sm:$0xff]
  %v1349 = vld [vmem:[#allocation2 + $0xe0] sm:$0xff]
  %v1350 = vld [vmem:[#allocation2 + $0xe8] sm:$0xff]
  %v1351 = vld [vmem:[#allocation2 + $0xf0] sm:$0xff]
  %v1352 = vld [vmem:[#allocation2 + $0xf8] sm:$0xff]
  %v1353 = vld [vmem:[#allocation2 + $0x100] sm:$0xff]
  %v1354 = vld [vmem:[#allocation2 + $0x108] sm:$0xff]
  %v1355 = vld [vmem:[#allocation2 + $0x110] sm:$0xff]
  %v1356 = vld [vmem:[#allocation2 + $0x118] sm:$0xff]
  %v1357 = vld [vmem:[#allocation2 + $0x120] sm:$0xff]
  %v1358 = vld [vmem:[#allocation2 + $0x128] sm:$0xff]
  %v1359 = vld [vmem:[#allocation2 + $0x130] sm:$0xff]
  %v1360 = vld [vmem:[#allocation2 + $0x138] sm:$0xff]
  %vm1361 = vcmask 654336
  %v1363 = vsel %vm1361, %v1289, 0
  %v1366 = vsel %vm1361, %v1290, 0
  %v1369 = vsel %vm1361, %v1291, 0
  %v1372 = vsel %vm1361, %v1292, 0
  %v1375 = vsel %vm1361, %v1293, 0
  %v1378 = vsel %vm1361, %v1294, 0
  %v1381 = vsel %vm1361, %v1295, 0
  %v1384 = vsel %vm1361, %v1296, 0
  %v1387 = vsel %vm1361, %v1297, 0
  %v1390 = vsel %vm1361, %v1298, 0
  %v1393 = vsel %vm1361, %v1299, 0
  %v1396 = vsel %vm1361, %v1300, 0
  %v1399 = vsel %vm1361, %v1301, 0
  %v1402 = vsel %vm1361, %v1302, 0
  %v1405 = vsel %vm1361, %v1303, 0
  %v1408 = vsel %vm1361, %v1304, 0
  %v1411 = vsel %vm1361, %v1305, 0
  %v1414 = vsel %vm1361, %v1306, 0
  %v1417 = vsel %vm1361, %v1307, 0
  %v1420 = vsel %vm1361, %v1308, 0
  %v1423 = vsel %vm1361, %v1309, 0
  %v1426 = vsel %vm1361, %v1310, 0
  %v1429 = vsel %vm1361, %v1311, 0
  %v1432 = vsel %vm1361, %v1312, 0
  %v1435 = vsel %vm1361, %v1313, 0
  %v1438 = vsel %vm1361, %v1314, 0
  %v1441 = vsel %vm1361, %v1315, 0
  %v1444 = vsel %vm1361, %v1316, 0
  %v1447 = vsel %vm1361, %v1317, 0
  %v1450 = vsel %vm1361, %v1318, 0
  %v1453 = vsel %vm1361, %v1319, 0
  %v1456 = vsel %vm1361, %v1320, 0
  %1458 = vmatprep.subr.mxu0 %v1322
  %1459 = vmatpush1.msra.mxu0 %v1321
  %1460 = vmatprep.subr.mxu0 %v1326
  %1461 = vmatpush1.msra.mxu0 %v1325
  %1462 = vmatprep.subr.mxu0 %v1330
  %1463 = vmatpush1.msra.mxu0 %v1329
  %1464 = vmatprep.subr.mxu0 %v1334
  %1465 = vmatpush1.msra.mxu0 %v1333
  %1466 = vmatprep.subr.mxu0 %v1338
  %1467 = vmatpush1.msra.mxu0 %v1337
  %1468 = vmatprep.subr.mxu0 %v1342
  %1469 = vmatpush1.msra.mxu0 %v1341
  %1470 = vmatprep.subr.mxu0 %v1346
  %1471 = vmatpush1.msra.mxu0 %v1345
  %1472 = vmatprep.subr.mxu0 %v1350
  %1473 = vmatpush1.msra.mxu0 %v1349
  %1474 = vmatprep.subr.mxu0 %v1354
  %1475 = vmatpush1.msra.mxu0 %v1353
  %1476 = vmatprep.subr.mxu0 %v1358
  %1477 = vmatpush1.msra.mxu0 %v1357
  %1478 = vmatprep.subr.mxu0 0.0
  %1479 = vmatpush1.msra.mxu0 0.0
  %1480 = vmatprep.subr.mxu0 0.0
  %1481 = vmatpush1.msra.mxu0 0.0
  %1482 = vmatprep.subr.mxu0 0.0
  %1483 = vmatpush1.msra.mxu0 0.0
  %1484 = vmatprep.subr.mxu0 0.0
  %1485 = vmatpush1.msra.mxu0 0.0
  %1486 = vmatprep.subr.mxu0 0.0
  %1487 = vmatpush1.msra.mxu0 0.0
  %1488 = vmatprep.subr.mxu0 0.0
  %1489 = vmatpush1.msra.mxu0 0.0
  %1490 = vmatprep.subr.mxu0 0.0
  %1491 = vmatpush1.msra.mxu0 0.0
  %1492 = vmatprep.subr.mxu0 0.0
  %1493 = vmatpush1.msra.mxu0 0.0
  %1494 = vmatprep.subr.mxu0 0.0
  %1495 = vmatpush1.msra.mxu0 0.0
  %1496 = vmatprep.subr.mxu0 0.0
  %1497 = vmatpush1.msra.mxu0 0.0
  %1498 = vmatprep.subr.mxu0 0.0
  %1499 = vmatpush1.msra.mxu0 0.0
  %1500 = vmatprep.subr.mxu0 0.0
  %1501 = vmatpush1.msra.mxu0 0.0
  %1502 = vmatprep.subr.mxu0 0.0
  %1503 = vmatpush1.msra.mxu0 0.0
  %1504 = vmatprep.subr.mxu0 0.0
  %1505 = vmatpush1.msra.mxu0 0.0
  %1506 = vmatprep.subr.mxu0 0.0
  %1507 = vmatpush1.msra.mxu0 0.0
  %1508 = vmatprep.subr.mxu0 0.0
  %1509 = vmatpush1.msra.mxu0 0.0
  %1510 = vmatprep.subr.mxu0 0.0
  %1511 = vmatpush1.msra.mxu0 0.0
  %1512 = vmatprep.subr.mxu0 0.0
  %1513 = vmatpush1.msra.mxu0 0.0
  %1514 = vmatprep.subr.mxu0 0.0
  %1515 = vmatpush1.msra.mxu0 0.0
  %1516 = vmatprep.subr.mxu0 0.0
  %1517 = vmatpush1.msra.mxu0 0.0
  %1518 = vmatprep.subr.mxu0 0.0
  %1519 = vmatpush1.msra.mxu0 0.0
  %1520 = vmatprep.subr.mxu0 0.0
  %1521 = vmatpush1.msra.mxu0 0.0
  %1522 = vmatprep.mubr.f32.mxu0 0.0
  %1523 = vmatmul.mubr.f32.gmra.mrb[0].mxu0 %v1363
  %v1524 = vpop.f32.mrb[0].mxu0
  %v1525 = vadd.f32 0.0, %v1524
  %v1526 = vpop.f32.mrb[0].mxu0
  %v1527 = vadd.f32 0.0, %v1526
  %1528 = vmatprep.mubr.f32.mxu0 0.0
  %1529 = vmatmul.mubr.f32.gmra.mrb[0].mxu0 %v1366
  %v1530 = vpop.f32.mrb[0].mxu0
  %v1531 = vadd.f32 0.0, %v1530
  %v1532 = vpop.f32.mrb[0].mxu0
  %v1533 = vadd.f32 0.0, %v1532
  %1534 = vmatprep.mubr.f32.mxu0 0.0
  %1535 = vmatmul.mubr.f32.gmra.mrb[0].mxu0 %v1369
  %v1536 = vpop.f32.mrb[0].mxu0
  %v1537 = vadd.f32 0.0, %v1536
  %v1538 = vpop.f32.mrb[0].mxu0
  %v1539 = vadd.f32 0.0, %v1538
  %1540 = vmatprep.mubr.f32.mxu0 0.0
  %1541 = vmatmul.mubr.f32.gmra.mrb[0].mxu0 %v1372
  %v1542 = vpop.f32.mrb[0].mxu0
  %v1543 = vadd.f32 0.0, %v1542
  %v1544 = vpop.f32.mrb[0].mxu0
  %v1545 = vadd.f32 0.0, %v1544
  %1546 = vmatprep.mubr.f32.mxu0 0.0
  %1547 = vmatmul.mubr.f32.gmra.mrb[0].mxu0 %v1375
  %v1548 = vpop.f32.mrb[0].mxu0
  %v1549 = vadd.f32 0.0, %v1548
  %v1550 = vpop.f32.mrb[0].mxu0
  %v1551 = vadd.f32 0.0, %v1550
  %1552 = vmatprep.mubr.f32.mxu0 0.0
  %1553 = vmatmul.mubr.f32.gmra.mrb[0].mxu0 %v1378
  %v1554 = vpop.f32.mrb[0].mxu0
  %v1555 = vadd.f32 0.0, %v1554
  %v1556 = vpop.f32.mrb[0].mxu0
  %v1557 = vadd.f32 0.0, %v1556
  %1558 = vmatprep.mubr.f32.mxu0 0.0
  %1559 = vmatmul.mubr.f32.gmra.mrb[0].mxu0 %v1381
  %v1560 = vpop.f32.mrb[0].mxu0
  %v1561 = vadd.f32 0.0, %v1560
  %v1562 = vpop.f32.mrb[0].mxu0
  %v1563 = vadd.f32 0.0, %v1562
  %1564 = vmatprep.mubr.f32.mxu0 0.0
  %1565 = vmatmul.mubr.f32.gmra.mrb[0].mxu0 %v1384
  %v1566 = vpop.f32.mrb[0].mxu0
  %v1567 = vadd.f32 0.0, %v1566
  %v1568 = vpop.f32.mrb[0].mxu0
  %v1569 = vadd.f32 0.0, %v1568
  %1570 = vmatprep.mubr.f32.mxu0 0.0
  %1571 = vmatmul.mubr.f32.gmra.mrb[0].mxu0 %v1387
  %v1572 = vpop.f32.mrb[0].mxu0
  %v1573 = vadd.f32 0.0, %v1572
  %v1574 = vpop.f32.mrb[0].mxu0
  %v1575 = vadd.f32 0.0, %v1574
  %1576 = vmatprep.mubr.f32.mxu0 0.0
  %1577 = vmatmul.mubr.f32.gmra.mrb[0].mxu0 %v1390
  %v1578 = vpop.f32.mrb[0].mxu0
  %v1579 = vadd.f32 0.0, %v1578
  %v1580 = vpop.f32.mrb[0].mxu0
  %v1581 = vadd.f32 0.0, %v1580
  %1582 = vmatprep.mubr.f32.mxu0 0.0
  %1583 = vmatmul.mubr.f32.gmra.mrb[0].mxu0 %v1393
  %v1584 = vpop.f32.mrb[0].mxu0
  %v1585 = vadd.f32 0.0, %v1584
  %v1586 = vpop.f32.mrb[0].mxu0
  %v1587 = vadd.f32 0.0, %v1586
  %1588 = vmatprep.mubr.f32.mxu0 0.0
  %1589 = vmatmul.mubr.f32.gmra.mrb[0].mxu0 %v1396
  %v1590 = vpop.f32.mrb[0].mxu0
  %v1591 = vadd.f32 0.0, %v1590
  %v1592 = vpop.f32.mrb[0].mxu0
  %v1593 = vadd.f32 0.0, %v1592
  %1594 = vmatprep.mubr.f32.mxu0 0.0
  %1595 = vmatmul.mubr.f32.gmra.mrb[0].mxu0 %v1399
  %v1596 = vpop.f32.mrb[0].mxu0
  %v1597 = vadd.f32 0.0, %v1596
  %v1598 = vpop.f32.mrb[0].mxu0
  %v1599 = vadd.f32 0.0, %v1598
  %1600 = vmatprep.mubr.f32.mxu0 0.0
  %1601 = vmatmul.mubr.f32.gmra.mrb[0].mxu0 %v1402
  %v1602 = vpop.f32.mrb[0].mxu0
  %v1603 = vadd.f32 0.0, %v1602
  %v1604 = vpop.f32.mrb[0].mxu0
  %v1605 = vadd.f32 0.0, %v1604
  %1606 = vmatprep.mubr.f32.mxu0 0.0
  %1607 = vmatmul.mubr.f32.gmra.mrb[0].mxu0 %v1405
  %v1608 = vpop.f32.mrb[0].mxu0
  %v1609 = vadd.f32 0.0, %v1608
  %v1610 = vpop.f32.mrb[0].mxu0
  %v1611 = vadd.f32 0.0, %v1610
  %1612 = vmatprep.mubr.f32.mxu0 0.0
  %1613 = vmatmul.mubr.f32.gmra.mrb[0].mxu0 %v1408
  %v1614 = vpop.f32.mrb[0].mxu0
  %v1615 = vadd.f32 0.0, %v1614
  %v1616 = vpop.f32.mrb[0].mxu0
  %v1617 = vadd.f32 0.0, %v1616
  %1618 = vmatprep.mubr.f32.mxu0 0.0
  %1619 = vmatmul.mubr.f32.gmra.mrb[0].mxu0 %v1411
  %v1620 = vpop.f32.mrb[0].mxu0
  %v1621 = vadd.f32 0.0, %v1620
  %v1622 = vpop.f32.mrb[0].mxu0
  %v1623 = vadd.f32 0.0, %v1622
  %1624 = vmatprep.mubr.f32.mxu0 0.0
  %1625 = vmatmul.mubr.f32.gmra.mrb[0].mxu0 %v1414
  %v1626 = vpop.f32.mrb[0].mxu0
  %v1627 = vadd.f32 0.0, %v1626
  %v1628 = vpop.f32.mrb[0].mxu0
  %v1629 = vadd.f32 0.0, %v1628
  %1630 = vmatprep.mubr.f32.mxu0 0.0
  %1631 = vmatmul.mubr.f32.gmra.mrb[0].mxu0 %v1417
  %v1632 = vpop.f32.mrb[0].mxu0
  %v1633 = vadd.f32 0.0, %v1632
  %v1634 = vpop.f32.mrb[0].mxu0
  %v1635 = vadd.f32 0.0, %v1634
  %1636 = vmatprep.mubr.f32.mxu0 0.0
  %1637 = vmatmul.mubr.f32.gmra.mrb[0].mxu0 %v1420
  %v1638 = vpop.f32.mrb[0].mxu0
  %v1639 = vadd.f32 0.0, %v1638
  %v1640 = vpop.f32.mrb[0].mxu0
  %v1641 = vadd.f32 0.0, %v1640
  %1642 = vmatprep.mubr.f32.mxu0 0.0
  %1643 = vmatmul.mubr.f32.gmra.mrb[0].mxu0 %v1423
  %v1644 = vpop.f32.mrb[0].mxu0
  %v1645 = vadd.f32 0.0, %v1644
  %v1646 = vpop.f32.mrb[0].mxu0
  %v1647 = vadd.f32 0.0, %v1646
  %1648 = vmatprep.mubr.f32.mxu0 0.0
  %1649 = vmatmul.mubr.f32.gmra.mrb[0].mxu0 %v1426
  %v1650 = vpop.f32.mrb[0].mxu0
  %v1651 = vadd.f32 0.0, %v1650
  %v1652 = vpop.f32.mrb[0].mxu0
  %v1653 = vadd.f32 0.0, %v1652
  %1654 = vmatprep.mubr.f32.mxu0 0.0
  %1655 = vmatmul.mubr.f32.gmra.mrb[0].mxu0 %v1429
  %v1656 = vpop.f32.mrb[0].mxu0
  %v1657 = vadd.f32 0.0, %v1656
  %v1658 = vpop.f32.mrb[0].mxu0
  %v1659 = vadd.f32 0.0, %v1658
  %1660 = vmatprep.mubr.f32.mxu0 0.0
  %1661 = vmatmul.mubr.f32.gmra.mrb[0].mxu0 %v1432
  %v1662 = vpop.f32.mrb[0].mxu0
  %v1663 = vadd.f32 0.0, %v1662
  %v1664 = vpop.f32.mrb[0].mxu0
  %v1665 = vadd.f32 0.0, %v1664
  %1666 = vmatprep.mubr.f32.mxu0 0.0
  %1667 = vmatmul.mubr.f32.gmra.mrb[0].mxu0 %v1435
  %v1668 = vpop.f32.mrb[0].mxu0
  %v1669 = vadd.f32 0.0, %v1668
  %v1670 = vpop.f32.mrb[0].mxu0
  %v1671 = vadd.f32 0.0, %v1670
  %1672 = vmatprep.mubr.f32.mxu0 0.0
  %1673 = vmatmul.mubr.f32.gmra.mrb[0].mxu0 %v1438
  %v1674 = vpop.f32.mrb[0].mxu0
  %v1675 = vadd.f32 0.0, %v1674
  %v1676 = vpop.f32.mrb[0].mxu0
  %v1677 = vadd.f32 0.0, %v1676
  %1678 = vmatprep.mubr.f32.mxu0 0.0
  %1679 = vmatmul.mubr.f32.gmra.mrb[0].mxu0 %v1441
  %v1680 = vpop.f32.mrb[0].mxu0
  %v1681 = vadd.f32 0.0, %v1680
  %v1682 = vpop.f32.mrb[0].mxu0
  %v1683 = vadd.f32 0.0, %v1682
  %1684 = vmatprep.mubr.f32.mxu0 0.0
  %1685 = vmatmul.mubr.f32.gmra.mrb[0].mxu0 %v1444
  %v1686 = vpop.f32.mrb[0].mxu0
  %v1687 = vadd.f32 0.0, %v1686
  %v1688 = vpop.f32.mrb[0].mxu0
  %v1689 = vadd.f32 0.0, %v1688
  %1690 = vmatprep.mubr.f32.mxu0 0.0
  %1691 = vmatmul.mubr.f32.gmra.mrb[0].mxu0 %v1447
  %v1692 = vpop.f32.mrb[0].mxu0
  %v1693 = vadd.f32 0.0, %v1692
  %v1694 = vpop.f32.mrb[0].mxu0
  %v1695 = vadd.f32 0.0, %v1694
  %1696 = vmatprep.mubr.f32.mxu0 0.0
  %1697 = vmatmul.mubr.f32.gmra.mrb[0].mxu0 %v1450
  %v1698 = vpop.f32.mrb[0].mxu0
  %v1699 = vadd.f32 0.0, %v1698
  %v1700 = vpop.f32.mrb[0].mxu0
  %v1701 = vadd.f32 0.0, %v1700
  %1702 = vmatprep.mubr.f32.mxu0 0.0
  %1703 = vmatmul.mubr.f32.gmra.mrb[0].mxu0 %v1453
  %v1704 = vpop.f32.mrb[0].mxu0
  %v1705 = vadd.f32 0.0, %v1704
  %v1706 = vpop.f32.mrb[0].mxu0
  %v1707 = vadd.f32 0.0, %v1706
  %1708 = vmatprep.mubr.f32.mxu0 0.0
  %1709 = vmatmul.mubr.f32.gmra.mrb[0].mxu0 %v1456
  %v1710 = vpop.f32.mrb[0].mxu0
  %v1711 = vadd.f32 0.0, %v1710
  %v1712 = vpop.f32.mrb[0].mxu0
  %v1713 = vadd.f32 0.0, %v1712
  %1714 = vdwg.mxu0
  %1715 = vmatprep.subr.mxu0 %v1324
  %1716 = vmatpush1.msra.mxu0 %v1323
  %1717 = vmatprep.subr.mxu0 %v1328
  %1718 = vmatpush1.msra.mxu0 %v1327
  %1719 = vmatprep.subr.mxu0 %v1332
  %1720 = vmatpush1.msra.mxu0 %v1331
  %1721 = vmatprep.subr.mxu0 %v1336
  %1722 = vmatpush1.msra.mxu0 %v1335
  %1723 = vmatprep.subr.mxu0 %v1340
  %1724 = vmatpush1.msra.mxu0 %v1339
  %1725 = vmatprep.subr.mxu0 %v1344
  %1726 = vmatpush1.msra.mxu0 %v1343
  %1727 = vmatprep.subr.mxu0 %v1348
  %1728 = vmatpush1.msra.mxu0 %v1347
  %1729 = vmatprep.subr.mxu0 %v1352
  %1730 = vmatpush1.msra.mxu0 %v1351
  %1731 = vmatprep.subr.mxu0 %v1356
  %1732 = vmatpush1.msra.mxu0 %v1355
  %1733 = vmatprep.subr.mxu0 %v1360
  %1734 = vmatpush1.msra.mxu0 %v1359
  %1735 = vmatprep.subr.mxu0 0.0
  %1736 = vmatpush1.msra.mxu0 0.0
  %1737 = vmatprep.subr.mxu0 0.0
  %1738 = vmatpush1.msra.mxu0 0.0
  %1739 = vmatprep.subr.mxu0 0.0
  %1740 = vmatpush1.msra.mxu0 0.0
  %1741 = vmatprep.subr.mxu0 0.0
  %1742 = vmatpush1.msra.mxu0 0.0
  %1743 = vmatprep.subr.mxu0 0.0
  %1744 = vmatpush1.msra.mxu0 0.0
  %1745 = vmatprep.subr.mxu0 0.0
  %1746 = vmatpush1.msra.mxu0 0.0
  %1747 = vmatprep.subr.mxu0 0.0
  %1748 = vmatpush1.msra.mxu0 0.0
  %1749 = vmatprep.subr.mxu0 0.0
  %1750 = vmatpush1.msra.mxu0 0.0
  %1751 = vmatprep.subr.mxu0 0.0
  %1752 = vmatpush1.msra.mxu0 0.0
  %1753 = vmatprep.subr.mxu0 0.0
  %1754 = vmatpush1.msra.mxu0 0.0
  %1755 = vmatprep.subr.mxu0 0.0
  %1756 = vmatpush1.msra.mxu0 0.0
  %1757 = vmatprep.subr.mxu0 0.0
  %1758 = vmatpush1.msra.mxu0 0.0
  %1759 = vmatprep.subr.mxu0 0.0
  %1760 = vmatpush1.msra.mxu0 0.0
  %1761 = vmatprep.subr.mxu0 0.0
  %1762 = vmatpush1.msra.mxu0 0.0
  %1763 = vmatprep.subr.mxu0 0.0
  %1764 = vmatpush1.msra.mxu0 0.0
  %1765 = vmatprep.subr.mxu0 0.0
  %1766 = vmatpush1.msra.mxu0 0.0
  %1767 = vmatprep.subr.mxu0 0.0
  %1768 = vmatpush1.msra.mxu0 0.0
  %1769 = vmatprep.subr.mxu0 0.0
  %1770 = vmatpush1.msra.mxu0 0.0
  %1771 = vmatprep.subr.mxu0 0.0
  %1772 = vmatpush1.msra.mxu0 0.0
  %1773 = vmatprep.subr.mxu0 0.0
  %1774 = vmatpush1.msra.mxu0 0.0
  %1775 = vmatprep.subr.mxu0 0.0
  %1776 = vmatpush1.msra.mxu0 0.0
  %1777 = vmatprep.subr.mxu0 0.0
  %1778 = vmatpush1.msra.mxu0 0.0
  %1779 = vmatprep.mubr.f32.mxu0 0.0
  %1780 = vmatmul.mubr.f32.gmra.mrb[0].mxu0 %v1363
  %v1781 = vpop.f32.mrb[0].mxu0
  %v1782 = vadd.f32 0.0, %v1781
  %v1783 = vpop.f32.mrb[0].mxu0
  %v1784 = vadd.f32 0.0, %v1783
  %1785 = vmatprep.mubr.f32.mxu0 0.0
  %1786 = vmatmul.mubr.f32.gmra.mrb[0].mxu0 %v1366
  %v1787 = vpop.f32.mrb[0].mxu0
  %v1788 = vadd.f32 0.0, %v1787
  %v1789 = vpop.f32.mrb[0].mxu0
  %v1790 = vadd.f32 0.0, %v1789
  %1791 = vmatprep.mubr.f32.mxu0 0.0
  %1792 = vmatmul.mubr.f32.gmra.mrb[0].mxu0 %v1369
  %v1793 = vpop.f32.mrb[0].mxu0
  %v1794 = vadd.f32 0.0, %v1793
  %v1795 = vpop.f32.mrb[0].mxu0
  %v1796 = vadd.f32 0.0, %v1795
  %1797 = vmatprep.mubr.f32.mxu0 0.0
  %1798 = vmatmul.mubr.f32.gmra.mrb[0].mxu0 %v1372
  %v1799 = vpop.f32.mrb[0].mxu0
  %v1800 = vadd.f32 0.0, %v1799
  %v1801 = vpop.f32.mrb[0].mxu0
  %v1802 = vadd.f32 0.0, %v1801
  %1803 = vmatprep.mubr.f32.mxu0 0.0
  %1804 = vmatmul.mubr.f32.gmra.mrb[0].mxu0 %v1375
  %v1805 = vpop.f32.mrb[0].mxu0
  %v1806 = vadd.f32 0.0, %v1805
  %v1807 = vpop.f32.mrb[0].mxu0
  %v1808 = vadd.f32 0.0, %v1807
  %1809 = vmatprep.mubr.f32.mxu0 0.0
  %1810 = vmatmul.mubr.f32.gmra.mrb[0].mxu0 %v1378
  %v1811 = vpop.f32.mrb[0].mxu0
  %v1812 = vadd.f32 0.0, %v1811
  %v1813 = vpop.f32.mrb[0].mxu0
  %v1814 = vadd.f32 0.0, %v1813
  %1815 = vmatprep.mubr.f32.mxu0 0.0
  %1816 = vmatmul.mubr.f32.gmra.mrb[0].mxu0 %v1381
  %v1817 = vpop.f32.mrb[0].mxu0
  %v1818 = vadd.f32 0.0, %v1817
  %v1819 = vpop.f32.mrb[0].mxu0
  %v1820 = vadd.f32 0.0, %v1819
  %1821 = vmatprep.mubr.f32.mxu0 0.0
  %1822 = vmatmul.mubr.f32.gmra.mrb[0].mxu0 %v1384
  %v1823 = vpop.f32.mrb[0].mxu0
  %v1824 = vadd.f32 0.0, %v1823
  %v1825 = vpop.f32.mrb[0].mxu0
  %v1826 = vadd.f32 0.0, %v1825
  %1827 = vmatprep.mubr.f32.mxu0 0.0
  %1828 = vmatmul.mubr.f32.gmra.mrb[0].mxu0 %v1387
  %v1829 = vpop.f32.mrb[0].mxu0
  %v1830 = vadd.f32 0.0, %v1829
  %v1831 = vpop.f32.mrb[0].mxu0
  %v1832 = vadd.f32 0.0, %v1831
  %1833 = vmatprep.mubr.f32.mxu0 0.0
  %1834 = vmatmul.mubr.f32.gmra.mrb[0].mxu0 %v1390
  %v1835 = vpop.f32.mrb[0].mxu0
  %v1836 = vadd.f32 0.0, %v1835
  %v1837 = vpop.f32.mrb[0].mxu0
  %v1838 = vadd.f32 0.0, %v1837
  %1839 = vmatprep.mubr.f32.mxu0 0.0
  %1840 = vmatmul.mubr.f32.gmra.mrb[0].mxu0 %v1393
  %v1841 = vpop.f32.mrb[0].mxu0
  %v1842 = vadd.f32 0.0, %v1841
  %v1843 = vpop.f32.mrb[0].mxu0
  %v1844 = vadd.f32 0.0, %v1843
  %1845 = vmatprep.mubr.f32.mxu0 0.0
  %1846 = vmatmul.mubr.f32.gmra.mrb[0].mxu0 %v1396
  %v1847 = vpop.f32.mrb[0].mxu0
  %v1848 = vadd.f32 0.0, %v1847
  %v1849 = vpop.f32.mrb[0].mxu0
  %v1850 = vadd.f32 0.0, %v1849
  %1851 = vmatprep.mubr.f32.mxu0 0.0
  %1852 = vmatmul.mubr.f32.gmra.mrb[0].mxu0 %v1399
  %v1853 = vpop.f32.mrb[0].mxu0
  %v1854 = vadd.f32 0.0, %v1853
  %v1855 = vpop.f32.mrb[0].mxu0
  %v1856 = vadd.f32 0.0, %v1855
  %1857 = vmatprep.mubr.f32.mxu0 0.0
  %1858 = vmatmul.mubr.f32.gmra.mrb[0].mxu0 %v1402
  %v1859 = vpop.f32.mrb[0].mxu0
  %v1860 = vadd.f32 0.0, %v1859
  %v1861 = vpop.f32.mrb[0].mxu0
  %v1862 = vadd.f32 0.0, %v1861
  %1863 = vmatprep.mubr.f32.mxu0 0.0
  %1864 = vmatmul.mubr.f32.gmra.mrb[0].mxu0 %v1405
  %v1865 = vpop.f32.mrb[0].mxu0
  %v1866 = vadd.f32 0.0, %v1865
  %v1867 = vpop.f32.mrb[0].mxu0
  %v1868 = vadd.f32 0.0, %v1867
  %1869 = vmatprep.mubr.f32.mxu0 0.0
  %1870 = vmatmul.mubr.f32.gmra.mrb[0].mxu0 %v1408
  %v1871 = vpop.f32.mrb[0].mxu0
  %v1872 = vadd.f32 0.0, %v1871
  %v1873 = vpop.f32.mrb[0].mxu0
  %v1874 = vadd.f32 0.0, %v1873
  %1875 = vmatprep.mubr.f32.mxu0 0.0
  %1876 = vmatmul.mubr.f32.gmra.mrb[0].mxu0 %v1411
  %v1877 = vpop.f32.mrb[0].mxu0
  %v1878 = vadd.f32 0.0, %v1877
  %v1879 = vpop.f32.mrb[0].mxu0
  %v1880 = vadd.f32 0.0, %v1879
  %1881 = vmatprep.mubr.f32.mxu0 0.0
  %1882 = vmatmul.mubr.f32.gmra.mrb[0].mxu0 %v1414
  %v1883 = vpop.f32.mrb[0].mxu0
  %v1884 = vadd.f32 0.0, %v1883
  %v1885 = vpop.f32.mrb[0].mxu0
  %v1886 = vadd.f32 0.0, %v1885
  %1887 = vmatprep.mubr.f32.mxu0 0.0
  %1888 = vmatmul.mubr.f32.gmra.mrb[0].mxu0 %v1417
  %v1889 = vpop.f32.mrb[0].mxu0
  %v1890 = vadd.f32 0.0, %v1889
  %v1891 = vpop.f32.mrb[0].mxu0
  %v1892 = vadd.f32 0.0, %v1891
  %1893 = vmatprep.mubr.f32.mxu0 0.0
  %1894 = vmatmul.mubr.f32.gmra.mrb[0].mxu0 %v1420
  %v1895 = vpop.f32.mrb[0].mxu0
  %v1896 = vadd.f32 0.0, %v1895
  %v1897 = vpop.f32.mrb[0].mxu0
  %v1898 = vadd.f32 0.0, %v1897
  %1899 = vmatprep.mubr.f32.mxu0 0.0
  %1900 = vmatmul.mubr.f32.gmra.mrb[0].mxu0 %v1423
  %v1901 = vpop.f32.mrb[0].mxu0
  %v1902 = vadd.f32 0.0, %v1901
  %v1903 = vpop.f32.mrb[0].mxu0
  %v1904 = vadd.f32 0.0, %v1903
  %1905 = vmatprep.mubr.f32.mxu0 0.0
  %1906 = vmatmul.mubr.f32.gmra.mrb[0].mxu0 %v1426
  %v1907 = vpop.f32.mrb[0].mxu0
  %v1908 = vadd.f32 0.0, %v1907
  %v1909 = vpop.f32.mrb[0].mxu0
  %v1910 = vadd.f32 0.0, %v1909
  %1911 = vmatprep.mubr.f32.mxu0 0.0
  %1912 = vmatmul.mubr.f32.gmra.mrb[0].mxu0 %v1429
  %v1913 = vpop.f32.mrb[0].mxu0
  %v1914 = vadd.f32 0.0, %v1913
  %v1915 = vpop.f32.mrb[0].mxu0
  %v1916 = vadd.f32 0.0, %v1915
  %1917 = vmatprep.mubr.f32.mxu0 0.0
  %1918 = vmatmul.mubr.f32.gmra.mrb[0].mxu0 %v1432
  %v1919 = vpop.f32.mrb[0].mxu0
  %v1920 = vadd.f32 0.0, %v1919
  %v1921 = vpop.f32.mrb[0].mxu0
  %v1922 = vadd.f32 0.0, %v1921
  %1923 = vmatprep.mubr.f32.mxu0 0.0
  %1924 = vmatmul.mubr.f32.gmra.mrb[0].mxu0 %v1435
  %v1925 = vpop.f32.mrb[0].mxu0
  %v1926 = vadd.f32 0.0, %v1925
  %v1927 = vpop.f32.mrb[0].mxu0
  %v1928 = vadd.f32 0.0, %v1927
  %1929 = vmatprep.mubr.f32.mxu0 0.0
  %1930 = vmatmul.mubr.f32.gmra.mrb[0].mxu0 %v1438
  %v1931 = vpop.f32.mrb[0].mxu0
  %v1932 = vadd.f32 0.0, %v1931
  %v1933 = vpop.f32.mrb[0].mxu0
  %v1934 = vadd.f32 0.0, %v1933
  %1935 = vmatprep.mubr.f32.mxu0 0.0
  %1936 = vmatmul.mubr.f32.gmra.mrb[0].mxu0 %v1441
  %v1937 = vpop.f32.mrb[0].mxu0
  %v1938 = vadd.f32 0.0, %v1937
  %v1939 = vpop.f32.mrb[0].mxu0
  %v1940 = vadd.f32 0.0, %v1939
  %1941 = vmatprep.mubr.f32.mxu0 0.0
  %1942 = vmatmul.mubr.f32.gmra.mrb[0].mxu0 %v1444
  %v1943 = vpop.f32.mrb[0].mxu0
  %v1944 = vadd.f32 0.0, %v1943
  %v1945 = vpop.f32.mrb[0].mxu0
  %v1946 = vadd.f32 0.0, %v1945
  %1947 = vmatprep.mubr.f32.mxu0 0.0
  %1948 = vmatmul.mubr.f32.gmra.mrb[0].mxu0 %v1447
  %v1949 = vpop.f32.mrb[0].mxu0
  %v1950 = vadd.f32 0.0, %v1949
  %v1951 = vpop.f32.mrb[0].mxu0
  %v1952 = vadd.f32 0.0, %v1951
  %1953 = vmatprep.mubr.f32.mxu0 0.0
  %1954 = vmatmul.mubr.f32.gmra.mrb[0].mxu0 %v1450
  %v1955 = vpop.f32.mrb[0].mxu0
  %v1956 = vadd.f32 0.0, %v1955
  %v1957 = vpop.f32.mrb[0].mxu0
  %v1958 = vadd.f32 0.0, %v1957
  %1959 = vmatprep.mubr.f32.mxu0 0.0
  %1960 = vmatmul.mubr.f32.gmra.mrb[0].mxu0 %v1453
  %v1961 = vpop.f32.mrb[0].mxu0
  %v1962 = vadd.f32 0.0, %v1961
  %v1963 = vpop.f32.mrb[0].mxu0
  %v1964 = vadd.f32 0.0, %v1963
  %1965 = vmatprep.mubr.f32.mxu0 0.0
  %1966 = vmatmul.mubr.f32.gmra.mrb[0].mxu0 %v1456
  %v1967 = vpop.f32.mrb[0].mxu0
  %v1968 = vadd.f32 0.0, %v1967
  %v1969 = vpop.f32.mrb[0].mxu0
  %v1970 = vadd.f32 0.0, %v1969
  %1971 = vdwg.mxu0
  %v1972 = vmax.f32 %v1525, 0.0
  %v1973 = vmax.f32 %v1527, 0.0
  %v1974 = vmax.f32 %v1782, 0.0
  %v1975 = vmax.f32 %v1784, 0.0
  %v1976 = vmax.f32 %v1531, 0.0
  %v1977 = vmax.f32 %v1533, 0.0
  %v1978 = vmax.f32 %v1788, 0.0
  %v1979 = vmax.f32 %v1790, 0.0
  %v1980 = vmax.f32 %v1537, 0.0
  %v1981 = vmax.f32 %v1539, 0.0
  %v1982 = vmax.f32 %v1794, 0.0
  %v1983 = vmax.f32 %v1796, 0.0
  %v1984 = vmax.f32 %v1543, 0.0
  %v1985 = vmax.f32 %v1545, 0.0
  %v1986 = vmax.f32 %v1800, 0.0
  %v1987 = vmax.f32 %v1802, 0.0
  %v1988 = vmax.f32 %v1549, 0.0
  %v1989 = vmax.f32 %v1551, 0.0
  %v1990 = vmax.f32 %v1806, 0.0
  %v1991 = vmax.f32 %v1808, 0.0
  %v1992 = vmax.f32 %v1555, 0.0
  %v1993 = vmax.f32 %v1557, 0.0
  %v1994 = vmax.f32 %v1812, 0.0
  %v1995 = vmax.f32 %v1814, 0.0
  %v1996 = vmax.f32 %v1561, 0.0
  %v1997 = vmax.f32 %v1563, 0.0
  %v1998 = vmax.f32 %v1818, 0.0
  %v1999 = vmax.f32 %v1820, 0.0
  %v2000 = vmax.f32 %v1567, 0.0
  %v2001 = vmax.f32 %v1569, 0.0
  %v2002 = vmax.f32 %v1824, 0.0
  %v2003 = vmax.f32 %v1826, 0.0
  %v2004 = vmax.f32 %v1573, 0.0
  %v2005 = vmax.f32 %v1575, 0.0
  %v2006 = vmax.f32 %v1830, 0.0
  %v2007 = vmax.f32 %v1832, 0.0
  %v2008 = vmax.f32 %v1579, 0.0
  %v2009 = vmax.f32 %v1581, 0.0
  %v2010 = vmax.f32 %v1836, 0.0
  %v2011 = vmax.f32 %v1838, 0.0
  %v2012 = vmax.f32 %v1585, 0.0
  %v2013 = vmax.f32 %v1587, 0.0
  %v2014 = vmax.f32 %v1842, 0.0
  %v2015 = vmax.f32 %v1844, 0.0
  %v2016 = vmax.f32 %v1591, 0.0
  %v2017 = vmax.f32 %v1593, 0.0
  %v2018 = vmax.f32 %v1848, 0.0
  %v2019 = vmax.f32 %v1850, 0.0
  %v2020 = vmax.f32 %v1597, 0.0
  %v2021 = vmax.f32 %v1599, 0.0
  %v2022 = vmax.f32 %v1854, 0.0
  %v2023 = vmax.f32 %v1856, 0.0
  %v2024 = vmax.f32 %v1603, 0.0
  %v2025 = vmax.f32 %v1605, 0.0
  %v2026 = vmax.f32 %v1860, 0.0
  %v2027 = vmax.f32 %v1862, 0.0
  %v2028 = vmax.f32 %v1609, 0.0
  %v2029 = vmax.f32 %v1611, 0.0
  %v2030 = vmax.f32 %v1866, 0.0
  %v2031 = vmax.f32 %v1868, 0.0
  %v2032 = vmax.f32 %v1615, 0.0
  %v2033 = vmax.f32 %v1617, 0.0
  %v2034 = vmax.f32 %v1872, 0.0
  %v2035 = vmax.f32 %v1874, 0.0
  %v2036 = vmax.f32 %v1621, 0.0
  %v2037 = vmax.f32 %v1623, 0.0
  %v2038 = vmax.f32 %v1878, 0.0
  %v2039 = vmax.f32 %v1880, 0.0
  %v2040 = vmax.f32 %v1627, 0.0
  %v2041 = vmax.f32 %v1629, 0.0
  %v2042 = vmax.f32 %v1884, 0.0
  %v2043 = vmax.f32 %v1886, 0.0
  %v2044 = vmax.f32 %v1633, 0.0
  %v2045 = vmax.f32 %v1635, 0.0
  %v2046 = vmax.f32 %v1890, 0.0
  %v2047 = vmax.f32 %v1892, 0.0
  %v2048 = vmax.f32 %v1639, 0.0
  %v2049 = vmax.f32 %v1641, 0.0
  %v2050 = vmax.f32 %v1896, 0.0
  %v2051 = vmax.f32 %v1898, 0.0
  %v2052 = vmax.f32 %v1645, 0.0
  %v2053 = vmax.f32 %v1647, 0.0
  %v2054 = vmax.f32 %v1902, 0.0
  %v2055 = vmax.f32 %v1904, 0.0
  %v2056 = vmax.f32 %v1651, 0.0
  %v2057 = vmax.f32 %v1653, 0.0
  %v2058 = vmax.f32 %v1908, 0.0
  %v2059 = vmax.f32 %v1910, 0.0
  %v2060 = vmax.f32 %v1657, 0.0
  %v2061 = vmax.f32 %v1659, 0.0
  %v2062 = vmax.f32 %v1914, 0.0
  %v2063 = vmax.f32 %v1916, 0.0
  %v2064 = vmax.f32 %v1663, 0.0
  %v2065 = vmax.f32 %v1665, 0.0
  %v2066 = vmax.f32 %v1920, 0.0
  %v2067 = vmax.f32 %v1922, 0.0
  %v2068 = vmax.f32 %v1669, 0.0
  %v2069 = vmax.f32 %v1671, 0.0
  %v2070 = vmax.f32 %v1926, 0.0
  %v2071 = vmax.f32 %v1928, 0.0
  %v2072 = vmax.f32 %v1675, 0.0
  %v2073 = vmax.f32 %v1677, 0.0
  %v2074 = vmax.f32 %v1932, 0.0
  %v2075 = vmax.f32 %v1934, 0.0
  %v2076 = vmax.f32 %v1681, 0.0
  %v2077 = vmax.f32 %v1683, 0.0
  %v2078 = vmax.f32 %v1938, 0.0
  %v2079 = vmax.f32 %v1940, 0.0
  %v2080 = vmax.f32 %v1687, 0.0
  %v2081 = vmax.f32 %v1689, 0.0
  %v2082 = vmax.f32 %v1944, 0.0
  %v2083 = vmax.f32 %v1946, 0.0
  %v2084 = vmax.f32 %v1693, 0.0
  %v2085 = vmax.f32 %v1695, 0.0
  %v2086 = vmax.f32 %v1950, 0.0
  %v2087 = vmax.f32 %v1952, 0.0
  %v2088 = vmax.f32 %v1699, 0.0
  %v2089 = vmax.f32 %v1701, 0.0
  %v2090 = vmax.f32 %v1956, 0.0
  %v2091 = vmax.f32 %v1958, 0.0
  %v2092 = vmax.f32 %v1705, 0.0
  %v2093 = vmax.f32 %v1707, 0.0
  %v2094 = vmax.f32 %v1962, 0.0
  %v2095 = vmax.f32 %v1964, 0.0
  %v2096 = vmax.f32 %v1711, 0.0
  %v2097 = vmax.f32 %v1713, 0.0
  %v2098 = vmax.f32 %v1968, 0.0
  %v2099 = vmax.f32 %v1970, 0.0
  %v2100 = vld [vmem:[%s4] sm:$0xff]
  %v2101 = vld [vmem:[%s4 + $0x8] sm:$0xff]
  %v2102 = vld [vmem:[%s4 + $0x10] sm:$0xff]
  %v2103 = vld [vmem:[%s4 + $0x18] sm:$0xff]
  %v2104 = vld [vmem:[%s4 + $0x20] sm:$0xff]
  %v2105 = vld [vmem:[%s4 + $0x28] sm:$0xff]
  %v2106 = vld [vmem:[%s4 + $0x30] sm:$0xff]
  %v2107 = vld [vmem:[%s4 + $0x38] sm:$0xff]
  %v2108 = vld [vmem:[%s4 + $0x40] sm:$0xff]
  %v2109 = vld [vmem:[%s4 + $0x48] sm:$0xff]
  %v2110 = vld [vmem:[%s4 + $0x50] sm:$0xff]
  %v2111 = vld [vmem:[%s4 + $0x58] sm:$0xff]
  %v2112 = vld [vmem:[%s4 + $0x60] sm:$0xff]
  %v2113 = vld [vmem:[%s4 + $0x68] sm:$0xff]
  %v2114 = vld [vmem:[%s4 + $0x70] sm:$0xff]
  %v2115 = vld [vmem:[%s4 + $0x78] sm:$0xff]
  %v2116 = vld [vmem:[%s4 + $0x80] sm:$0xff]
  %v2117 = vld [vmem:[%s4 + $0x88] sm:$0xff]
  %v2118 = vld [vmem:[%s4 + $0x90] sm:$0xff]
  %v2119 = vld [vmem:[%s4 + $0x98] sm:$0xff]
  %v2120 = vld [vmem:[%s4 + $0xa0] sm:$0xff]
  %v2121 = vld [vmem:[%s4 + $0xa8] sm:$0xff]
  %v2122 = vld [vmem:[%s4 + $0xb0] sm:$0xff]
  %v2123 = vld [vmem:[%s4 + $0xb8] sm:$0xff]
  %v2124 = vld [vmem:[%s4 + $0xc0] sm:$0xff]
  %v2125 = vld [vmem:[%s4 + $0xc8] sm:$0xff]
  %v2126 = vld [vmem:[%s4 + $0xd0] sm:$0xff]
  %v2127 = vld [vmem:[%s4 + $0xd8] sm:$0xff]
  %v2128 = vld [vmem:[%s4 + $0xe0] sm:$0xff]
  %v2129 = vld [vmem:[%s4 + $0xe8] sm:$0xff]
  %v2130 = vld [vmem:[%s4 + $0xf0] sm:$0xff]
  %v2131 = vld [vmem:[%s4 + $0xf8] sm:$0xff]
  %v2132 = vld [vmem:[%s5] sm:$0xff]
  %v2133 = vld [vmem:[%s5 + $0x8] sm:$0xff]
  %v2134 = vld [vmem:[%s5 + $0x10] sm:$0xff]
  %v2135 = vld [vmem:[%s5 + $0x18] sm:$0xff]
  %v2136 = vld [vmem:[%s5 + $0x20] sm:$0xff]
  %v2137 = vld [vmem:[%s5 + $0x28] sm:$0xff]
  %v2138 = vld [vmem:[%s5 + $0x30] sm:$0xff]
  %v2139 = vld [vmem:[%s5 + $0x38] sm:$0xff]
  %v2140 = vld [vmem:[%s5 + $0x40] sm:$0xff]
  %v2141 = vld [vmem:[%s5 + $0x48] sm:$0xff]
  %v2142 = vld [vmem:[%s5 + $0x50] sm:$0xff]
  %v2143 = vld [vmem:[%s5 + $0x58] sm:$0xff]
  %v2144 = vld [vmem:[%s5 + $0x60] sm:$0xff]
  %v2145 = vld [vmem:[%s5 + $0x68] sm:$0xff]
  %v2146 = vld [vmem:[%s5 + $0x70] sm:$0xff]
  %v2147 = vld [vmem:[%s5 + $0x78] sm:$0xff]
  %2149 = vset.pattern.permute.xlu0 0
  %2150 = vperm.xlu0 %2149, %v2132
  %v2151 = vpop.permute.xlu0 %2150
  %2154 = vset.pattern.permute.xlu0 0
  %2155 = vperm.xlu0 %2154, %v2133
  %v2156 = vpop.permute.xlu0 %2155
  %2159 = vset.pattern.permute.xlu0 0
  %2160 = vperm.xlu0 %2159, %v2134
  %v2161 = vpop.permute.xlu0 %2160
  %2164 = vset.pattern.permute.xlu0 0
  %2165 = vperm.xlu0 %2164, %v2135
  %v2166 = vpop.permute.xlu0 %2165
  %2169 = vset.pattern.permute.xlu0 0
  %2170 = vperm.xlu0 %2169, %v2136
  %v2171 = vpop.permute.xlu0 %2170
  %2174 = vset.pattern.permute.xlu0 0
  %2175 = vperm.xlu0 %2174, %v2137
  %v2176 = vpop.permute.xlu0 %2175
  %2179 = vset.pattern.permute.xlu0 0
  %2180 = vperm.xlu0 %2179, %v2138
  %v2181 = vpop.permute.xlu0 %2180
  %2184 = vset.pattern.permute.xlu0 0
  %2185 = vperm.xlu0 %2184, %v2139
  %v2186 = vpop.permute.xlu0 %2185
  %2189 = vset.pattern.permute.xlu0 0
  %2190 = vperm.xlu0 %2189, %v2140
  %v2191 = vpop.permute.xlu0 %2190
  %2194 = vset.pattern.permute.xlu0 0
  %2195 = vperm.xlu0 %2194, %v2141
  %v2196 = vpop.permute.xlu0 %2195
  %2199 = vset.pattern.permute.xlu0 0
  %2200 = vperm.xlu0 %2199, %v2142
  %v2201 = vpop.permute.xlu0 %2200
  %2204 = vset.pattern.permute.xlu0 0
  %2205 = vperm.xlu0 %2204, %v2143
  %v2206 = vpop.permute.xlu0 %2205
  %2209 = vset.pattern.permute.xlu0 0
  %2210 = vperm.xlu0 %2209, %v2144
  %v2211 = vpop.permute.xlu0 %2210
  %2214 = vset.pattern.permute.xlu0 0
  %2215 = vperm.xlu0 %2214, %v2145
  %v2216 = vpop.permute.xlu0 %2215
  %2219 = vset.pattern.permute.xlu0 0
  %2220 = vperm.xlu0 %2219, %v2146
  %v2221 = vpop.permute.xlu0 %2220
  %2224 = vset.pattern.permute.xlu0 0
  %2225 = vperm.xlu0 %2224, %v2147
  %v2226 = vpop.permute.xlu0 %2225
  %2228 = vmatprep.subr.mxu0 %v1973
  %2229 = vmatpush1.msra.mxu0 %v1972
  %2230 = vmatprep.subr.mxu0 %v1977
  %2231 = vmatpush1.msra.mxu0 %v1976
  %2232 = vmatprep.subr.mxu0 %v1981
  %2233 = vmatpush1.msra.mxu0 %v1980
  %2234 = vmatprep.subr.mxu0 %v1985
  %2235 = vmatpush1.msra.mxu0 %v1984
  %2236 = vmatprep.subr.mxu0 %v1989
  %2237 = vmatpush1.msra.mxu0 %v1988
  %2238 = vmatprep.subr.mxu0 %v1993
  %2239 = vmatpush1.msra.mxu0 %v1992
  %2240 = vmatprep.subr.mxu0 %v1997
  %2241 = vmatpush1.msra.mxu0 %v1996
  %2242 = vmatprep.subr.mxu0 %v2001
  %2243 = vmatpush1.msra.mxu0 %v2000
  %2244 = vmatprep.subr.mxu0 %v2005
  %2245 = vmatpush1.msra.mxu0 %v2004
  %2246 = vmatprep.subr.mxu0 %v2009
  %2247 = vmatpush1.msra.mxu0 %v2008
  %2248 = vmatprep.subr.mxu0 %v2013
  %2249 = vmatpush1.msra.mxu0 %v2012
  %2250 = vmatprep.subr.mxu0 %v2017
  %2251 = vmatpush1.msra.mxu0 %v2016
  %2252 = vmatprep.subr.mxu0 %v2021
  %2253 = vmatpush1.msra.mxu0 %v2020
  %2254 = vmatprep.subr.mxu0 %v2025
  %2255 = vmatpush1.msra.mxu0 %v2024
  %2256 = vmatprep.subr.mxu0 %v2029
  %2257 = vmatpush1.msra.mxu0 %v2028
  %2258 = vmatprep.subr.mxu0 %v2033
  %2259 = vmatpush1.msra.mxu0 %v2032
  %2260 = vmatprep.subr.mxu0 %v2037
  %2261 = vmatpush1.msra.mxu0 %v2036
  %2262 = vmatprep.subr.mxu0 %v2041
  %2263 = vmatpush1.msra.mxu0 %v2040
  %2264 = vmatprep.subr.mxu0 %v2045
  %2265 = vmatpush1.msra.mxu0 %v2044
  %2266 = vmatprep.subr.mxu0 %v2049
  %2267 = vmatpush1.msra.mxu0 %v2048
  %2268 = vmatprep.subr.mxu0 %v2053
  %2269 = vmatpush1.msra.mxu0 %v2052
  %2270 = vmatprep.subr.mxu0 %v2057
  %2271 = vmatpush1.msra.mxu0 %v2056
  %2272 = vmatprep.subr.mxu0 %v2061
  %2273 = vmatpush1.msra.mxu0 %v2060
  %2274 = vmatprep.subr.mxu0 %v2065
  %2275 = vmatpush1.msra.mxu0 %v2064
  %2276 = vmatprep.subr.mxu0 %v2069
  %2277 = vmatpush1.msra.mxu0 %v2068
  %2278 = vmatprep.subr.mxu0 %v2073
  %2279 = vmatpush1.msra.mxu0 %v2072
  %2280 = vmatprep.subr.mxu0 %v2077
  %2281 = vmatpush1.msra.mxu0 %v2076
  %2282 = vmatprep.subr.mxu0 %v2081
  %2283 = vmatpush1.msra.mxu0 %v2080
  %2284 = vmatprep.subr.mxu0 %v2085
  %2285 = vmatpush1.msra.mxu0 %v2084
  %2286 = vmatprep.subr.mxu0 %v2089
  %2287 = vmatpush1.msra.mxu0 %v2088
  %2288 = vmatprep.subr.mxu0 %v2093
  %2289 = vmatpush1.msra.mxu0 %v2092
  %2290 = vmatprep.subr.mxu0 %v2097
  %2291 = vmatpush1.msra.mxu0 %v2096
  %2292 = vmatprep.mubr.f32.mxu0 %v2101
  %2293 = vmatmul.mubr.f32.gmra.mrb[0].mxu0 %v2100
  %v2294 = vpop.f32.mrb[0].mxu0
  %v2295 = vadd.f32 %v2151, %v2294
  %v2296 = vpop.f32.mrb[0].mxu0
  %v2297 = vadd.f32 %v2151, %v2296
  %2298 = vmatprep.mubr.f32.mxu0 %v2103
  %2299 = vmatmul.mubr.f32.gmra.mrb[0].mxu0 %v2102
  %v2300 = vpop.f32.mrb[0].mxu0
  %v2301 = vadd.f32 %v2156, %v2300
  %v2302 = vpop.f32.mrb[0].mxu0
  %v2303 = vadd.f32 %v2156, %v2302
  %2304 = vmatprep.mubr.f32.mxu0 %v2105
  %2305 = vmatmul.mubr.f32.gmra.mrb[0].mxu0 %v2104
  %v2306 = vpop.f32.mrb[0].mxu0
  %v2307 = vadd.f32 %v2161, %v2306
  %v2308 = vpop.f32.mrb[0].mxu0
  %v2309 = vadd.f32 %v2161, %v2308
  %2310 = vmatprep.mubr.f32.mxu0 %v2107
  %2311 = vmatmul.mubr.f32.gmra.mrb[0].mxu0 %v2106
  %v2312 = vpop.f32.mrb[0].mxu0
  %v2313 = vadd.f32 %v2166, %v2312
  %v2314 = vpop.f32.mrb[0].mxu0
  %v2315 = vadd.f32 %v2166, %v2314
  %2316 = vmatprep.mubr.f32.mxu0 %v2109
  %2317 = vmatmul.mubr.f32.gmra.mrb[0].mxu0 %v2108
  %v2318 = vpop.f32.mrb[0].mxu0
  %v2319 = vadd.f32 %v2171, %v2318
  %v2320 = vpop.f32.mrb[0].mxu0
  %v2321 = vadd.f32 %v2171, %v2320
  %2322 = vmatprep.mubr.f32.mxu0 %v2111
  %2323 = vmatmul.mubr.f32.gmra.mrb[0].mxu0 %v2110
  %v2324 = vpop.f32.mrb[0].mxu0
  %v2325 = vadd.f32 %v2176, %v2324
  %v2326 = vpop.f32.mrb[0].mxu0
  %v2327 = vadd.f32 %v2176, %v2326
  %2328 = vmatprep.mubr.f32.mxu0 %v2113
  %2329 = vmatmul.mubr.f32.gmra.mrb[0].mxu0 %v2112
  %v2330 = vpop.f32.mrb[0].mxu0
  %v2331 = vadd.f32 %v2181, %v2330
  %v2332 = vpop.f32.mrb[0].mxu0
  %v2333 = vadd.f32 %v2181, %v2332
  %2334 = vmatprep.mubr.f32.mxu0 %v2115
  %2335 = vmatmul.mubr.f32.gmra.mrb[0].mxu0 %v2114
  %v2336 = vpop.f32.mrb[0].mxu0
  %v2337 = vadd.f32 %v2186, %v2336
  %v2338 = vpop.f32.mrb[0].mxu0
  %v2339 = vadd.f32 %v2186, %v2338
  %2340 = vmatprep.mubr.f32.mxu0 %v2117
  %2341 = vmatmul.mubr.f32.gmra.mrb[0].mxu0 %v2116
  %v2342 = vpop.f32.mrb[0].mxu0
  %v2343 = vadd.f32 %v2191, %v2342
  %v2344 = vpop.f32.mrb[0].mxu0
  %v2345 = vadd.f32 %v2191, %v2344
  %2346 = vmatprep.mubr.f32.mxu0 %v2119
  %2347 = vmatmul.mubr.f32.gmra.mrb[0].mxu0 %v2118
  %v2348 = vpop.f32.mrb[0].mxu0
  %v2349 = vadd.f32 %v2196, %v2348
  %v2350 = vpop.f32.mrb[0].mxu0
  %v2351 = vadd.f32 %v2196, %v2350
  %2352 = vmatprep.mubr.f32.mxu0 %v2121
  %2353 = vmatmul.mubr.f32.gmra.mrb[0].mxu0 %v2120
  %v2354 = vpop.f32.mrb[0].mxu0
  %v2355 = vadd.f32 %v2201, %v2354
  %v2356 = vpop.f32.mrb[0].mxu0
  %v2357 = vadd.f32 %v2201, %v2356
  %2358 = vmatprep.mubr.f32.mxu0 %v2123
  %2359 = vmatmul.mubr.f32.gmra.mrb[0].mxu0 %v2122
  %v2360 = vpop.f32.mrb[0].mxu0
  %v2361 = vadd.f32 %v2206, %v2360
  %v2362 = vpop.f32.mrb[0].mxu0
  %v2363 = vadd.f32 %v2206, %v2362
  %2364 = vmatprep.mubr.f32.mxu0 %v2125
  %2365 = vmatmul.mubr.f32.gmra.mrb[0].mxu0 %v2124
  %v2366 = vpop.f32.mrb[0].mxu0
  %v2367 = vadd.f32 %v2211, %v2366
  %v2368 = vpop.f32.mrb[0].mxu0
  %v2369 = vadd.f32 %v2211, %v2368
  %2370 = vmatprep.mubr.f32.mxu0 %v2127
  %2371 = vmatmul.mubr.f32.gmra.mrb[0].mxu0 %v2126
  %v2372 = vpop.f32.mrb[0].mxu0
  %v2373 = vadd.f32 %v2216, %v2372
  %v2374 = vpop.f32.mrb[0].mxu0
  %v2375 = vadd.f32 %v2216, %v2374
  %2376 = vmatprep.mubr.f32.mxu0 %v2129
  %2377 = vmatmul.mubr.f32.gmra.mrb[0].mxu0 %v2128
  %v2378 = vpop.f32.mrb[0].mxu0
  %v2379 = vadd.f32 %v2221, %v2378
  %v2380 = vpop.f32.mrb[0].mxu0
  %v2381 = vadd.f32 %v2221, %v2380
  %2382 = vmatprep.mubr.f32.mxu0 %v2131
  %2383 = vmatmul.mubr.f32.gmra.mrb[0].mxu0 %v2130
  %v2384 = vpop.f32.mrb[0].mxu0
  %v2385 = vadd.f32 %v2226, %v2384
  %v2386 = vpop.f32.mrb[0].mxu0
  %v2387 = vadd.f32 %v2226, %v2386
  %2388 = vdwg.mxu0
  %2389 = vmatprep.subr.mxu0 %v1975
  %2390 = vmatpush1.msra.mxu0 %v1974
  %2391 = vmatprep.subr.mxu0 %v1979
  %2392 = vmatpush1.msra.mxu0 %v1978
  %2393 = vmatprep.subr.mxu0 %v1983
  %2394 = vmatpush1.msra.mxu0 %v1982
  %2395 = vmatprep.subr.mxu0 %v1987
  %2396 = vmatpush1.msra.mxu0 %v1986
  %2397 = vmatprep.subr.mxu0 %v1991
  %2398 = vmatpush1.msra.mxu0 %v1990
  %2399 = vmatprep.subr.mxu0 %v1995
  %2400 = vmatpush1.msra.mxu0 %v1994
  %2401 = vmatprep.subr.mxu0 %v1999
  %2402 = vmatpush1.msra.mxu0 %v1998
  %2403 = vmatprep.subr.mxu0 %v2003
  %2404 = vmatpush1.msra.mxu0 %v2002
  %2405 = vmatprep.subr.mxu0 %v2007
  %2406 = vmatpush1.msra.mxu0 %v2006
  %2407 = vmatprep.subr.mxu0 %v2011
  %2408 = vmatpush1.msra.mxu0 %v2010
  %2409 = vmatprep.subr.mxu0 %v2015
  %2410 = vmatpush1.msra.mxu0 %v2014
  %2411 = vmatprep.subr.mxu0 %v2019
  %2412 = vmatpush1.msra.mxu0 %v2018
  %2413 = vmatprep.subr.mxu0 %v2023
  %2414 = vmatpush1.msra.mxu0 %v2022
  %2415 = vmatprep.subr.mxu0 %v2027
  %2416 = vmatpush1.msra.mxu0 %v2026
  %2417 = vmatprep.subr.mxu0 %v2031
  %2418 = vmatpush1.msra.mxu0 %v2030
  %2419 = vmatprep.subr.mxu0 %v2035
  %2420 = vmatpush1.msra.mxu0 %v2034
  %2421 = vmatprep.subr.mxu0 %v2039
  %2422 = vmatpush1.msra.mxu0 %v2038
  %2423 = vmatprep.subr.mxu0 %v2043
  %2424 = vmatpush1.msra.mxu0 %v2042
  %2425 = vmatprep.subr.mxu0 %v2047
  %2426 = vmatpush1.msra.mxu0 %v2046
  %2427 = vmatprep.subr.mxu0 %v2051
  %2428 = vmatpush1.msra.mxu0 %v2050
  %2429 = vmatprep.subr.mxu0 %v2055
  %2430 = vmatpush1.msra.mxu0 %v2054
  %2431 = vmatprep.subr.mxu0 %v2059
  %2432 = vmatpush1.msra.mxu0 %v2058
  %2433 = vmatprep.subr.mxu0 %v2063
  %2434 = vmatpush1.msra.mxu0 %v2062
  %2435 = vmatprep.subr.mxu0 %v2067
  %2436 = vmatpush1.msra.mxu0 %v2066
  %2437 = vmatprep.subr.mxu0 %v2071
  %2438 = vmatpush1.msra.mxu0 %v2070
  %2439 = vmatprep.subr.mxu0 %v2075
  %2440 = vmatpush1.msra.mxu0 %v2074
  %2441 = vmatprep.subr.mxu0 %v2079
  %2442 = vmatpush1.msra.mxu0 %v2078
  %2443 = vmatprep.subr.mxu0 %v2083
  %2444 = vmatpush1.msra.mxu0 %v2082
  %2445 = vmatprep.subr.mxu0 %v2087
  %2446 = vmatpush1.msra.mxu0 %v2086
  %2447 = vmatprep.subr.mxu0 %v2091
  %2448 = vmatpush1.msra.mxu0 %v2090
  %2449 = vmatprep.subr.mxu0 %v2095
  %2450 = vmatpush1.msra.mxu0 %v2094
  %2451 = vmatprep.subr.mxu0 %v2099
  %2452 = vmatpush1.msra.mxu0 %v2098
  %2453 = vmatprep.mubr.f32.mxu0 %v2101
  %2454 = vmatmul.mubr.f32.gmra.mrb[0].mxu0 %v2100
  %v2455 = vpop.f32.mrb[0].mxu0
  %v2456 = vadd.f32 %v2151, %v2455
  %v2457 = vpop.f32.mrb[0].mxu0
  %v2458 = vadd.f32 %v2151, %v2457
  %2459 = vmatprep.mubr.f32.mxu0 %v2103
  %2460 = vmatmul.mubr.f32.gmra.mrb[0].mxu0 %v2102
  %v2461 = vpop.f32.mrb[0].mxu0
  %v2462 = vadd.f32 %v2156, %v2461
  %v2463 = vpop.f32.mrb[0].mxu0
  %v2464 = vadd.f32 %v2156, %v2463
  %2465 = vmatprep.mubr.f32.mxu0 %v2105
  %2466 = vmatmul.mubr.f32.gmra.mrb[0].mxu0 %v2104
  %v2467 = vpop.f32.mrb[0].mxu0
  %v2468 = vadd.f32 %v2161, %v2467
  %v2469 = vpop.f32.mrb[0].mxu0
  %v2470 = vadd.f32 %v2161, %v2469
  %2471 = vmatprep.mubr.f32.mxu0 %v2107
  %2472 = vmatmul.mubr.f32.gmra.mrb[0].mxu0 %v2106
  %v2473 = vpop.f32.mrb[0].mxu0
  %v2474 = vadd.f32 %v2166, %v2473
  %v2475 = vpop.f32.mrb[0].mxu0
  %v2476 = vadd.f32 %v2166, %v2475
  %2477 = vmatprep.mubr.f32.mxu0 %v2109
  %2478 = vmatmul.mubr.f32.gmra.mrb[0].mxu0 %v2108
  %v2479 = vpop.f32.mrb[0].mxu0
  %v2480 = vadd.f32 %v2171, %v2479
  %v2481 = vpop.f32.mrb[0].mxu0
  %v2482 = vadd.f32 %v2171, %v2481
  %2483 = vmatprep.mubr.f32.mxu0 %v2111
  %2484 = vmatmul.mubr.f32.gmra.mrb[0].mxu0 %v2110
  %v2485 = vpop.f32.mrb[0].mxu0
  %v2486 = vadd.f32 %v2176, %v2485
  %v2487 = vpop.f32.mrb[0].mxu0
  %v2488 = vadd.f32 %v2176, %v2487
  %2489 = vmatprep.mubr.f32.mxu0 %v2113
  %2490 = vmatmul.mubr.f32.gmra.mrb[0].mxu0 %v2112
  %v2491 = vpop.f32.mrb[0].mxu0
  %v2492 = vadd.f32 %v2181, %v2491
  %v2493 = vpop.f32.mrb[0].mxu0
  %v2494 = vadd.f32 %v2181, %v2493
  %2495 = vmatprep.mubr.f32.mxu0 %v2115
  %2496 = vmatmul.mubr.f32.gmra.mrb[0].mxu0 %v2114
  %v2497 = vpop.f32.mrb[0].mxu0
  %v2498 = vadd.f32 %v2186, %v2497
  %v2499 = vpop.f32.mrb[0].mxu0
  %v2500 = vadd.f32 %v2186, %v2499
  %2501 = vmatprep.mubr.f32.mxu0 %v2117
  %2502 = vmatmul.mubr.f32.gmra.mrb[0].mxu0 %v2116
  %v2503 = vpop.f32.mrb[0].mxu0
  %v2504 = vadd.f32 %v2191, %v2503
  %v2505 = vpop.f32.mrb[0].mxu0
  %v2506 = vadd.f32 %v2191, %v2505
  %2507 = vmatprep.mubr.f32.mxu0 %v2119
  %2508 = vmatmul.mubr.f32.gmra.mrb[0].mxu0 %v2118
  %v2509 = vpop.f32.mrb[0].mxu0
  %v2510 = vadd.f32 %v2196, %v2509
  %v2511 = vpop.f32.mrb[0].mxu0
  %v2512 = vadd.f32 %v2196, %v2511
  %2513 = vmatprep.mubr.f32.mxu0 %v2121
  %2514 = vmatmul.mubr.f32.gmra.mrb[0].mxu0 %v2120
  %v2515 = vpop.f32.mrb[0].mxu0
  %v2516 = vadd.f32 %v2201, %v2515
  %v2517 = vpop.f32.mrb[0].mxu0
  %v2518 = vadd.f32 %v2201, %v2517
  %2519 = vmatprep.mubr.f32.mxu0 %v2123
  %2520 = vmatmul.mubr.f32.gmra.mrb[0].mxu0 %v2122
  %v2521 = vpop.f32.mrb[0].mxu0
  %v2522 = vadd.f32 %v2206, %v2521
  %v2523 = vpop.f32.mrb[0].mxu0
  %v2524 = vadd.f32 %v2206, %v2523
  %2525 = vmatprep.mubr.f32.mxu0 %v2125
  %2526 = vmatmul.mubr.f32.gmra.mrb[0].mxu0 %v2124
  %v2527 = vpop.f32.mrb[0].mxu0
  %v2528 = vadd.f32 %v2211, %v2527
  %v2529 = vpop.f32.mrb[0].mxu0
  %v2530 = vadd.f32 %v2211, %v2529
  %2531 = vmatprep.mubr.f32.mxu0 %v2127
  %2532 = vmatmul.mubr.f32.gmra.mrb[0].mxu0 %v2126
  %v2533 = vpop.f32.mrb[0].mxu0
  %v2534 = vadd.f32 %v2216, %v2533
  %v2535 = vpop.f32.mrb[0].mxu0
  %v2536 = vadd.f32 %v2216, %v2535
  %2537 = vmatprep.mubr.f32.mxu0 %v2129
  %2538 = vmatmul.mubr.f32.gmra.mrb[0].mxu0 %v2128
  %v2539 = vpop.f32.mrb[0].mxu0
  %v2540 = vadd.f32 %v2221, %v2539
  %v2541 = vpop.f32.mrb[0].mxu0
  %v2542 = vadd.f32 %v2221, %v2541
  %2543 = vmatprep.mubr.f32.mxu0 %v2131
  %2544 = vmatmul.mubr.f32.gmra.mrb[0].mxu0 %v2130
  %v2545 = vpop.f32.mrb[0].mxu0
  %v2546 = vadd.f32 %v2226, %v2545
  %v2547 = vpop.f32.mrb[0].mxu0
  %v2548 = vadd.f32 %v2226, %v2547
  %2549 = vdwg.mxu0
  %v2550 = vmax.f32 %v2295, 0.0
  %v2551 = vmax.f32 %v2297, 0.0
  %v2552 = vmax.f32 %v2456, 0.0
  %v2553 = vmax.f32 %v2458, 0.0
  %v2554 = vmax.f32 %v2301, 0.0
  %v2555 = vmax.f32 %v2303, 0.0
  %v2556 = vmax.f32 %v2462, 0.0
  %v2557 = vmax.f32 %v2464, 0.0
  %v2558 = vmax.f32 %v2307, 0.0
  %v2559 = vmax.f32 %v2309, 0.0
  %v2560 = vmax.f32 %v2468, 0.0
  %v2561 = vmax.f32 %v2470, 0.0
  %v2562 = vmax.f32 %v2313, 0.0
  %v2563 = vmax.f32 %v2315, 0.0
  %v2564 = vmax.f32 %v2474, 0.0
  %v2565 = vmax.f32 %v2476, 0.0
  %v2566 = vmax.f32 %v2319, 0.0
  %v2567 = vmax.f32 %v2321, 0.0
  %v2568 = vmax.f32 %v2480, 0.0
  %v2569 = vmax.f32 %v2482, 0.0
  %v2570 = vmax.f32 %v2325, 0.0
  %v2571 = vmax.f32 %v2327, 0.0
  %v2572 = vmax.f32 %v2486, 0.0
  %v2573 = vmax.f32 %v2488, 0.0
  %v2574 = vmax.f32 %v2331, 0.0
  %v2575 = vmax.f32 %v2333, 0.0
  %v2576 = vmax.f32 %v2492, 0.0
  %v2577 = vmax.f32 %v2494, 0.0
  %v2578 = vmax.f32 %v2337, 0.0
  %v2579 = vmax.f32 %v2339, 0.0
  %v2580 = vmax.f32 %v2498, 0.0
  %v2581 = vmax.f32 %v2500, 0.0
  %v2582 = vmax.f32 %v2343, 0.0
  %v2583 = vmax.f32 %v2345, 0.0
  %v2584 = vmax.f32 %v2504, 0.0
  %v2585 = vmax.f32 %v2506, 0.0
  %v2586 = vmax.f32 %v2349, 0.0
  %v2587 = vmax.f32 %v2351, 0.0
  %v2588 = vmax.f32 %v2510, 0.0
  %v2589 = vmax.f32 %v2512, 0.0
  %v2590 = vmax.f32 %v2355, 0.0
  %v2591 = vmax.f32 %v2357, 0.0
  %v2592 = vmax.f32 %v2516, 0.0
  %v2593 = vmax.f32 %v2518, 0.0
  %v2594 = vmax.f32 %v2361, 0.0
  %v2595 = vmax.f32 %v2363, 0.0
  %v2596 = vmax.f32 %v2522, 0.0
  %v2597 = vmax.f32 %v2524, 0.0
  %v2598 = vmax.f32 %v2367, 0.0
  %v2599 = vmax.f32 %v2369, 0.0
  %v2600 = vmax.f32 %v2528, 0.0
  %v2601 = vmax.f32 %v2530, 0.0
  %v2602 = vmax.f32 %v2373, 0.0
  %v2603 = vmax.f32 %v2375, 0.0
  %v2604 = vmax.f32 %v2534, 0.0
  %v2605 = vmax.f32 %v2536, 0.0
  %v2606 = vmax.f32 %v2379, 0.0
  %v2607 = vmax.f32 %v2381, 0.0
  %v2608 = vmax.f32 %v2540, 0.0
  %v2609 = vmax.f32 %v2542, 0.0
  %v2610 = vmax.f32 %v2385, 0.0
  %v2611 = vmax.f32 %v2387, 0.0
  %v2612 = vmax.f32 %v2546, 0.0
  %v2613 = vmax.f32 %v2548, 0.0
  %v2614 = vld [vmem:[%s6] sm:$0xff]
  %v2615 = vld [vmem:[%s6 + $0x8] sm:$0xff]
  %2616 = vmatprep.subr.mxu0 %v2551
  %2617 = vmatpush1.msra.mxu0 %v2550
  %2618 = vmatprep.subr.mxu0 %v2555
  %2619 = vmatpush1.msra.mxu0 %v2554
  %2620 = vmatprep.subr.mxu0 %v2559
  %2621 = vmatpush1.msra.mxu0 %v2558
  %2622 = vmatprep.subr.mxu0 %v2563
  %2623 = vmatpush1.msra.mxu0 %v2562
  %2624 = vmatprep.subr.mxu0 %v2567
  %2625 = vmatpush1.msra.mxu0 %v2566
  %2626 = vmatprep.subr.mxu0 %v2571
  %2627 = vmatpush1.msra.mxu0 %v2570
  %2628 = vmatprep.subr.mxu0 %v2575
  %2629 = vmatpush1.msra.mxu0 %v2574
  %2630 = vmatprep.subr.mxu0 %v2579
  %2631 = vmatpush1.msra.mxu0 %v2578
  %2632 = vmatprep.subr.mxu0 %v2583
  %2633 = vmatpush1.msra.mxu0 %v2582
  %2634 = vmatprep.subr.mxu0 %v2587
  %2635 = vmatpush1.msra.mxu0 %v2586
  %2636 = vmatprep.subr.mxu0 %v2591
  %2637 = vmatpush1.msra.mxu0 %v2590
  %2638 = vmatprep.subr.mxu0 %v2595
  %2639 = vmatpush1.msra.mxu0 %v2594
  %2640 = vmatprep.subr.mxu0 %v2599
  %2641 = vmatpush1.msra.mxu0 %v2598
  %2642 = vmatprep.subr.mxu0 %v2603
  %2643 = vmatpush1.msra.mxu0 %v2602
  %2644 = vmatprep.subr.mxu0 %v2607
  %2645 = vmatpush1.msra.mxu0 %v2606
  %2646 = vmatprep.subr.mxu0 %v2611
  %2647 = vmatpush1.msra.mxu0 %v2610
  %2648 = vmatprep.subr.mxu0 0.0
  %2649 = vmatpush1.msra.mxu0 0.0
  %2650 = vmatprep.subr.mxu0 0.0
  %2651 = vmatpush1.msra.mxu0 0.0
  %2652 = vmatprep.subr.mxu0 0.0
  %2653 = vmatpush1.msra.mxu0 0.0
  %2654 = vmatprep.subr.mxu0 0.0
  %2655 = vmatpush1.msra.mxu0 0.0
  %2656 = vmatprep.subr.mxu0 0.0
  %2657 = vmatpush1.msra.mxu0 0.0
  %2658 = vmatprep.subr.mxu0 0.0
  %2659 = vmatpush1.msra.mxu0 0.0
  %2660 = vmatprep.subr.mxu0 0.0
  %2661 = vmatpush1.msra.mxu0 0.0
  %2662 = vmatprep.subr.mxu0 0.0
  %2663 = vmatpush1.msra.mxu0 0.0
  %2664 = vmatprep.subr.mxu0 0.0
  %2665 = vmatpush1.msra.mxu0 0.0
  %2666 = vmatprep.subr.mxu0 0.0
  %2667 = vmatpush1.msra.mxu0 0.0
  %2668 = vmatprep.subr.mxu0 0.0
  %2669 = vmatpush1.msra.mxu0 0.0
  %2670 = vmatprep.subr.mxu0 0.0
  %2671 = vmatpush1.msra.mxu0 0.0
  %2672 = vmatprep.subr.mxu0 0.0
  %2673 = vmatpush1.msra.mxu0 0.0
  %2674 = vmatprep.subr.mxu0 0.0
  %2675 = vmatpush1.msra.mxu0 0.0
  %2676 = vmatprep.subr.mxu0 0.0
  %2677 = vmatpush1.msra.mxu0 0.0
  %2678 = vmatprep.subr.mxu0 0.0
  %2679 = vmatpush1.msra.mxu0 0.0
  %2680 = vmatprep.mubr.f32.mxu0 0.0
  %2681 = vmatmul.mubr.f32.gmra.mrb[0].mxu0 %v2614
  %v2682 = vpop.f32.mrb[0].mxu0
  %v2683 = vadd.f32 0.0, %v2682
  %v2684 = vpop.f32.mrb[0].mxu0
  %v2685 = vadd.f32 0.0, %v2684
  %2686 = vmatprep.mubr.f32.mxu0 0.0
  %2687 = vmatmul.mubr.f32.gmra.mrb[0].mxu0 %v2615
  %v2688 = vpop.f32.mrb[0].mxu0
  %v2689 = vadd.f32 0.0, %v2688
  %v2690 = vpop.f32.mrb[0].mxu0
  %v2691 = vadd.f32 0.0, %v2690
  %2692 = vdwg.mxu0
  %2693 = vmatprep.subr.mxu0 %v2553
  %2694 = vmatpush1.msra.mxu0 %v2552
  %2695 = vmatprep.subr.mxu0 %v2557
  %2696 = vmatpush1.msra.mxu0 %v2556
  %2697 = vmatprep.subr.mxu0 %v2561
  %2698 = vmatpush1.msra.mxu0 %v2560
  %2699 = vmatprep.subr.mxu0 %v2565
  %2700 = vmatpush1.msra.mxu0 %v2564
  %2701 = vmatprep.subr.mxu0 %v2569
  %2702 = vmatpush1.msra.mxu0 %v2568
  %2703 = vmatprep.subr.mxu0 %v2573
  %2704 = vmatpush1.msra.mxu0 %v2572
  %2705 = vmatprep.subr.mxu0 %v2577
  %2706 = vmatpush1.msra.mxu0 %v2576
  %2707 = vmatprep.subr.mxu0 %v2581
  %2708 = vmatpush1.msra.mxu0 %v2580
  %2709 = vmatprep.subr.mxu0 %v2585
  %2710 = vmatpush1.msra.mxu0 %v2584
  %2711 = vmatprep.subr.mxu0 %v2589
  %2712 = vmatpush1.msra.mxu0 %v2588
  %2713 = vmatprep.subr.mxu0 %v2593
  %2714 = vmatpush1.msra.mxu0 %v2592
  %2715 = vmatprep.subr.mxu0 %v2597
  %2716 = vmatpush1.msra.mxu0 %v2596
  %2717 = vmatprep.subr.mxu0 %v2601
  %2718 = vmatpush1.msra.mxu0 %v2600
  %2719 = vmatprep.subr.mxu0 %v2605
  %2720 = vmatpush1.msra.mxu0 %v2604
  %2721 = vmatprep.subr.mxu0 %v2609
  %2722 = vmatpush1.msra.mxu0 %v2608
  %2723 = vmatprep.subr.mxu0 %v2613
  %2724 = vmatpush1.msra.mxu0 %v2612
  %2725 = vmatprep.subr.mxu0 0.0
  %2726 = vmatpush1.msra.mxu0 0.0
  %2727 = vmatprep.subr.mxu0 0.0
  %2728 = vmatpush1.msra.mxu0 0.0
  %2729 = vmatprep.subr.mxu0 0.0
  %2730 = vmatpush1.msra.mxu0 0.0
  %2731 = vmatprep.subr.mxu0 0.0
  %2732 = vmatpush1.msra.mxu0 0.0
  %2733 = vmatprep.subr.mxu0 0.0
  %2734 = vmatpush1.msra.mxu0 0.0
  %2735 = vmatprep.subr.mxu0 0.0
  %2736 = vmatpush1.msra.mxu0 0.0
  %2737 = vmatprep.subr.mxu0 0.0
  %2738 = vmatpush1.msra.mxu0 0.0
  %2739 = vmatprep.subr.mxu0 0.0
  %2740 = vmatpush1.msra.mxu0 0.0
  %2741 = vmatprep.subr.mxu0 0.0
  %2742 = vmatpush1.msra.mxu0 0.0
  %2743 = vmatprep.subr.mxu0 0.0
  %2744 = vmatpush1.msra.mxu0 0.0
  %2745 = vmatprep.subr.mxu0 0.0
  %2746 = vmatpush1.msra.mxu0 0.0
  %2747 = vmatprep.subr.mxu0 0.0
  %2748 = vmatpush1.msra.mxu0 0.0
  %2749 = vmatprep.subr.mxu0 0.0
  %2750 = vmatpush1.msra.mxu0 0.0
  %2751 = vmatprep.subr.mxu0 0.0
  %2752 = vmatpush1.msra.mxu0 0.0
  %2753 = vmatprep.subr.mxu0 0.0
  %2754 = vmatpush1.msra.mxu0 0.0
  %2755 = vmatprep.subr.mxu0 0.0
  %2756 = vmatpush1.msra.mxu0 0.0
  %2757 = vmatprep.mubr.f32.mxu0 0.0
  %2758 = vmatmul.mubr.f32.gmra.mrb[0].mxu0 %v2614
  %v2759 = vpop.f32.mrb[0].mxu0
  %v2760 = vadd.f32 0.0, %v2759
  %v2761 = vpop.f32.mrb[0].mxu0
  %v2762 = vadd.f32 0.0, %v2761
  %2763 = vmatprep.mubr.f32.mxu0 0.0
  %2764 = vmatmul.mubr.f32.gmra.mrb[0].mxu0 %v2615
  %v2765 = vpop.f32.mrb[0].mxu0
  %v2766 = vadd.f32 0.0, %v2765
  %v2767 = vpop.f32.mrb[0].mxu0
  %v2768 = vadd.f32 0.0, %v2767
  %2769 = vdwg.mxu0
  %2770 = vrot.lane.b32.xlu0 %v2683, 17
  %v2771 = vpop.permute.xlu0 %2770
  %2772 = vrot.lane.b32.xlu0 %v2685, 17
  %v2773 = vpop.permute.xlu0 %2772
  %2774 = vrot.lane.b32.xlu0 %v2760, 17
  %v2775 = vpop.permute.xlu0 %2774
  %2776 = vrot.lane.b32.xlu0 %v2762, 17
  %v2777 = vpop.permute.xlu0 %2776
  %v2778 = vsel %vm360, %v2775, %v2777
  %v2779 = vsel %vm360, %v2773, %v2775
  %v2780 = vsel %vm360, %v2771, %v2773
  %v2781 = vsel %vm360, %v2777, %v2771
  %v2786 = vcombine.low %v2781, %v2780
  %v2787 = vcombine.low %v2779, %v2778
  %v2789 = vunpack.c.l.s4 1966171168
  %v2790 = vunpack.c.0.s8 %v2789
  %v2791 = vlaneseq
  %v2792 = vshrl.u32 %v2791, 7
  %v2793 = vsub.s32 %v2790, %v2792
  %v2794 = vrot.slane %v2786, %v2793
  %v2796 = vunpack.c.l.s4 1966171168
  %v2797 = vunpack.c.0.s8 %v2796
  %v2798 = vlaneseq
  %v2799 = vshrl.u32 %v2798, 7
  %v2800 = vsub.s32 %v2797, %v2799
  %v2801 = vrot.slane %v2787, %v2800
  %v2802 = vcombine.low %v2794, %v2801
  %v2804 = vunpack.c.l.s4 1966171168
  %v2805 = vunpack.c.0.s8 %v2804
  %v2806 = vlaneseq
  %v2807 = vshrl.u32 %v2806, 7
  %v2808 = vsub.s32 %v2805, %v2807
  %v2809 = vrot.slane %v2802, %v2808
  %2811 = vst.msk [vmem:[#allocation3] ss:$8 sm:$0xf] %vm1281, %v2809
  %2812 = vst.msk [vmem:[#allocation3] ss:$8 sm:$0x0] %vm1281, %v2809
  %v2817 = vrot.slane %v2683, 1
  %v2818 = vrot.slane %v2685, 1
  %v2819 = vrot.slane %v2760, 1
  %v2820 = vrot.slane %v2762, 1
  %2825 = vrot.lane.b32.xlu0 %v2817, 16
  %v2826 = vpop.permute.xlu0 %2825
  %2827 = vrot.lane.b32.xlu0 %v2818, 16
  %v2828 = vpop.permute.xlu0 %2827
  %2829 = vrot.lane.b32.xlu0 %v2819, 16
  %v2830 = vpop.permute.xlu0 %2829
  %2831 = vrot.lane.b32.xlu0 %v2820, 16
  %v2832 = vpop.permute.xlu0 %2831
  %v2833 = vsel %vm409, %v2830, %v2832
  %v2834 = vsel %vm409, %v2828, %v2830
  %v2835 = vsel %vm409, %v2826, %v2828
  %v2836 = vsel %vm409, %v2832, %v2826
  %v2841 = vcombine.low %v2836, %v2835
  %v2842 = vcombine.low %v2834, %v2833
  %v2844 = vunpack.c.l.s4 1966171168
  %v2845 = vunpack.c.0.s8 %v2844
  %v2846 = vlaneseq
  %v2847 = vshrl.u32 %v2846, 7
  %v2848 = vsub.s32 %v2845, %v2847
  %v2849 = vrot.slane %v2841, %v2848
  %v2851 = vunpack.c.l.s4 1966171168
  %v2852 = vunpack.c.0.s8 %v2851
  %v2853 = vlaneseq
  %v2854 = vshrl.u32 %v2853, 7
  %v2855 = vsub.s32 %v2852, %v2854
  %v2856 = vrot.slane %v2842, %v2855
  %v2857 = vcombine.low %v2849, %v2856
  %v2859 = vunpack.c.l.s4 1966171168
  %v2860 = vunpack.c.0.s8 %v2859
  %v2861 = vlaneseq
  %v2862 = vshrl.u32 %v2861, 7
  %v2863 = vsub.s32 %v2860, %v2862
  %v2864 = vrot.slane %v2857, %v2863
  %s2866 = scalar_lea.vmem [#allocation3], 1
  %2867 = vst.msk [vmem:[%s2866] ss:$8 sm:$0xf] %vm1281, %v2864
  %2868 = vst.msk [vmem:[%s2866] ss:$8 sm:$0x0] %vm1281, %v2864
  %v2869 = vrot.slane %v2683, 2
  %v2870 = vrot.slane %v2685, 2
  %v2871 = vrot.slane %v2760, 2
  %v2872 = vrot.slane %v2762, 2
  %2877 = vrot.lane.b32.xlu0 %v2869, 15
  %v2878 = vpop.permute.xlu0 %2877
  %2879 = vrot.lane.b32.xlu0 %v2870, 15
  %v2880 = vpop.permute.xlu0 %2879
  %2881 = vrot.lane.b32.xlu0 %v2871, 15
  %v2882 = vpop.permute.xlu0 %2881
  %2883 = vrot.lane.b32.xlu0 %v2872, 15
  %v2884 = vpop.permute.xlu0 %2883
  %v2885 = vsel %vm458, %v2882, %v2884
  %v2886 = vsel %vm458, %v2880, %v2882
  %v2887 = vsel %vm458, %v2878, %v2880
  %v2888 = vsel %vm458, %v2884, %v2878
  %v2893 = vcombine.low %v2888, %v2887
  %v2894 = vcombine.low %v2886, %v2885
  %v2896 = vunpack.c.l.s4 1966171168
  %v2897 = vunpack.c.0.s8 %v2896
  %v2898 = vlaneseq
  %v2899 = vshrl.u32 %v2898, 7
  %v2900 = vsub.s32 %v2897, %v2899
  %v2901 = vrot.slane %v2893, %v2900
  %v2903 = vunpack.c.l.s4 1966171168
  %v2904 = vunpack.c.0.s8 %v2903
  %v2905 = vlaneseq
  %v2906 = vshrl.u32 %v2905, 7
  %v2907 = vsub.s32 %v2904, %v2906
  %v2908 = vrot.slane %v2894, %v2907
  %v2909 = vcombine.low %v2901, %v2908
  %v2911 = vunpack.c.l.s4 1966171168
  %v2912 = vunpack.c.0.s8 %v2911
  %v2913 = vlaneseq
  %v2914 = vshrl.u32 %v2913, 7
  %v2915 = vsub.s32 %v2912, %v2914
  %v2916 = vrot.slane %v2909, %v2915
  %s2918 = scalar_lea.vmem [#allocation3], 2
  %2919 = vst.msk [vmem:[%s2918] ss:$8 sm:$0xf] %vm1281, %v2916
  %2920 = vst.msk [vmem:[%s2918] ss:$8 sm:$0x0] %vm1281, %v2916
  %v2921 = vrot.slane %v2683, 3
  %v2922 = vrot.slane %v2685, 3
  %v2923 = vrot.slane %v2760, 3
  %v2924 = vrot.slane %v2762, 3
  %2929 = vrot.lane.b32.xlu0 %v2921, 1
  %v2930 = vpop.permute.xlu0 %2929
  %2931 = vrot.lane.b32.xlu0 %v2922, 1
  %v2932 = vpop.permute.xlu0 %2931
  %2933 = vrot.lane.b32.xlu0 %v2923, 1
  %v2934 = vpop.permute.xlu0 %2933
  %2935 = vrot.lane.b32.xlu0 %v2924, 1
  %v2936 = vpop.permute.xlu0 %2935
  %v2937 = vsel %vm601, %v2934, %v2936
  %v2938 = vsel %vm601, %v2932, %v2934
  %v2939 = vsel %vm601, %v2930, %v2932
  %v2940 = vsel %vm601, %v2936, %v2930
  %v2945 = vcombine.low %v2940, %v2939
  %v2946 = vcombine.low %v2938, %v2937
  %v2948 = vunpack.c.l.s4 1966171168
  %v2949 = vunpack.c.0.s8 %v2948
  %v2950 = vlaneseq
  %v2951 = vshrl.u32 %v2950, 7
  %v2952 = vsub.s32 %v2949, %v2951
  %v2953 = vrot.slane %v2945, %v2952
  %v2955 = vunpack.c.l.s4 1966171168
  %v2956 = vunpack.c.0.s8 %v2955
  %v2957 = vlaneseq
  %v2958 = vshrl.u32 %v2957, 7
  %v2959 = vsub.s32 %v2956, %v2958
  %v2960 = vrot.slane %v2946, %v2959
  %v2961 = vcombine.low %v2953, %v2960
  %v2963 = vunpack.c.l.s4 1966171168
  %v2964 = vunpack.c.0.s8 %v2963
  %v2965 = vlaneseq
  %v2966 = vshrl.u32 %v2965, 7
  %v2967 = vsub.s32 %v2964, %v2966
  %v2968 = vrot.slane %v2961, %v2967
  %s2970 = scalar_lea.vmem [#allocation3], 3
  %2971 = vst.msk [vmem:[%s2970] ss:$8 sm:$0xf] %vm1281, %v2968
  %2972 = vst.msk [vmem:[%s2970] ss:$8 sm:$0x0] %vm1281, %v2968
  %v2973 = vrot.slane %v2683, 4
  %v2974 = vrot.slane %v2685, 4
  %v2975 = vrot.slane %v2760, 4
  %v2976 = vrot.slane %v2762, 4
  %v2977 = vcombine.low %v2973, %v2974
  %v2978 = vcombine.low %v2975, %v2976
  %v2980 = vunpack.c.l.s4 1966171168
  %v2981 = vunpack.c.0.s8 %v2980
  %v2982 = vlaneseq
  %v2983 = vshrl.u32 %v2982, 7
  %v2984 = vsub.s32 %v2981, %v2983
  %v2985 = vrot.slane %v2977, %v2984
  %v2987 = vunpack.c.l.s4 1966171168
  %v2988 = vunpack.c.0.s8 %v2987
  %v2989 = vlaneseq
  %v2990 = vshrl.u32 %v2989, 7
  %v2991 = vsub.s32 %v2988, %v2990
  %v2992 = vrot.slane %v2978, %v2991
  %v2993 = vcombine.low %v2985, %v2992
  %v2995 = vunpack.c.l.s4 1966171168
  %v2996 = vunpack.c.0.s8 %v2995
  %v2997 = vlaneseq
  %v2998 = vshrl.u32 %v2997, 7
  %v2999 = vsub.s32 %v2996, %v2998
  %v3000 = vrot.slane %v2993, %v2999
  %s3002 = scalar_lea.vmem [#allocation3], 4
  %3003 = vst.msk [vmem:[%s3002] ss:$8 sm:$0xf] %vm1281, %v3000
  %3004 = vst.msk [vmem:[%s3002] ss:$8 sm:$0x0] %vm1281, %v3000
  %v3005 = vrot.slane %v2683, 5
  %v3006 = vrot.slane %v2685, 5
  %v3007 = vrot.slane %v2760, 5
  %v3008 = vrot.slane %v2762, 5
  %3013 = vrot.lane.b32.xlu0 %v3005, 127
  %v3014 = vpop.permute.xlu0 %3013
  %3015 = vrot.lane.b32.xlu0 %v3006, 127
  %v3016 = vpop.permute.xlu0 %3015
  %3017 = vrot.lane.b32.xlu0 %v3007, 127
  %v3018 = vpop.permute.xlu0 %3017
  %3019 = vrot.lane.b32.xlu0 %v3008, 127
  %v3020 = vpop.permute.xlu0 %3019
  %v3021 = vsel %vm686, %v3018, %v3020
  %v3022 = vsel %vm686, %v3016, %v3018
  %v3023 = vsel %vm686, %v3014, %v3016
  %v3024 = vsel %vm686, %v3020, %v3014
  %v3029 = vcombine.low %v3023, %v3022
  %v3030 = vcombine.low %v3021, %v3024
  %v3032 = vunpack.c.l.s4 1966171168
  %v3033 = vunpack.c.0.s8 %v3032
  %v3034 = vlaneseq
  %v3035 = vshrl.u32 %v3034, 7
  %v3036 = vsub.s32 %v3033, %v3035
  %v3037 = vrot.slane %v3029, %v3036
  %v3039 = vunpack.c.l.s4 1966171168
  %v3040 = vunpack.c.0.s8 %v3039
  %v3041 = vlaneseq
  %v3042 = vshrl.u32 %v3041, 7
  %v3043 = vsub.s32 %v3040, %v3042
  %v3044 = vrot.slane %v3030, %v3043
  %v3045 = vcombine.low %v3037, %v3044
  %v3047 = vunpack.c.l.s4 1966171168
  %v3048 = vunpack.c.0.s8 %v3047
  %v3049 = vlaneseq
  %v3050 = vshrl.u32 %v3049, 7
  %v3051 = vsub.s32 %v3048, %v3050
  %v3052 = vrot.slane %v3045, %v3051
  %s3054 = scalar_lea.vmem [#allocation3], 5
  %3055 = vst.msk [vmem:[%s3054] ss:$8 sm:$0xf] %vm1281, %v3052
  %3056 = vst.msk [vmem:[%s3054] ss:$8 sm:$0x0] %vm1281, %v3052
  %v3057 = vrot.slane %v2683, 6
  %v3058 = vrot.slane %v2685, 6
  %v3059 = vrot.slane %v2760, 6
  %v3060 = vrot.slane %v2762, 6
  %3065 = vrot.lane.b32.xlu0 %v3057, 113
  %v3066 = vpop.permute.xlu0 %3065
  %3067 = vrot.lane.b32.xlu0 %v3058, 113
  %v3068 = vpop.permute.xlu0 %3067
  %3069 = vrot.lane.b32.xlu0 %v3059, 113
  %v3070 = vpop.permute.xlu0 %3069
  %3071 = vrot.lane.b32.xlu0 %v3060, 113
  %v3072 = vpop.permute.xlu0 %3071
  %v3073 = vsel %vm853, %v3070, %v3072
  %v3074 = vsel %vm853, %v3068, %v3070
  %v3075 = vsel %vm853, %v3066, %v3068
  %v3076 = vsel %vm853, %v3072, %v3066
  %v3081 = vcombine.low %v3075, %v3074
  %v3082 = vcombine.low %v3073, %v3076
  %v3084 = vunpack.c.l.s4 1966171168
  %v3085 = vunpack.c.0.s8 %v3084
  %v3086 = vlaneseq
  %v3087 = vshrl.u32 %v3086, 7
  %v3088 = vsub.s32 %v3085, %v3087
  %v3089 = vrot.slane %v3081, %v3088
  %v3091 = vunpack.c.l.s4 1966171168
  %v3092 = vunpack.c.0.s8 %v3091
  %v3093 = vlaneseq
  %v3094 = vshrl.u32 %v3093, 7
  %v3095 = vsub.s32 %v3092, %v3094
  %v3096 = vrot.slane %v3082, %v3095
  %v3097 = vcombine.low %v3089, %v3096
  %v3099 = vunpack.c.l.s4 1966171168
  %v3100 = vunpack.c.0.s8 %v3099
  %v3101 = vlaneseq
  %v3102 = vshrl.u32 %v3101, 7
  %v3103 = vsub.s32 %v3100, %v3102
  %v3104 = vrot.slane %v3097, %v3103
  %s3106 = scalar_lea.vmem [#allocation3], 6
  %3107 = vst.msk [vmem:[%s3106] ss:$8 sm:$0xf] %vm1281, %v3104
  %3108 = vst.msk [vmem:[%s3106] ss:$8 sm:$0x0] %vm1281, %v3104
  %v3109 = vrot.slane %v2683, 7
  %v3110 = vrot.slane %v2685, 7
  %v3111 = vrot.slane %v2760, 7
  %v3112 = vrot.slane %v2762, 7
  %3117 = vrot.lane.b32.xlu0 %v3109, 112
  %v3118 = vpop.permute.xlu0 %3117
  %3119 = vrot.lane.b32.xlu0 %v3110, 112
  %v3120 = vpop.permute.xlu0 %3119
  %3121 = vrot.lane.b32.xlu0 %v3111, 112
  %v3122 = vpop.permute.xlu0 %3121
  %3123 = vrot.lane.b32.xlu0 %v3112, 112
  %v3124 = vpop.permute.xlu0 %3123
  %v3125 = vsel %vm878, %v3122, %v3124
  %v3126 = vsel %vm878, %v3120, %v3122
  %v3127 = vsel %vm878, %v3118, %v3120
  %v3128 = vsel %vm878, %v3124, %v3118
  %v3133 = vcombine.low %v3127, %v3126
  %v3134 = vcombine.low %v3125, %v3128
  %v3136 = vunpack.c.l.s4 1966171168
  %v3137 = vunpack.c.0.s8 %v3136
  %v3138 = vlaneseq
  %v3139 = vshrl.u32 %v3138, 7
  %v3140 = vsub.s32 %v3137, %v3139
  %v3141 = vrot.slane %v3133, %v3140
  %v3143 = vunpack.c.l.s4 1966171168
  %v3144 = vunpack.c.0.s8 %v3143
  %v3145 = vlaneseq
  %v3146 = vshrl.u32 %v3145, 7
  %v3147 = vsub.s32 %v3144, %v3146
  %v3148 = vrot.slane %v3134, %v3147
  %v3149 = vcombine.low %v3141, %v3148
  %v3151 = vunpack.c.l.s4 1966171168
  %v3152 = vunpack.c.0.s8 %v3151
  %v3153 = vlaneseq
  %v3154 = vshrl.u32 %v3153, 7
  %v3155 = vsub.s32 %v3152, %v3154
  %v3156 = vrot.slane %v3149, %v3155
  %s3158 = scalar_lea.vmem [#allocation3], 7
  %3159 = vst.msk [vmem:[%s3158] ss:$8 sm:$0xf] %vm1281, %v3156
  %3160 = vst.msk [vmem:[%s3158] ss:$8 sm:$0x0] %vm1281, %v3156
  %3161 = vrot.lane.b32.xlu0 %v2689, 111
  %v3162 = vpop.permute.xlu0 %3161
  %3163 = vrot.lane.b32.xlu0 %v2691, 111
  %v3164 = vpop.permute.xlu0 %3163
  %3165 = vrot.lane.b32.xlu0 %v2766, 111
  %v3166 = vpop.permute.xlu0 %3165
  %3167 = vrot.lane.b32.xlu0 %v2768, 111
  %v3168 = vpop.permute.xlu0 %3167
  %v3169 = vsel %vm927, %v3166, %v3168
  %v3170 = vsel %vm927, %v3164, %v3166
  %v3171 = vsel %vm927, %v3162, %v3164
  %v3172 = vsel %vm927, %v3168, %v3162
  %v3177 = vcombine.low %v3171, %v3170
  %v3178 = vcombine.low %v3169, %v3172
  %v3180 = vunpack.c.l.s4 1966171168
  %v3181 = vunpack.c.0.s8 %v3180
  %v3182 = vlaneseq
  %v3183 = vshrl.u32 %v3182, 7
  %v3184 = vsub.s32 %v3181, %v3183
  %v3185 = vrot.slane %v3177, %v3184
  %v3187 = vunpack.c.l.s4 1966171168
  %v3188 = vunpack.c.0.s8 %v3187
  %v3189 = vlaneseq
  %v3190 = vshrl.u32 %v3189, 7
  %v3191 = vsub.s32 %v3188, %v3190
  %v3192 = vrot.slane %v3178, %v3191
  %v3193 = vcombine.low %v3185, %v3192
  %v3195 = vunpack.c.l.s4 1966171168
  %v3196 = vunpack.c.0.s8 %v3195
  %v3197 = vlaneseq
  %v3198 = vshrl.u32 %v3197, 7
  %v3199 = vsub.s32 %v3196, %v3198
  %v3200 = vrot.slane %v3193, %v3199
  %s3202 = scalar_lea.vmem [#allocation3], 32
  %3203 = vst.msk [vmem:[%s3202] ss:$8 sm:$0xf] %vm1281, %v3200
  %3204 = vst.msk [vmem:[%s3202] ss:$8 sm:$0x0] %vm1281, %v3200
  %3205 = vst [vmem:[#allocation3 + $0x20] sm:$0xfe] 0.0
  %3206 = vst [vmem:[#allocation3 + $0x28] sm:$0xfe] 0.0
  %3207 = vst [vmem:[#allocation3 + $0x30] sm:$0xfe] 0.0
  %3208 = vst [vmem:[#allocation3 + $0x38] sm:$0xfe] 0.0
  %v3209 = vld [vmem:[#allocation3] sm:$0xff]
  %v3210 = vld [vmem:[#allocation3 + $0x8] sm:$0xff]
  %v3211 = vld [vmem:[#allocation3 + $0x10] sm:$0xff]
  %v3212 = vld [vmem:[#allocation3 + $0x18] sm:$0xff]
  %v3213 = vld [vmem:[#allocation3 + $0x20] sm:$0xff]
  %v3214 = vld [vmem:[#allocation3 + $0x28] sm:$0xff]
  %v3215 = vld [vmem:[#allocation3 + $0x30] sm:$0xff]
  %v3216 = vld [vmem:[#allocation3 + $0x38] sm:$0xff]
  %v3217 = vld [vmem:[%s2] sm:$0xff]
  %v3218 = vld [vmem:[%s2 + $0x8] sm:$0xff]
  %v3219 = vld [vmem:[%s2 + $0x10] sm:$0xff]
  %v3220 = vld [vmem:[%s2 + $0x18] sm:$0xff]
  %v3221 = vld [vmem:[%s2 + $0x20] sm:$0xff]
  %v3222 = vld [vmem:[%s2 + $0x28] sm:$0xff]
  %v3223 = vld [vmem:[%s2 + $0x30] sm:$0xff]
  %v3224 = vld [vmem:[%s2 + $0x38] sm:$0xff]
  %v3225 = vmul.f32 %v3209, %v3217
  %v3226 = vmul.f32 %v3210, %v3218
  %v3227 = vmul.f32 %v3211, %v3219
  %v3228 = vmul.f32 %v3212, %v3220
  %v3229 = vmul.f32 %v3213, %v3221
  %v3230 = vmul.f32 %v3214, %v3222
  %v3231 = vmul.f32 %v3215, %v3223
  %v3232 = vmul.f32 %v3216, %v3224
  %v3233 = vadd.f32 %v3225, %v3229
  %v3234 = vrot.slane %v3233, 4
  %v3235 = vadd.f32 %v3233, %v3234
  %v3236 = vrot.slane %v3235, 2
  %v3237 = vadd.f32 %v3235, %v3236
  %v3238 = vrot.slane %v3237, 1
  %v3239 = vadd.f32 %v3237, %v3238
  %v3240 = vadd.f32 %v3226, %v3230
  %v3241 = vrot.slane %v3240, 4
  %v3242 = vadd.f32 %v3240, %v3241
  %v3243 = vrot.slane %v3242, 2
  %v3244 = vadd.f32 %v3242, %v3243
  %v3245 = vrot.slane %v3244, 1
  %v3246 = vadd.f32 %v3244, %v3245
  %v3247 = vadd.f32 %v3227, %v3231
  %v3248 = vrot.slane %v3247, 4
  %v3249 = vadd.f32 %v3247, %v3248
  %v3250 = vrot.slane %v3249, 2
  %v3251 = vadd.f32 %v3249, %v3250
  %v3252 = vrot.slane %v3251, 1
  %v3253 = vadd.f32 %v3251, %v3252
  %v3254 = vadd.f32 %v3228, %v3232
  %v3255 = vrot.slane %v3254, 4
  %v3256 = vadd.f32 %v3254, %v3255
  %v3257 = vrot.slane %v3256, 2
  %v3258 = vadd.f32 %v3256, %v3257
  %v3259 = vrot.slane %v3258, 1
  %v3260 = vadd.f32 %v3258, %v3259
  %s3261 = sld [smem:[#allocation4]]
  %v3262 = vstv %s3261
  %v3263 = vadd.f32 %v3239, %v3262
  %v3264 = vadd.f32 %v3246, %v3262
  %v3265 = vadd.f32 %v3253, %v3262
  %v3266 = vadd.f32 %v3260, %v3262
  %v3271 = vcombine.low %v3263, %v3264
  %v3272 = vcombine.low %v3265, %v3266
  %v3274 = vunpack.c.l.s4 1966171168
  %v3275 = vunpack.c.0.s8 %v3274
  %v3276 = vlaneseq
  %v3277 = vshrl.u32 %v3276, 7
  %v3278 = vsub.s32 %v3275, %v3277
  %v3279 = vrot.slane %v3271, %v3278
  %v3281 = vunpack.c.l.s4 1966171168
  %v3282 = vunpack.c.0.s8 %v3281
  %v3283 = vlaneseq
  %v3284 = vshrl.u32 %v3283, 7
  %v3285 = vsub.s32 %v3282, %v3284
  %v3286 = vrot.slane %v3272, %v3285
  %v3287 = vcombine.low %v3279, %v3286
  %v3289 = vunpack.c.l.s4 1966171168
  %v3290 = vunpack.c.0.s8 %v3289
  %v3291 = vlaneseq
  %v3292 = vshrl.u32 %v3291, 7
  %v3293 = vsub.s32 %v3290, %v3292
  %v3294 = vrot.slane %v3287, %v3293
  %3296 = vst.msk [vmem:[%s8] sm:$0xf] %vm1281, %v3294
  // Predicated region
  $region34: #{zhong_forward.1} parent=0 // pred_check
    _
  $region35: #{zhong_forward.1} parent=0 // pred_check_branch
    %3298 = sbr.rel (0) target = $region37
  $region36: #{zhong_forward.1} parent=0 // pred_region
    _
  $region37: #{zhong_forward.1} parent=0 // pred_fallthru
    _
  // Predicated region
  $region38: #{zhong_forward.1} parent=0 // pred_check
    _
  $region39: #{zhong_forward.1} parent=0 // pred_check_branch
    %3300 = sbr.rel (0) target = $region41
  $region40: #{zhong_forward.1} parent=0 // pred_region
    _
  $region41: #{zhong_forward.1} parent=0 // pred_fallthru
    _

</llo_original>
